<compile_context>
chip_gen: v7x
topology: tpu7x:2x2x1
jax: 0.10.0
libtpu: 0.0.40
codegen_flags: <defaults>
</compile_context>

<pallas_src>
import numpy as np
import jax
import jax.numpy as jnp
from jax import lax
from jax.experimental import pallas as pl
from jax.experimental.pallas import tpu as pltpu


# ---------------------------------------------------------------------------
# SHT precompute (deterministic, numpy) — associated Legendre + quadrature.
# Mirrors torch_harmonics RealSHT / InverseRealSHT construction in SphericalConv._get_sht
# (layer 0: sht on 'equiangular' grid, isht on 'legendre-gauss' grid).
# ---------------------------------------------------------------------------
def _legendre_norm(mmax, lmax, x):
    """Spherical-harmonic-normalized associated Legendre Pbar_l^m(x), CS phase.
    Returns (mmax, lmax, len(x)) float64; entries with m > l are zero."""
    nmax = max(mmax, lmax)
    p = np.zeros((nmax, nmax, len(x)), dtype=np.float64)
    p[0, 0] = 1.0 / np.sqrt(4.0 * np.pi)
    for l in range(1, nmax):
        p[l - 1, l] = np.sqrt(2.0 * l + 1.0) * x * p[l - 1, l - 1]
        p[l, l] = np.sqrt((2.0 * l + 1.0) * (1.0 - x) * (1.0 + x) / (2.0 * l)) * p[l - 1, l - 1]
    for l in range(2, nmax):
        for m in range(0, l - 1):
            a = np.sqrt((2.0 * l - 1.0) / (l - m) * (2.0 * l + 1.0) / (l + m))
            b = np.sqrt((l + m - 1.0) / (l - m) * (2.0 * l + 1.0) / (2.0 * l - 3.0)
                        * (l - m - 1.0) / (l + m))
            p[m, l] = a * x * p[m, l - 1] - b * p[m, l - 2]
    p = p[:mmax, :lmax]
    for m in range(1, mmax, 2):      # Condon-Shortley phase
        p[m] = -p[m]
    return p


def _fejer1_weights(n):
    """Fejer-1 quadrature weights for nodes x_j = cos((2j+1)pi/(2n)) on [-1, 1]."""
    j = np.arange(n)
    theta = (2.0 * j + 1.0) * np.pi / (2.0 * n)
    k = np.arange(1, n // 2 + 1)
    s = np.sum(np.cos(2.0 * np.outer(theta, k)) / (4.0 * k ** 2 - 1.0), axis=-1)
    return (2.0 / n) * (1.0 - 2.0 * s)


def build_sht_matrices(nlat, lmax, mmax):
    # forward (RealSHT, grid='equiangular'): quadrature-weighted Legendre at equiangular nodes
    theta_eq = (np.arange(nlat) + 0.5) * np.pi / nlat
    x_eq = np.cos(theta_eq)                          # north -> south
    w_eq = _fejer1_weights(nlat)
    # TODO(synk): torch_harmonics uses Clenshaw-Curtis weights for 'equiangular'; Fejer-1 on the
    #             same open node set is used here instead (structure/shapes identical).
    p_eq = _legendre_norm(mmax, lmax, x_eq)          # (mmax, lmax, nlat)
    pfw = p_eq * w_eq[None, None, :]                 # (mmax, lmax, nlat)

    # inverse (InverseRealSHT, grid='legendre-gauss'): plain Legendre at Gauss nodes, no weights
    x_lg, _ = np.polynomial.legendre.leggauss(nlat)
    x_lg = np.ascontiguousarray(x_lg[::-1])          # north -> south
    plg = _legendre_norm(mmax, lmax, x_lg)           # (mmax, lmax, nlat)

    return jnp.asarray(pfw, dtype=jnp.float32), jnp.asarray(plg, dtype=jnp.float32)


# ---------------------------------------------------------------------------
# Fused Pallas kernel: fwd Legendre -> complex dhconv channel mix -> inv Legendre
# ---------------------------------------------------------------------------
def _fused_sconv_kernel(xin_ref, pfw_ref, plg_ref, wc_ref, out_ref, c_sc):
    """All spectral stages in one kernel, intermediates kept in VMEM.

    xin_ref : (mmax, nlat, 2*B*Cin)        bf16  rfft(x), real/imag packed on the last axis
    pfw_ref : (mmax, lmax, nlat)           bf16  quadrature-weighted Legendre (forward)
    plg_ref : (mmax, lmax, nlat)           bf16  Legendre at output (Gauss) latitudes (inverse)
    wc_ref  : (lmax, 2*B*Cin, 2*B*Cout)    bf16  expanded complex channel-mix weight
    out_ref : (2*B*Cout, mmax*nlat)        f32   lane-dense output (last dim = 128 at test size)
    c_sc    : (lmax, mmax, 2*B*Cin)        f32   VMEM scratch (fwd-Legendre coefficients)
    """
    mmax, nlat, _ = xin_ref.shape

    # Stage 1: forward Legendre transform, one small MXU matmul per longitudinal mode m,
    # written l-major into VMEM scratch so stage 2 can batch over l.
    for m in range(mmax):
        c_sc[:, m, :] = jnp.dot(pfw_ref[m], xin_ref[m],
                                preferred_element_type=jnp.float32)       # (lmax, 2*B*Cin)

    # Stage 2: complex dhconv channel mix as ONE batched-over-l real matmul.
    # The real/imag mixing and the per-sample block structure are folded into wc.
    cl = c_sc[...].astype(jnp.bfloat16)                                   # (lmax, mmax, 2*B*Cin)
    dn = (((2,), (1,)), ((0,), (0,)))                                     # contract packed channels, batch l
    mix = lax.dot_general(cl, wc_ref[...], dn,
                          preferred_element_type=jnp.float32)             # (lmax, mmax, 2*B*Cout)

    # Stage 3: inverse Legendre transform onto the Gauss latitudes, per m, stored lane-dense.
    for m in range(mmax):
        mix_m = mix[:, m, :].T.astype(jnp.bfloat16)                       # (2*B*Cout, lmax)
        y_m = jnp.dot(mix_m, plg_ref[m], preferred_element_type=jnp.float32)  # (2*B*Cout, nlat)
        out_ref[:, m * nlat:(m + 1) * nlat] = y_m


def _fused_spectral_op(xin, pfw, plg, wc, *, lmax):
    mmax, nlat, k_in = xin.shape
    k_out = wc.shape[2]
    flops = (2 * mmax * lmax * nlat * k_in            # fwd Legendre
             + 2 * lmax * mmax * k_in * k_out         # channel mix
             + 2 * mmax * k_out * lmax * nlat)        # inv Legendre
    bytes_accessed = 2 * (xin.size + pfw.size + plg.size + wc.size) + 4 * k_out * mmax * nlat
    return pl.pallas_call(
        _fused_sconv_kernel,
        out_shape=jax.ShapeDtypeStruct((k_out, mmax * nlat), jnp.float32),
        scratch_shapes=[pltpu.VMEM((lmax, mmax, k_in), jnp.float32)],
        cost_estimate=pl.CostEstimate(flops=flops, transcendentals=0,
                                      bytes_accessed=bytes_accessed),
    )(xin, pfw, plg, wc)


# ---------------------------------------------------------------------------
# Forward pass (plain-JAX FFT glue + single fused Pallas call)
# ---------------------------------------------------------------------------
@jax.jit
def spherical_conv_forward(x, wr, wi, bias, pfw, plg):
    """SphericalConv.forward(x, indices=0). x: (B, Cin, H, W) float32 (NCHW)."""
    B, Cin, H, W = x.shape
    mmax, lmax, nlat = pfw.shape
    Cout = wr.shape[1]

    # --- SHT part 1: real FFT along longitude (no Pallas FFT primitive; plain JAX) ---
    xf = 2.0 * jnp.pi * jnp.fft.rfft(x.astype(jnp.float32), axis=-1, norm="forward")[..., :mmax]
    xs = jnp.stack([jnp.real(xf), jnp.imag(xf)], axis=0)                  # (2, B, Cin, nlat, mmax)
    xin = xs.transpose(4, 3, 0, 1, 2).reshape(mmax, nlat, 2 * B * Cin).astype(jnp.bfloat16)

    # --- expanded complex dhconv weight: (lmax, 2*B*Cin, 2*B*Cout) ---
    #  rows  = packed input  (ri_in , b, i),  cols = packed output (ri_out, b, o)
    #  [[ wr,  wi],
    #   [-wi,  wr]]  (2x2 real/imag block)  kron  eye(B)  (no cross-sample mixing)
    wrl = wr.transpose(2, 0, 1)                                           # (lmax, Cin, Cout)
    wil = wi.transpose(2, 0, 1)
    eyeb = jnp.eye(B, dtype=jnp.float32)
    br = jnp.einsum("bc,lio->lbico", eyeb, wrl).reshape(lmax, B * Cin, B * Cout)
    bi = jnp.einsum("bc,lio->lbico", eyeb, wil).reshape(lmax, B * Cin, B * Cout)
    wc = jnp.concatenate([jnp.concatenate([br, bi], axis=2),
                          jnp.concatenate([-bi, br], axis=2)], axis=1).astype(jnp.bfloat16)

    # --- fused Legendre -> channel mix -> inverse Legendre (single Pallas kernel) ---
    yk = _fused_spectral_op(xin, pfw.astype(jnp.bfloat16), plg.astype(jnp.bfloat16), wc,
                            lmax=lmax)                                    # (2*B*Cout, mmax*nlat)

    y = yk.reshape(2, B, Cout, mmax, nlat)
    yc = jnp.swapaxes(y[0] + 1j * y[1], -1, -2)                           # (B, Cout, nlat, mmax)

    # --- ISHT part 2: inverse real FFT along longitude (zero-pad modes like torch irfft(n=W)) ---
    yc = jnp.pad(yc, ((0, 0), (0, 0), (0, 0), (0, W // 2 + 1 - mmax)))
    out = jnp.fft.irfft(yc, n=W, axis=-1, norm="forward")                 # (B, Cout, nlat, W)

    # bias: (n_layers, Cout, 1, 1) -> broadcast add (trivial elementwise, kept in glue)
    return (out + bias[0]).astype(jnp.float32)


# Pure-JAX f32/highest reference (same precomputed SHT matrices) for validation.
def spherical_conv_reference(x, wr, wi, bias, pfw, plg):
    B, Cin, H, W = x.shape
    mmax, lmax, nlat = pfw.shape
    xf = 2.0 * jnp.pi * jnp.fft.rfft(x, axis=-1, norm="forward")[..., :mmax]
    coeff = jnp.einsum("bitm,mlt->bilm", xf, pfw, precision="highest")
    w = (wr + 1j * wi).astype(jnp.complex64)
    mixed = jnp.einsum("bilm,iol->bolm", coeff, w, precision="highest")   # dhconv contraction
    y = jnp.einsum("bolm,mlt->botm", mixed, plg, precision="highest")
    y = jnp.pad(y, ((0, 0), (0, 0), (0, 0), (0, W // 2 + 1 - mmax)))
    out = jnp.fft.irfft(y, n=W, axis=-1, norm="forward")
    return out + bias[0]


if __name__ == "__main__":
    # SphericalConv(in_channels=4, out_channels=6, n_modes=(16, 16), n_layers=1,
    #               implementation='reconstructed', separable=False, bias=True)
    B, Cin, Cout = 2, 4, 6
    H = W = 16
    n_modes = (16, 16)
    lmax = n_modes[0]             # half_total_n_modes[0]
    mmax = n_modes[1] // 2        # half_total_n_modes[1]
    init_std = 1.0 / (Cin * Cout)

    key = jax.random.PRNGKey(0)
    kx, kwr, kwi, kb = jax.random.split(key, 4)
    x = jax.random.normal(kx, (B, Cin, H, W), dtype=jnp.float32)

    # dense-equivalent ("reconstructed") complex weight: shape (Cin, Cout, lmax)
    wr = init_std * jax.random.normal(kwr, (Cin, Cout, lmax), dtype=jnp.float32)
    wi = init_std * jax.random.normal(kwi, (Cin, Cout, lmax), dtype=jnp.float32)
    # bias: (n_layers, Cout, 1, 1)
    bias = init_std * jax.random.normal(kb, (1, Cout, 1, 1), dtype=jnp.float32)

    pfw, plg = build_sht_matrices(nlat=H, lmax=lmax, mmax=mmax)

    out = jax.block_until_ready(spherical_conv_forward(x, wr, wi, bias, pfw, plg))
    assert out.shape == (B, Cout, H, W), out.shape
    assert out.dtype == jnp.float32, out.dtype

    ref = jax.block_until_ready(spherical_conv_reference(x, wr, wi, bias, pfw, plg))
    # bf16 operands / f32 accumulation in the kernel vs f32-highest reference.
    np.testing.assert_allclose(np.asarray(out), np.asarray(ref), rtol=3e-2, atol=5e-3)

    print("KERNEL_OK")
</pallas_src>

<mosaic_0001>
module attributes {stable_mosaic.version = 11 : i64} {
  func.func @_fused_sconv_kernel(%arg0: memref<8x16x16xbf16, #tpu.memory_space<vmem>>, %arg1: memref<8x16x16xbf16, #tpu.memory_space<vmem>>, %arg2: memref<8x16x16xbf16, #tpu.memory_space<vmem>>, %arg3: memref<16x16x24xbf16, #tpu.memory_space<vmem>>, %arg4: memref<24x128xf32, #tpu.memory_space<vmem>>, %arg5: memref<16x8x16xf32, #tpu.memory_space<vmem>>) attributes {dimension_semantics = [], scalar_prefetch = 0 : i64, scratch_operands = 1 : i64, tpu.core_type = #tpu.core_type<tc>} {
    %c0 = arith.constant 0 : index
    %c0_0 = arith.constant 0 : index
    %c0_1 = arith.constant 0 : index
    %0 = vector.load %arg1[%c0, %c0_0, %c0_1] : memref<8x16x16xbf16, #tpu.memory_space<vmem>>, vector<1x16x16xbf16>
    %1 = vector.shape_cast %0 : vector<1x16x16xbf16> to vector<16x16xbf16>
    %c0_2 = arith.constant 0 : index
    %c0_3 = arith.constant 0 : index
    %c0_4 = arith.constant 0 : index
    %2 = vector.load %arg0[%c0_2, %c0_3, %c0_4] : memref<8x16x16xbf16, #tpu.memory_space<vmem>>, vector<1x16x16xbf16>
    %3 = vector.shape_cast %2 : vector<1x16x16xbf16> to vector<16x16xbf16>
    %cst = arith.constant dense<0.000000e+00> : vector<16x16xf32>
    %4 = tpu.matmul %1, %3, %cst {dimension_numbers = #tpu.dot_dimension_numbers<[1], [0], [0], [1], [0, 0, 1, 1], [], []>} : vector<16x16xbf16>, vector<16x16xbf16>, vector<16x16xf32> -> vector<16x16xf32>
    %c0_5 = arith.constant 0 : index
    %c0_6 = arith.constant 0 : index
    %c0_7 = arith.constant 0 : index
    %5 = vector.load %arg5[%c0_5, %c0_6, %c0_7] : memref<16x8x16xf32, #tpu.memory_space<vmem>>, vector<16x1x16xf32>
    %6 = vector.shape_cast %5 : vector<16x1x16xf32> to vector<16x16xf32>
    %7 = vector.shape_cast %4 : vector<16x16xf32> to vector<16x1x16xf32>
    tpu.vector_store %arg5[%c0_5, %c0_6, %c0_7], %7 {strides = array<i32>} : memref<16x8x16xf32, #tpu.memory_space<vmem>>, vector<16x1x16xf32>,
    %c1 = arith.constant 1 : index
    %c0_8 = arith.constant 0 : index
    %c0_9 = arith.constant 0 : index
    %8 = vector.load %arg1[%c1, %c0_8, %c0_9] : memref<8x16x16xbf16, #tpu.memory_space<vmem>>, vector<1x16x16xbf16>
    %9 = vector.shape_cast %8 : vector<1x16x16xbf16> to vector<16x16xbf16>
    %c1_10 = arith.constant 1 : index
    %c0_11 = arith.constant 0 : index
    %c0_12 = arith.constant 0 : index
    %10 = vector.load %arg0[%c1_10, %c0_11, %c0_12] : memref<8x16x16xbf16, #tpu.memory_space<vmem>>, vector<1x16x16xbf16>
    %11 = vector.shape_cast %10 : vector<1x16x16xbf16> to vector<16x16xbf16>
    %cst_13 = arith.constant dense<0.000000e+00> : vector<16x16xf32>
    %12 = tpu.matmul %9, %11, %cst_13 {dimension_numbers = #tpu.dot_dimension_numbers<[1], [0], [0], [1], [0, 0, 1, 1], [], []>} : vector<16x16xbf16>, vector<16x16xbf16>, vector<16x16xf32> -> vector<16x16xf32>
    %c0_14 = arith.constant 0 : index
    %c1_15 = arith.constant 1 : index
    %c0_16 = arith.constant 0 : index
    %13 = vector.load %arg5[%c0_14, %c1_15, %c0_16] : memref<16x8x16xf32, #tpu.memory_space<vmem>>, vector<16x1x16xf32>
    %14 = vector.shape_cast %13 : vector<16x1x16xf32> to vector<16x16xf32>
    %15 = vector.shape_cast %12 : vector<16x16xf32> to vector<16x1x16xf32>
    tpu.vector_store %arg5[%c0_14, %c1_15, %c0_16], %15 {strides = array<i32>} : memref<16x8x16xf32, #tpu.memory_space<vmem>>, vector<16x1x16xf32>,
    %c2 = arith.constant 2 : index
    %c0_17 = arith.constant 0 : index
    %c0_18 = arith.constant 0 : index
    %16 = vector.load %arg1[%c2, %c0_17, %c0_18] : memref<8x16x16xbf16, #tpu.memory_space<vmem>>, vector<1x16x16xbf16>
    %17 = vector.shape_cast %16 : vector<1x16x16xbf16> to vector<16x16xbf16>
    %c2_19 = arith.constant 2 : index
    %c0_20 = arith.constant 0 : index
    %c0_21 = arith.constant 0 : index
    %18 = vector.load %arg0[%c2_19, %c0_20, %c0_21] : memref<8x16x16xbf16, #tpu.memory_space<vmem>>, vector<1x16x16xbf16>
    %19 = vector.shape_cast %18 : vector<1x16x16xbf16> to vector<16x16xbf16>
    %cst_22 = arith.constant dense<0.000000e+00> : vector<16x16xf32>
    %20 = tpu.matmul %17, %19, %cst_22 {dimension_numbers = #tpu.dot_dimension_numbers<[1], [0], [0], [1], [0, 0, 1, 1], [], []>} : vector<16x16xbf16>, vector<16x16xbf16>, vector<16x16xf32> -> vector<16x16xf32>
    %c0_23 = arith.constant 0 : index
    %c2_24 = arith.constant 2 : index
    %c0_25 = arith.constant 0 : index
    %21 = vector.load %arg5[%c0_23, %c2_24, %c0_25] : memref<16x8x16xf32, #tpu.memory_space<vmem>>, vector<16x1x16xf32>
    %22 = vector.shape_cast %21 : vector<16x1x16xf32> to vector<16x16xf32>
    %23 = vector.shape_cast %20 : vector<16x16xf32> to vector<16x1x16xf32>
    tpu.vector_store %arg5[%c0_23, %c2_24, %c0_25], %23 {strides = array<i32>} : memref<16x8x16xf32, #tpu.memory_space<vmem>>, vector<16x1x16xf32>,
    %c3 = arith.constant 3 : index
    %c0_26 = arith.constant 0 : index
    %c0_27 = arith.constant 0 : index
    %24 = vector.load %arg1[%c3, %c0_26, %c0_27] : memref<8x16x16xbf16, #tpu.memory_space<vmem>>, vector<1x16x16xbf16>
    %25 = vector.shape_cast %24 : vector<1x16x16xbf16> to vector<16x16xbf16>
    %c3_28 = arith.constant 3 : index
    %c0_29 = arith.constant 0 : index
    %c0_30 = arith.constant 0 : index
    %26 = vector.load %arg0[%c3_28, %c0_29, %c0_30] : memref<8x16x16xbf16, #tpu.memory_space<vmem>>, vector<1x16x16xbf16>
    %27 = vector.shape_cast %26 : vector<1x16x16xbf16> to vector<16x16xbf16>
    %cst_31 = arith.constant dense<0.000000e+00> : vector<16x16xf32>
    %28 = tpu.matmul %25, %27, %cst_31 {dimension_numbers = #tpu.dot_dimension_numbers<[1], [0], [0], [1], [0, 0, 1, 1], [], []>} : vector<16x16xbf16>, vector<16x16xbf16>, vector<16x16xf32> -> vector<16x16xf32>
    %c0_32 = arith.constant 0 : index
    %c3_33 = arith.constant 3 : index
    %c0_34 = arith.constant 0 : index
    %29 = vector.load %arg5[%c0_32, %c3_33, %c0_34] : memref<16x8x16xf32, #tpu.memory_space<vmem>>, vector<16x1x16xf32>
    %30 = vector.shape_cast %29 : vector<16x1x16xf32> to vector<16x16xf32>
    %31 = vector.shape_cast %28 : vector<16x16xf32> to vector<16x1x16xf32>
    tpu.vector_store %arg5[%c0_32, %c3_33, %c0_34], %31 {strides = array<i32>} : memref<16x8x16xf32, #tpu.memory_space<vmem>>, vector<16x1x16xf32>,
    %c4 = arith.constant 4 : index
    %c0_35 = arith.constant 0 : index
    %c0_36 = arith.constant 0 : index
    %32 = vector.load %arg1[%c4, %c0_35, %c0_36] : memref<8x16x16xbf16, #tpu.memory_space<vmem>>, vector<1x16x16xbf16>
    %33 = vector.shape_cast %32 : vector<1x16x16xbf16> to vector<16x16xbf16>
    %c4_37 = arith.constant 4 : index
    %c0_38 = arith.constant 0 : index
    %c0_39 = arith.constant 0 : index
    %34 = vector.load %arg0[%c4_37, %c0_38, %c0_39] : memref<8x16x16xbf16, #tpu.memory_space<vmem>>, vector<1x16x16xbf16>
    %35 = vector.shape_cast %34 : vector<1x16x16xbf16> to vector<16x16xbf16>
    %cst_40 = arith.constant dense<0.000000e+00> : vector<16x16xf32>
    %36 = tpu.matmul %33, %35, %cst_40 {dimension_numbers = #tpu.dot_dimension_numbers<[1], [0], [0], [1], [0, 0, 1, 1], [], []>} : vector<16x16xbf16>, vector<16x16xbf16>, vector<16x16xf32> -> vector<16x16xf32>
    %c0_41 = arith.constant 0 : index
    %c4_42 = arith.constant 4 : index
    %c0_43 = arith.constant 0 : index
    %37 = vector.load %arg5[%c0_41, %c4_42, %c0_43] : memref<16x8x16xf32, #tpu.memory_space<vmem>>, vector<16x1x16xf32>
    %38 = vector.shape_cast %37 : vector<16x1x16xf32> to vector<16x16xf32>
    %39 = vector.shape_cast %36 : vector<16x16xf32> to vector<16x1x16xf32>
    tpu.vector_store %arg5[%c0_41, %c4_42, %c0_43], %39 {strides = array<i32>} : memref<16x8x16xf32, #tpu.memory_space<vmem>>, vector<16x1x16xf32>,
    %c5 = arith.constant 5 : index
    %c0_44 = arith.constant 0 : index
    %c0_45 = arith.constant 0 : index
    %40 = vector.load %arg1[%c5, %c0_44, %c0_45] : memref<8x16x16xbf16, #tpu.memory_space<vmem>>, vector<1x16x16xbf16>
    %41 = vector.shape_cast %40 : vector<1x16x16xbf16> to vector<16x16xbf16>
    %c5_46 = arith.constant 5 : index
    %c0_47 = arith.constant 0 : index
    %c0_48 = arith.constant 0 : index
    %42 = vector.load %arg0[%c5_46, %c0_47, %c0_48] : memref<8x16x16xbf16, #tpu.memory_space<vmem>>, vector<1x16x16xbf16>
    %43 = vector.shape_cast %42 : vector<1x16x16xbf16> to vector<16x16xbf16>
    %cst_49 = arith.constant dense<0.000000e+00> : vector<16x16xf32>
    %44 = tpu.matmul %41, %43, %cst_49 {dimension_numbers = #tpu.dot_dimension_numbers<[1], [0], [0], [1], [0, 0, 1, 1], [], []>} : vector<16x16xbf16>, vector<16x16xbf16>, vector<16x16xf32> -> vector<16x16xf32>
    %c0_50 = arith.constant 0 : index
    %c5_51 = arith.constant 5 : index
    %c0_52 = arith.constant 0 : index
    %45 = vector.load %arg5[%c0_50, %c5_51, %c0_52] : memref<16x8x16xf32, #tpu.memory_space<vmem>>, vector<16x1x16xf32>
    %46 = vector.shape_cast %45 : vector<16x1x16xf32> to vector<16x16xf32>
    %47 = vector.shape_cast %44 : vector<16x16xf32> to vector<16x1x16xf32>
    tpu.vector_store %arg5[%c0_50, %c5_51, %c0_52], %47 {strides = array<i32>} : memref<16x8x16xf32, #tpu.memory_space<vmem>>, vector<16x1x16xf32>,
    %c6 = arith.constant 6 : index
    %c0_53 = arith.constant 0 : index
    %c0_54 = arith.constant 0 : index
    %48 = vector.load %arg1[%c6, %c0_53, %c0_54] : memref<8x16x16xbf16, #tpu.memory_space<vmem>>, vector<1x16x16xbf16>
    %49 = vector.shape_cast %48 : vector<1x16x16xbf16> to vector<16x16xbf16>
    %c6_55 = arith.constant 6 : index
    %c0_56 = arith.constant 0 : index
    %c0_57 = arith.constant 0 : index
    %50 = vector.load %arg0[%c6_55, %c0_56, %c0_57] : memref<8x16x16xbf16, #tpu.memory_space<vmem>>, vector<1x16x16xbf16>
    %51 = vector.shape_cast %50 : vector<1x16x16xbf16> to vector<16x16xbf16>
    %cst_58 = arith.constant dense<0.000000e+00> : vector<16x16xf32>
    %52 = tpu.matmul %49, %51, %cst_58 {dimension_numbers = #tpu.dot_dimension_numbers<[1], [0], [0], [1], [0, 0, 1, 1], [], []>} : vector<16x16xbf16>, vector<16x16xbf16>, vector<16x16xf32> -> vector<16x16xf32>
    %c0_59 = arith.constant 0 : index
    %c6_60 = arith.constant 6 : index
    %c0_61 = arith.constant 0 : index
    %53 = vector.load %arg5[%c0_59, %c6_60, %c0_61] : memref<16x8x16xf32, #tpu.memory_space<vmem>>, vector<16x1x16xf32>
    %54 = vector.shape_cast %53 : vector<16x1x16xf32> to vector<16x16xf32>
    %55 = vector.shape_cast %52 : vector<16x16xf32> to vector<16x1x16xf32>
    tpu.vector_store %arg5[%c0_59, %c6_60, %c0_61], %55 {strides = array<i32>} : memref<16x8x16xf32, #tpu.memory_space<vmem>>, vector<16x1x16xf32>,
    %c7 = arith.constant 7 : index
    %c0_62 = arith.constant 0 : index
    %c0_63 = arith.constant 0 : index
    %56 = vector.load %arg1[%c7, %c0_62, %c0_63] : memref<8x16x16xbf16, #tpu.memory_space<vmem>>, vector<1x16x16xbf16>
    %57 = vector.shape_cast %56 : vector<1x16x16xbf16> to vector<16x16xbf16>
    %c7_64 = arith.constant 7 : index
    %c0_65 = arith.constant 0 : index
    %c0_66 = arith.constant 0 : index
    %58 = vector.load %arg0[%c7_64, %c0_65, %c0_66] : memref<8x16x16xbf16, #tpu.memory_space<vmem>>, vector<1x16x16xbf16>
    %59 = vector.shape_cast %58 : vector<1x16x16xbf16> to vector<16x16xbf16>
    %cst_67 = arith.constant dense<0.000000e+00> : vector<16x16xf32>
    %60 = tpu.matmul %57, %59, %cst_67 {dimension_numbers = #tpu.dot_dimension_numbers<[1], [0], [0], [1], [0, 0, 1, 1], [], []>} : vector<16x16xbf16>, vector<16x16xbf16>, vector<16x16xf32> -> vector<16x16xf32>
    %c0_68 = arith.constant 0 : index
    %c7_69 = arith.constant 7 : index
    %c0_70 = arith.constant 0 : index
    %61 = vector.load %arg5[%c0_68, %c7_69, %c0_70] : memref<16x8x16xf32, #tpu.memory_space<vmem>>, vector<16x1x16xf32>
    %62 = vector.shape_cast %61 : vector<16x1x16xf32> to vector<16x16xf32>
    %63 = vector.shape_cast %60 : vector<16x16xf32> to vector<16x1x16xf32>
    tpu.vector_store %arg5[%c0_68, %c7_69, %c0_70], %63 {strides = array<i32>} : memref<16x8x16xf32, #tpu.memory_space<vmem>>, vector<16x1x16xf32>,
    %c0_71 = arith.constant 0 : index
    %c0_72 = arith.constant 0 : index
    %c0_73 = arith.constant 0 : index
    %64 = vector.load %arg5[%c0_71, %c0_72, %c0_73] : memref<16x8x16xf32, #tpu.memory_space<vmem>>, vector<16x8x16xf32>
    %65 = arith.truncf %64 : vector<16x8x16xf32> to vector<16x8x16xbf16>
    %c0_74 = arith.constant 0 : index
    %c0_75 = arith.constant 0 : index
    %c0_76 = arith.constant 0 : index
    %66 = vector.load %arg3[%c0_74, %c0_75, %c0_76] : memref<16x16x24xbf16, #tpu.memory_space<vmem>>, vector<16x16x24xbf16>
    %cst_77 = arith.constant dense<0.000000e+00> : vector<16x8x24xf32>
    %67 = tpu.matmul %65, %66, %cst_77 {dimension_numbers = #tpu.dot_dimension_numbers<[2], [1], [1], [2], [0, 0, 0, 1, 1, 2], [0], [0]>} : vector<16x8x16xbf16>, vector<16x16x24xbf16>, vector<16x8x24xf32> -> vector<16x8x24xf32>
    %68 = vector.extract_strided_slice %67 {offsets = [0, 0, 0], sizes = [16, 1, 24], strides = [1, 1, 1]} : vector<16x8x24xf32> to vector<16x1x24xf32>
    %69 = vector.shape_cast %68 : vector<16x1x24xf32> to vector<16x24xf32>
    %70 = tpu.transpose %69, [1, 0] : vector<16x24xf32> -> vector<24x16xf32>
    %71 = arith.truncf %70 : vector<24x16xf32> to vector<24x16xbf16>
    %c0_78 = arith.constant 0 : index
    %c0_79 = arith.constant 0 : index
    %c0_80 = arith.constant 0 : index
    %72 = vector.load %arg2[%c0_78, %c0_79, %c0_80] : memref<8x16x16xbf16, #tpu.memory_space<vmem>>, vector<1x16x16xbf16>
    %73 = vector.shape_cast %72 : vector<1x16x16xbf16> to vector<16x16xbf16>
    %cst_81 = arith.constant dense<0.000000e+00> : vector<24x16xf32>
    %74 = tpu.matmul %71, %73, %cst_81 {dimension_numbers = #tpu.dot_dimension_numbers<[1], [0], [0], [1], [0, 0, 1, 1], [], []>} : vector<24x16xbf16>, vector<16x16xbf16>, vector<24x16xf32> -> vector<24x16xf32>
    %c0_82 = arith.constant 0 : index
    %c0_83 = arith.constant 0 : index
    %75 = vector.load %arg4[%c0_82, %c0_83] : memref<24x128xf32, #tpu.memory_space<vmem>>, vector<24x16xf32>
    tpu.vector_store %arg4[%c0_82, %c0_83], %74 {strides = array<i32>} : memref<24x128xf32, #tpu.memory_space<vmem>>, vector<24x16xf32>,
    %76 = vector.extract_strided_slice %67 {offsets = [0, 1, 0], sizes = [16, 1, 24], strides = [1, 1, 1]} : vector<16x8x24xf32> to vector<16x1x24xf32>
    %77 = vector.shape_cast %76 : vector<16x1x24xf32> to vector<16x24xf32>
    %78 = tpu.transpose %77, [1, 0] : vector<16x24xf32> -> vector<24x16xf32>
    %79 = arith.truncf %78 : vector<24x16xf32> to vector<24x16xbf16>
    %c1_84 = arith.constant 1 : index
    %c0_85 = arith.constant 0 : index
    %c0_86 = arith.constant 0 : index
    %80 = vector.load %arg2[%c1_84, %c0_85, %c0_86] : memref<8x16x16xbf16, #tpu.memory_space<vmem>>, vector<1x16x16xbf16>
    %81 = vector.shape_cast %80 : vector<1x16x16xbf16> to vector<16x16xbf16>
    %cst_87 = arith.constant dense<0.000000e+00> : vector<24x16xf32>
    %82 = tpu.matmul %79, %81, %cst_87 {dimension_numbers = #tpu.dot_dimension_numbers<[1], [0], [0], [1], [0, 0, 1, 1], [], []>} : vector<24x16xbf16>, vector<16x16xbf16>, vector<24x16xf32> -> vector<24x16xf32>
    %c0_88 = arith.constant 0 : index
    %c16 = arith.constant 16 : index
    %83 = vector.load %arg4[%c0_88, %c16] : memref<24x128xf32, #tpu.memory_space<vmem>>, vector<24x16xf32>
    tpu.vector_store %arg4[%c0_88, %c16], %82 {strides = array<i32>} : memref<24x128xf32, #tpu.memory_space<vmem>>, vector<24x16xf32>,
    %84 = vector.extract_strided_slice %67 {offsets = [0, 2, 0], sizes = [16, 1, 24], strides = [1, 1, 1]} : vector<16x8x24xf32> to vector<16x1x24xf32>
    %85 = vector.shape_cast %84 : vector<16x1x24xf32> to vector<16x24xf32>
    %86 = tpu.transpose %85, [1, 0] : vector<16x24xf32> -> vector<24x16xf32>
    %87 = arith.truncf %86 : vector<24x16xf32> to vector<24x16xbf16>
    %c2_89 = arith.constant 2 : index
    %c0_90 = arith.constant 0 : index
    %c0_91 = arith.constant 0 : index
    %88 = vector.load %arg2[%c2_89, %c0_90, %c0_91] : memref<8x16x16xbf16, #tpu.memory_space<vmem>>, vector<1x16x16xbf16>
    %89 = vector.shape_cast %88 : vector<1x16x16xbf16> to vector<16x16xbf16>
    %cst_92 = arith.constant dense<0.000000e+00> : vector<24x16xf32>
    %90 = tpu.matmul %87, %89, %cst_92 {dimension_numbers = #tpu.dot_dimension_numbers<[1], [0], [0], [1], [0, 0, 1, 1], [], []>} : vector<24x16xbf16>, vector<16x16xbf16>, vector<24x16xf32> -> vector<24x16xf32>
    %c0_93 = arith.constant 0 : index
    %c32 = arith.constant 32 : index
    %91 = vector.load %arg4[%c0_93, %c32] : memref<24x128xf32, #tpu.memory_space<vmem>>, vector<24x16xf32>
    tpu.vector_store %arg4[%c0_93, %c32], %90 {strides = array<i32>} : memref<24x128xf32, #tpu.memory_space<vmem>>, vector<24x16xf32>,
    %92 = vector.extract_strided_slice %67 {offsets = [0, 3, 0], sizes = [16, 1, 24], strides = [1, 1, 1]} : vector<16x8x24xf32> to vector<16x1x24xf32>
    %93 = vector.shape_cast %92 : vector<16x1x24xf32> to vector<16x24xf32>
    %94 = tpu.transpose %93, [1, 0] : vector<16x24xf32> -> vector<24x16xf32>
    %95 = arith.truncf %94 : vector<24x16xf32> to vector<24x16xbf16>
    %c3_94 = arith.constant 3 : index
    %c0_95 = arith.constant 0 : index
    %c0_96 = arith.constant 0 : index
    %96 = vector.load %arg2[%c3_94, %c0_95, %c0_96] : memref<8x16x16xbf16, #tpu.memory_space<vmem>>, vector<1x16x16xbf16>
    %97 = vector.shape_cast %96 : vector<1x16x16xbf16> to vector<16x16xbf16>
    %cst_97 = arith.constant dense<0.000000e+00> : vector<24x16xf32>
    %98 = tpu.matmul %95, %97, %cst_97 {dimension_numbers = #tpu.dot_dimension_numbers<[1], [0], [0], [1], [0, 0, 1, 1], [], []>} : vector<24x16xbf16>, vector<16x16xbf16>, vector<24x16xf32> -> vector<24x16xf32>
    %c0_98 = arith.constant 0 : index
    %c48 = arith.constant 48 : index
    %99 = vector.load %arg4[%c0_98, %c48] : memref<24x128xf32, #tpu.memory_space<vmem>>, vector<24x16xf32>
    tpu.vector_store %arg4[%c0_98, %c48], %98 {strides = array<i32>} : memref<24x128xf32, #tpu.memory_space<vmem>>, vector<24x16xf32>,
    %100 = vector.extract_strided_slice %67 {offsets = [0, 4, 0], sizes = [16, 1, 24], strides = [1, 1, 1]} : vector<16x8x24xf32> to vector<16x1x24xf32>
    %101 = vector.shape_cast %100 : vector<16x1x24xf32> to vector<16x24xf32>
    %102 = tpu.transpose %101, [1, 0] : vector<16x24xf32> -> vector<24x16xf32>
    %103 = arith.truncf %102 : vector<24x16xf32> to vector<24x16xbf16>
    %c4_99 = arith.constant 4 : index
    %c0_100 = arith.constant 0 : index
    %c0_101 = arith.constant 0 : index
    %104 = vector.load %arg2[%c4_99, %c0_100, %c0_101] : memref<8x16x16xbf16, #tpu.memory_space<vmem>>, vector<1x16x16xbf16>
    %105 = vector.shape_cast %104 : vector<1x16x16xbf16> to vector<16x16xbf16>
    %cst_102 = arith.constant dense<0.000000e+00> : vector<24x16xf32>
    %106 = tpu.matmul %103, %105, %cst_102 {dimension_numbers = #tpu.dot_dimension_numbers<[1], [0], [0], [1], [0, 0, 1, 1], [], []>} : vector<24x16xbf16>, vector<16x16xbf16>, vector<24x16xf32> -> vector<24x16xf32>
    %c0_103 = arith.constant 0 : index
    %c64 = arith.constant 64 : index
    %107 = vector.load %arg4[%c0_103, %c64] : memref<24x128xf32, #tpu.memory_space<vmem>>, vector<24x16xf32>
    tpu.vector_store %arg4[%c0_103, %c64], %106 {strides = array<i32>} : memref<24x128xf32, #tpu.memory_space<vmem>>, vector<24x16xf32>,
    %108 = vector.extract_strided_slice %67 {offsets = [0, 5, 0], sizes = [16, 1, 24], strides = [1, 1, 1]} : vector<16x8x24xf32> to vector<16x1x24xf32>
    %109 = vector.shape_cast %108 : vector<16x1x24xf32> to vector<16x24xf32>
    %110 = tpu.transpose %109, [1, 0] : vector<16x24xf32> -> vector<24x16xf32>
    %111 = arith.truncf %110 : vector<24x16xf32> to vector<24x16xbf16>
    %c5_104 = arith.constant 5 : index
    %c0_105 = arith.constant 0 : index
    %c0_106 = arith.constant 0 : index
    %112 = vector.load %arg2[%c5_104, %c0_105, %c0_106] : memref<8x16x16xbf16, #tpu.memory_space<vmem>>, vector<1x16x16xbf16>
    %113 = vector.shape_cast %112 : vector<1x16x16xbf16> to vector<16x16xbf16>
    %cst_107 = arith.constant dense<0.000000e+00> : vector<24x16xf32>
    %114 = tpu.matmul %111, %113, %cst_107 {dimension_numbers = #tpu.dot_dimension_numbers<[1], [0], [0], [1], [0, 0, 1, 1], [], []>} : vector<24x16xbf16>, vector<16x16xbf16>, vector<24x16xf32> -> vector<24x16xf32>
    %c0_108 = arith.constant 0 : index
    %c80 = arith.constant 80 : index
    %115 = vector.load %arg4[%c0_108, %c80] : memref<24x128xf32, #tpu.memory_space<vmem>>, vector<24x16xf32>
    tpu.vector_store %arg4[%c0_108, %c80], %114 {strides = array<i32>} : memref<24x128xf32, #tpu.memory_space<vmem>>, vector<24x16xf32>,
    %116 = vector.extract_strided_slice %67 {offsets = [0, 6, 0], sizes = [16, 1, 24], strides = [1, 1, 1]} : vector<16x8x24xf32> to vector<16x1x24xf32>
    %117 = vector.shape_cast %116 : vector<16x1x24xf32> to vector<16x24xf32>
    %118 = tpu.transpose %117, [1, 0] : vector<16x24xf32> -> vector<24x16xf32>
    %119 = arith.truncf %118 : vector<24x16xf32> to vector<24x16xbf16>
    %c6_109 = arith.constant 6 : index
    %c0_110 = arith.constant 0 : index
    %c0_111 = arith.constant 0 : index
    %120 = vector.load %arg2[%c6_109, %c0_110, %c0_111] : memref<8x16x16xbf16, #tpu.memory_space<vmem>>, vector<1x16x16xbf16>
    %121 = vector.shape_cast %120 : vector<1x16x16xbf16> to vector<16x16xbf16>
    %cst_112 = arith.constant dense<0.000000e+00> : vector<24x16xf32>
    %122 = tpu.matmul %119, %121, %cst_112 {dimension_numbers = #tpu.dot_dimension_numbers<[1], [0], [0], [1], [0, 0, 1, 1], [], []>} : vector<24x16xbf16>, vector<16x16xbf16>, vector<24x16xf32> -> vector<24x16xf32>
    %c0_113 = arith.constant 0 : index
    %c96 = arith.constant 96 : index
    %123 = vector.load %arg4[%c0_113, %c96] : memref<24x128xf32, #tpu.memory_space<vmem>>, vector<24x16xf32>
    tpu.vector_store %arg4[%c0_113, %c96], %122 {strides = array<i32>} : memref<24x128xf32, #tpu.memory_space<vmem>>, vector<24x16xf32>,
    %124 = vector.extract_strided_slice %67 {offsets = [0, 7, 0], sizes = [16, 1, 24], strides = [1, 1, 1]} : vector<16x8x24xf32> to vector<16x1x24xf32>
    %125 = vector.shape_cast %124 : vector<16x1x24xf32> to vector<16x24xf32>
    %126 = tpu.transpose %125, [1, 0] : vector<16x24xf32> -> vector<24x16xf32>
    %127 = arith.truncf %126 : vector<24x16xf32> to vector<24x16xbf16>
    %c7_114 = arith.constant 7 : index
    %c0_115 = arith.constant 0 : index
    %c0_116 = arith.constant 0 : index
    %128 = vector.load %arg2[%c7_114, %c0_115, %c0_116] : memref<8x16x16xbf16, #tpu.memory_space<vmem>>, vector<1x16x16xbf16>
    %129 = vector.shape_cast %128 : vector<1x16x16xbf16> to vector<16x16xbf16>
    %cst_117 = arith.constant dense<0.000000e+00> : vector<24x16xf32>
    %130 = tpu.matmul %127, %129, %cst_117 {dimension_numbers = #tpu.dot_dimension_numbers<[1], [0], [0], [1], [0, 0, 1, 1], [], []>} : vector<24x16xbf16>, vector<16x16xbf16>, vector<24x16xf32> -> vector<24x16xf32>
    %c0_118 = arith.constant 0 : index
    %c112 = arith.constant 112 : index
    %131 = vector.load %arg4[%c0_118, %c112] : memref<24x128xf32, #tpu.memory_space<vmem>>, vector<24x16xf32>
    tpu.vector_store %arg4[%c0_118, %c112], %130 {strides = array<i32>} : memref<24x128xf32, #tpu.memory_space<vmem>>, vector<24x16xf32>,
    return
  }
}

</mosaic_0001>

<llo_original>
// kernel: squeeze.2
$region0: #{squeeze.2}
  %s0 = inlined_call_operand.vmem [shape: f32[12,128], index: 0, kind: input, shape index: {}]
  %s1 = inlined_call_operand.vmem [shape: f32[2,6,8,16], index: 1, kind: output, shape index: {}]
  %v2 = vld [vmem:[%s0] sm:$0xff]
  %vm3 = vcmask 130048
  %4 = vst.msk [vmem:[%s1] ss:$8 sm:$0xf] %vm3, %v2
  %5 = vst.msk [vmem:[%s1] ss:$8 sm:$0xf0] %vm3, %v2
  %s6 = scalar_lea.vmem %s0, 8
  %v7 = vld [vmem:[%s6] sm:$0xf]
  %vm8 = vcmask 130048
  %s9 = scalar_lea.vmem %s1, 64
  %10 = vst.msk [vmem:[%s9] ss:$8 sm:$0xf] %vm8, %v7
  %v11 = vld [vmem:[%s0] sm:$0xff]
  %12 = vrot.lane.b32.xlu0 %v11, 112
  %v13 = vpop.permute.xlu0 %12
  %vm14 = vcmask 130048
  %s15 = scalar_lea.vmem %s1, 1
  %16 = vst.msk [vmem:[%s15] ss:$8 sm:$0xf] %vm14, %v13
  %s17 = scalar_lea.vmem %s1, 1
  %18 = vst.msk [vmem:[%s17] ss:$8 sm:$0xf0] %vm14, %v13
  %s19 = scalar_lea.vmem %s0, 8
  %v20 = vld [vmem:[%s19] sm:$0xf]
  %21 = vrot.lane.b32.xlu0 %v20, 112
  %v22 = vpop.permute.xlu0 %21
  %vm23 = vcmask 130048
  %s24 = scalar_lea.vmem %s1, 65
  %25 = vst.msk [vmem:[%s24] ss:$8 sm:$0xf] %vm23, %v22
  %v26 = vld [vmem:[%s0] sm:$0xff]
  %27 = vrot.lane.b32.xlu0 %v26, 96
  %v28 = vpop.permute.xlu0 %27
  %vm29 = vcmask 130048
  %s30 = scalar_lea.vmem %s1, 2
  %31 = vst.msk [vmem:[%s30] ss:$8 sm:$0xf] %vm29, %v28
  %s32 = scalar_lea.vmem %s1, 2
  %33 = vst.msk [vmem:[%s32] ss:$8 sm:$0xf0] %vm29, %v28
  %s34 = scalar_lea.vmem %s0, 8
  %v35 = vld [vmem:[%s34] sm:$0xf]
  %36 = vrot.lane.b32.xlu0 %v35, 96
  %v37 = vpop.permute.xlu0 %36
  %vm38 = vcmask 130048
  %s39 = scalar_lea.vmem %s1, 66
  %40 = vst.msk [vmem:[%s39] ss:$8 sm:$0xf] %vm38, %v37
  %v41 = vld [vmem:[%s0] sm:$0xff]
  %42 = vrot.lane.b32.xlu0 %v41, 80
  %v43 = vpop.permute.xlu0 %42
  %vm44 = vcmask 130048
  %s45 = scalar_lea.vmem %s1, 3
  %46 = vst.msk [vmem:[%s45] ss:$8 sm:$0xf] %vm44, %v43
  %s47 = scalar_lea.vmem %s1, 3
  %48 = vst.msk [vmem:[%s47] ss:$8 sm:$0xf0] %vm44, %v43
  %s49 = scalar_lea.vmem %s0, 8
  %v50 = vld [vmem:[%s49] sm:$0xf]
  %51 = vrot.lane.b32.xlu0 %v50, 80
  %v52 = vpop.permute.xlu0 %51
  %vm53 = vcmask 130048
  %s54 = scalar_lea.vmem %s1, 67
  %55 = vst.msk [vmem:[%s54] ss:$8 sm:$0xf] %vm53, %v52
  %v56 = vld [vmem:[%s0] sm:$0xff]
  %57 = vrot.lane.b32.xlu0 %v56, 64
  %v58 = vpop.permute.xlu0 %57
  %vm59 = vcmask 130048
  %s60 = scalar_lea.vmem %s1, 4
  %61 = vst.msk [vmem:[%s60] ss:$8 sm:$0xf] %vm59, %v58
  %s62 = scalar_lea.vmem %s1, 4
  %63 = vst.msk [vmem:[%s62] ss:$8 sm:$0xf0] %vm59, %v58
  %s64 = scalar_lea.vmem %s0, 8
  %v65 = vld [vmem:[%s64] sm:$0xf]
  %66 = vrot.lane.b32.xlu0 %v65, 64
  %v67 = vpop.permute.xlu0 %66
  %vm68 = vcmask 130048
  %s69 = scalar_lea.vmem %s1, 68
  %70 = vst.msk [vmem:[%s69] ss:$8 sm:$0xf] %vm68, %v67
  %v71 = vld [vmem:[%s0] sm:$0xff]
  %72 = vrot.lane.b32.xlu0 %v71, 48
  %v73 = vpop.permute.xlu0 %72
  %vm74 = vcmask 130048
  %s75 = scalar_lea.vmem %s1, 5
  %76 = vst.msk [vmem:[%s75] ss:$8 sm:$0xf] %vm74, %v73
  %s77 = scalar_lea.vmem %s1, 5
  %78 = vst.msk [vmem:[%s77] ss:$8 sm:$0xf0] %vm74, %v73
  %s79 = scalar_lea.vmem %s0, 8
  %v80 = vld [vmem:[%s79] sm:$0xf]
  %81 = vrot.lane.b32.xlu0 %v80, 48
  %v82 = vpop.permute.xlu0 %81
  %vm83 = vcmask 130048
  %s84 = scalar_lea.vmem %s1, 69
  %85 = vst.msk [vmem:[%s84] ss:$8 sm:$0xf] %vm83, %v82
  %v86 = vld [vmem:[%s0] sm:$0xff]
  %87 = vrot.lane.b32.xlu0 %v86, 32
  %v88 = vpop.permute.xlu0 %87
  %vm89 = vcmask 130048
  %s90 = scalar_lea.vmem %s1, 6
  %91 = vst.msk [vmem:[%s90] ss:$8 sm:$0xf] %vm89, %v88
  %s92 = scalar_lea.vmem %s1, 6
  %93 = vst.msk [vmem:[%s92] ss:$8 sm:$0xf0] %vm89, %v88
  %s94 = scalar_lea.vmem %s0, 8
  %v95 = vld [vmem:[%s94] sm:$0xf]
  %96 = vrot.lane.b32.xlu0 %v95, 32
  %v97 = vpop.permute.xlu0 %96
  %vm98 = vcmask 130048
  %s99 = scalar_lea.vmem %s1, 70
  %100 = vst.msk [vmem:[%s99] ss:$8 sm:$0xf] %vm98, %v97
  %v101 = vld [vmem:[%s0] sm:$0xff]
  %102 = vrot.lane.b32.xlu0 %v101, 16
  %v103 = vpop.permute.xlu0 %102
  %vm104 = vcmask 130048
  %s105 = scalar_lea.vmem %s1, 7
  %106 = vst.msk [vmem:[%s105] ss:$8 sm:$0xf] %vm104, %v103
  %s107 = scalar_lea.vmem %s1, 7
  %108 = vst.msk [vmem:[%s107] ss:$8 sm:$0xf0] %vm104, %v103
  %s109 = scalar_lea.vmem %s0, 8
  %v110 = vld [vmem:[%s109] sm:$0xf]
  %111 = vrot.lane.b32.xlu0 %v110, 16
  %v112 = vpop.permute.xlu0 %111
  %vm113 = vcmask 130048
  %s114 = scalar_lea.vmem %s1, 71
  %115 = vst.msk [vmem:[%s114] ss:$8 sm:$0xf] %vm113, %v112

// kernel: reverse.1
$region0: #{reverse.1}
  %s0 = inlined_call_operand.vmem [shape: f32[2,6,16,7], index: 0, kind: input, shape index: {}]
  %s1 = inlined_call_operand.vmem [shape: f32[2,6,16,7], index: 1, kind: output, shape index: {}]
  %v2 = vlaneseq
  %v3 = vsub.s32 6, %v2
  %4 = vset.pattern.permute.xlu0 %v3
  $region1: #{reverse.1} parent=0
    #allocation0 [shape = 'u8[98304]{0}', space=vmem, size = 0x18000, scoped, tag = 'operand span for operand 0']
    #allocation1 [shape = 'u8[98304]{0}', space=vmem, size = 0x18000, scoped, tag = 'operand span for operand 1']
    // Predicated region
    $region2: #{reverse.1} parent=1 // pred_check
      _
    $region3: #{reverse.1} parent=1 // pred_check_branch
      %6 = sbr.rel (0) target = $region5
    $region4: #{reverse.1} parent=1 // pred_region
      // Predicated region
      $region6: #{reverse.1} parent=4 // pred_check
        _
      $region7: #{reverse.1} parent=4 // pred_check_branch
        %8 = sbr.rel (0) target = $region9
      $region8: #{reverse.1} parent=4 // pred_region
        // Predicated region
        $region21: #{reverse.1} parent=8 // pred_check
          _
        $region22: #{reverse.1} parent=8 // pred_check_branch
          %69 = sbr.rel (0) target = $region24
        $region23: #{reverse.1} parent=8 // pred_region
          loop: start=0, step=1, limit=1
          $region25: #{reverse.1} parent=23 // loop_pre_header
            _
          $region26: #{reverse.1} parent=23 // loop_header
            %s71 = sphi 0, %s75
            %p72 = scmp.ge.s32.totalorder %s71, 1
            %s76 = sphi %s0, %s0
            %s77 = sphi [#allocation0], [#allocation0]
          $region27: #{reverse.1} parent=23 // loop_header_branch
            %74 = sbr.rel (%p72) target = $region31
          $region28: #{reverse.1} parent=23 // loop_body
            %v78 = vld [vmem:[%s76] sm:$0xff]
            %79 = vst [vmem:[%s77] sm:$0xff] %v78
            %v80 = vld [vmem:[%s76 + $0x8] sm:$0xff]
            %81 = vst [vmem:[%s77 + $0x8] sm:$0xff] %v80
            %v82 = vld [vmem:[%s76 + $0x10] sm:$0xff]
            %83 = vst [vmem:[%s77 + $0x10] sm:$0xff] %v82
            %v84 = vld [vmem:[%s76 + $0x18] sm:$0xff]
            %85 = vst [vmem:[%s77 + $0x18] sm:$0xff] %v84
            %v86 = vld [vmem:[%s76 + $0x20] sm:$0xff]
            %87 = vst [vmem:[%s77 + $0x20] sm:$0xff] %v86
            %v88 = vld [vmem:[%s76 + $0x28] sm:$0xff]
            %89 = vst [vmem:[%s77 + $0x28] sm:$0xff] %v88
            %v90 = vld [vmem:[%s76 + $0x30] sm:$0xff]
            %91 = vst [vmem:[%s77 + $0x30] sm:$0xff] %v90
            %v92 = vld [vmem:[%s76 + $0x38] sm:$0xff]
            %93 = vst [vmem:[%s77 + $0x38] sm:$0xff] %v92
            %v94 = vld [vmem:[%s76 + $0x40] sm:$0xff]
            %95 = vst [vmem:[%s77 + $0x40] sm:$0xff] %v94
            %v96 = vld [vmem:[%s76 + $0x48] sm:$0xff]
            %97 = vst [vmem:[%s77 + $0x48] sm:$0xff] %v96
            %v98 = vld [vmem:[%s76 + $0x50] sm:$0xff]
            %99 = vst [vmem:[%s77 + $0x50] sm:$0xff] %v98
            %v100 = vld [vmem:[%s76 + $0x58] sm:$0xff]
            %101 = vst [vmem:[%s77 + $0x58] sm:$0xff] %v100
            %v102 = vld [vmem:[%s76 + $0x60] sm:$0xff]
            %103 = vst [vmem:[%s77 + $0x60] sm:$0xff] %v102
            %v104 = vld [vmem:[%s76 + $0x68] sm:$0xff]
            %105 = vst [vmem:[%s77 + $0x68] sm:$0xff] %v104
            %v106 = vld [vmem:[%s76 + $0x70] sm:$0xff]
            %107 = vst [vmem:[%s77 + $0x70] sm:$0xff] %v106
            %v108 = vld [vmem:[%s76 + $0x78] sm:$0xff]
            %109 = vst [vmem:[%s77 + $0x78] sm:$0xff] %v108
            %v110 = vld [vmem:[%s76 + $0x80] sm:$0xff]
            %111 = vst [vmem:[%s77 + $0x80] sm:$0xff] %v110
            %v112 = vld [vmem:[%s76 + $0x88] sm:$0xff]
            %113 = vst [vmem:[%s77 + $0x88] sm:$0xff] %v112
            %v114 = vld [vmem:[%s76 + $0x90] sm:$0xff]
            %115 = vst [vmem:[%s77 + $0x90] sm:$0xff] %v114
            %v116 = vld [vmem:[%s76 + $0x98] sm:$0xff]
            %117 = vst [vmem:[%s77 + $0x98] sm:$0xff] %v116
            %v118 = vld [vmem:[%s76 + $0xa0] sm:$0xff]
            %119 = vst [vmem:[%s77 + $0xa0] sm:$0xff] %v118
            %v120 = vld [vmem:[%s76 + $0xa8] sm:$0xff]
            %121 = vst [vmem:[%s77 + $0xa8] sm:$0xff] %v120
            %v122 = vld [vmem:[%s76 + $0xb0] sm:$0xff]
            %123 = vst [vmem:[%s77 + $0xb0] sm:$0xff] %v122
            %v124 = vld [vmem:[%s76 + $0xb8] sm:$0xff]
            %125 = vst [vmem:[%s77 + $0xb8] sm:$0xff] %v124
          $region29: #{reverse.1} parent=23 // loop_footer
            %s75 = sadd.s32 1, %s71
          $region30: #{reverse.1} parent=23 // loop_footer_branch
            %70 = sbr.rel target = $region26
          $region31: #{reverse.1} parent=23 // loop_exit
            _
        $region24: #{reverse.1} parent=8 // pred_fallthru
          _
        // Predicated region
        $region32: #{reverse.1} parent=8 // pred_check
          _
        $region33: #{reverse.1} parent=8 // pred_check_branch
          %127 = sbr.rel target = $region35
        $region34: #{reverse.1} parent=8 // pred_region
          _
        $region35: #{reverse.1} parent=8 // pred_fallthru
          _
      $region9: #{reverse.1} parent=4 // pred_fallthru
        _
      // Predicated region
      $region10: #{reverse.1} parent=4 // pred_check
        _
      $region11: #{reverse.1} parent=4 // pred_check_branch
        %10 = sbr.rel target = $region13
      $region12: #{reverse.1} parent=4 // pred_region
        loop: start=0, step=1, limit=1
        $region14: #{reverse.1} parent=12 // loop_pre_header
          _
        $region15: #{reverse.1} parent=12 // loop_header
          %s13 = sphi 0, %s17
          %p14 = scmp.ge.s32.totalorder %s13, 1
          %s18 = sphi %s0, %s0
          %s19 = sphi [#allocation0], [#allocation0]
        $region16: #{reverse.1} parent=12 // loop_header_branch
          %16 = sbr.rel (%p14) target = $region20
        $region17: #{reverse.1} parent=12 // loop_body
          %v20 = vld [vmem:[%s18] sm:$0xff]
          %21 = vst [vmem:[%s19] sm:$0xff] %v20
          %v22 = vld [vmem:[%s18 + $0x8] sm:$0xff]
          %23 = vst [vmem:[%s19 + $0x8] sm:$0xff] %v22
          %v24 = vld [vmem:[%s18 + $0x10] sm:$0xff]
          %25 = vst [vmem:[%s19 + $0x10] sm:$0xff] %v24
          %v26 = vld [vmem:[%s18 + $0x18] sm:$0xff]
          %27 = vst [vmem:[%s19 + $0x18] sm:$0xff] %v26
          %v28 = vld [vmem:[%s18 + $0x20] sm:$0xff]
          %29 = vst [vmem:[%s19 + $0x20] sm:$0xff] %v28
          %v30 = vld [vmem:[%s18 + $0x28] sm:$0xff]
          %31 = vst [vmem:[%s19 + $0x28] sm:$0xff] %v30
          %v32 = vld [vmem:[%s18 + $0x30] sm:$0xff]
          %33 = vst [vmem:[%s19 + $0x30] sm:$0xff] %v32
          %v34 = vld [vmem:[%s18 + $0x38] sm:$0xff]
          %35 = vst [vmem:[%s19 + $0x38] sm:$0xff] %v34
          %v36 = vld [vmem:[%s18 + $0x40] sm:$0xff]
          %37 = vst [vmem:[%s19 + $0x40] sm:$0xff] %v36
          %v38 = vld [vmem:[%s18 + $0x48] sm:$0xff]
          %39 = vst [vmem:[%s19 + $0x48] sm:$0xff] %v38
          %v40 = vld [vmem:[%s18 + $0x50] sm:$0xff]
          %41 = vst [vmem:[%s19 + $0x50] sm:$0xff] %v40
          %v42 = vld [vmem:[%s18 + $0x58] sm:$0xff]
          %43 = vst [vmem:[%s19 + $0x58] sm:$0xff] %v42
          %v44 = vld [vmem:[%s18 + $0x60] sm:$0xff]
          %45 = vst [vmem:[%s19 + $0x60] sm:$0xff] %v44
          %v46 = vld [vmem:[%s18 + $0x68] sm:$0xff]
          %47 = vst [vmem:[%s19 + $0x68] sm:$0xff] %v46
          %v48 = vld [vmem:[%s18 + $0x70] sm:$0xff]
          %49 = vst [vmem:[%s19 + $0x70] sm:$0xff] %v48
          %v50 = vld [vmem:[%s18 + $0x78] sm:$0xff]
          %51 = vst [vmem:[%s19 + $0x78] sm:$0xff] %v50
          %v52 = vld [vmem:[%s18 + $0x80] sm:$0xff]
          %53 = vst [vmem:[%s19 + $0x80] sm:$0xff] %v52
          %v54 = vld [vmem:[%s18 + $0x88] sm:$0xff]
          %55 = vst [vmem:[%s19 + $0x88] sm:$0xff] %v54
          %v56 = vld [vmem:[%s18 + $0x90] sm:$0xff]
          %57 = vst [vmem:[%s19 + $0x90] sm:$0xff] %v56
          %v58 = vld [vmem:[%s18 + $0x98] sm:$0xff]
          %59 = vst [vmem:[%s19 + $0x98] sm:$0xff] %v58
          %v60 = vld [vmem:[%s18 + $0xa0] sm:$0xff]
          %61 = vst [vmem:[%s19 + $0xa0] sm:$0xff] %v60
          %v62 = vld [vmem:[%s18 + $0xa8] sm:$0xff]
          %63 = vst [vmem:[%s19 + $0xa8] sm:$0xff] %v62
          %v64 = vld [vmem:[%s18 + $0xb0] sm:$0xff]
          %65 = vst [vmem:[%s19 + $0xb0] sm:$0xff] %v64
          %v66 = vld [vmem:[%s18 + $0xb8] sm:$0xff]
          %67 = vst [vmem:[%s19 + $0xb8] sm:$0xff] %v66
        $region18: #{reverse.1} parent=12 // loop_footer
          %s17 = sadd.s32 1, %s13
        $region19: #{reverse.1} parent=12 // loop_footer_branch
          %12 = sbr.rel target = $region15
        $region20: #{reverse.1} parent=12 // loop_exit
          _
      $region13: #{reverse.1} parent=4 // pred_fallthru
        _
    $region5: #{reverse.1} parent=1 // pred_fallthru
      _
    %128 = vnop
    %v129 = vld [vmem:[#allocation0] sm:$0xff]
    %130 = vperm.xlu0 %4, %v129
    %v131 = vpop.permute.xlu0 %130
    %132 = vst [vmem:[#allocation1] sm:$0xff] %v131
    %s133 = scalar_lea.vmem [#allocation1], 8
    %s134 = scalar_lea.vmem [#allocation0], 8
    %v135 = vld [vmem:[%s134] sm:$0xff]
    %136 = vperm.xlu0 %4, %v135
    %v137 = vpop.permute.xlu0 %136
    %138 = vst [vmem:[%s133] sm:$0xff] %v137
    %s139 = scalar_lea.vmem [#allocation1], 16
    %s140 = scalar_lea.vmem [#allocation0], 16
    %v141 = vld [vmem:[%s140] sm:$0xff]
    %142 = vperm.xlu0 %4, %v141
    %v143 = vpop.permute.xlu0 %142
    %144 = vst [vmem:[%s139] sm:$0xff] %v143
    %s145 = scalar_lea.vmem %s139, 8 [#allocation1]
    %s146 = scalar_lea.vmem %s140, 8 [#allocation0]
    %v147 = vld [vmem:[%s146] sm:$0xff]
    %148 = vperm.xlu0 %4, %v147
    %v149 = vpop.permute.xlu0 %148
    %150 = vst [vmem:[%s145] sm:$0xff] %v149
    %s151 = scalar_lea.vmem [#allocation1], 32
    %s152 = scalar_lea.vmem [#allocation0], 32
    %v153 = vld [vmem:[%s152] sm:$0xff]
    %154 = vperm.xlu0 %4, %v153
    %v155 = vpop.permute.xlu0 %154
    %156 = vst [vmem:[%s151] sm:$0xff] %v155
    %s157 = scalar_lea.vmem %s151, 8 [#allocation1]
    %s158 = scalar_lea.vmem %s152, 8 [#allocation0]
    %v159 = vld [vmem:[%s158] sm:$0xff]
    %160 = vperm.xlu0 %4, %v159
    %v161 = vpop.permute.xlu0 %160
    %162 = vst [vmem:[%s157] sm:$0xff] %v161
    %s163 = scalar_lea.vmem [#allocation1], 48
    %s164 = scalar_lea.vmem [#allocation0], 48
    %v165 = vld [vmem:[%s164] sm:$0xff]
    %166 = vperm.xlu0 %4, %v165
    %v167 = vpop.permute.xlu0 %166
    %168 = vst [vmem:[%s163] sm:$0xff] %v167
    %s169 = scalar_lea.vmem %s163, 8 [#allocation1]
    %s170 = scalar_lea.vmem %s164, 8 [#allocation0]
    %v171 = vld [vmem:[%s170] sm:$0xff]
    %172 = vperm.xlu0 %4, %v171
    %v173 = vpop.permute.xlu0 %172
    %174 = vst [vmem:[%s169] sm:$0xff] %v173
    %s175 = scalar_lea.vmem [#allocation1], 64
    %s176 = scalar_lea.vmem [#allocation0], 64
    %v177 = vld [vmem:[%s176] sm:$0xff]
    %178 = vperm.xlu0 %4, %v177
    %v179 = vpop.permute.xlu0 %178
    %180 = vst [vmem:[%s175] sm:$0xff] %v179
    %s181 = scalar_lea.vmem %s175, 8 [#allocation1]
    %s182 = scalar_lea.vmem %s176, 8 [#allocation0]
    %v183 = vld [vmem:[%s182] sm:$0xff]
    %184 = vperm.xlu0 %4, %v183
    %v185 = vpop.permute.xlu0 %184
    %186 = vst [vmem:[%s181] sm:$0xff] %v185
    %s187 = scalar_lea.vmem [#allocation1], 80
    %s188 = scalar_lea.vmem [#allocation0], 80
    %v189 = vld [vmem:[%s188] sm:$0xff]
    %190 = vperm.xlu0 %4, %v189
    %v191 = vpop.permute.xlu0 %190
    %192 = vst [vmem:[%s187] sm:$0xff] %v191
    %s193 = scalar_lea.vmem %s187, 8 [#allocation1]
    %s194 = scalar_lea.vmem %s188, 8 [#allocation0]
    %v195 = vld [vmem:[%s194] sm:$0xff]
    %196 = vperm.xlu0 %4, %v195
    %v197 = vpop.permute.xlu0 %196
    %198 = vst [vmem:[%s193] sm:$0xff] %v197
    %s199 = scalar_lea.vmem [#allocation1], 96
    %s200 = scalar_lea.vmem [#allocation0], 96
    %v201 = vld [vmem:[%s200] sm:$0xff]
    %202 = vperm.xlu0 %4, %v201
    %v203 = vpop.permute.xlu0 %202
    %204 = vst [vmem:[%s199] sm:$0xff] %v203
    %s205 = scalar_lea.vmem %s199, 8 [#allocation1]
    %s206 = scalar_lea.vmem %s200, 8 [#allocation0]
    %v207 = vld [vmem:[%s206] sm:$0xff]
    %208 = vperm.xlu0 %4, %v207
    %v209 = vpop.permute.xlu0 %208
    %210 = vst [vmem:[%s205] sm:$0xff] %v209
    %s211 = scalar_lea.vmem [#allocation1], 112
    %s212 = scalar_lea.vmem [#allocation0], 112
    %v213 = vld [vmem:[%s212] sm:$0xff]
    %214 = vperm.xlu0 %4, %v213
    %v215 = vpop.permute.xlu0 %214
    %216 = vst [vmem:[%s211] sm:$0xff] %v215
    %s217 = scalar_lea.vmem %s211, 8 [#allocation1]
    %s218 = scalar_lea.vmem %s212, 8 [#allocation0]
    %v219 = vld [vmem:[%s218] sm:$0xff]
    %220 = vperm.xlu0 %4, %v219
    %v221 = vpop.permute.xlu0 %220
    %222 = vst [vmem:[%s217] sm:$0xff] %v221
    %s223 = scalar_lea.vmem [#allocation1], 128
    %s224 = scalar_lea.vmem [#allocation0], 128
    %v225 = vld [vmem:[%s224] sm:$0xff]
    %226 = vperm.xlu0 %4, %v225
    %v227 = vpop.permute.xlu0 %226
    %228 = vst [vmem:[%s223] sm:$0xff] %v227
    %s229 = scalar_lea.vmem %s223, 8 [#allocation1]
    %s230 = scalar_lea.vmem %s224, 8 [#allocation0]
    %v231 = vld [vmem:[%s230] sm:$0xff]
    %232 = vperm.xlu0 %4, %v231
    %v233 = vpop.permute.xlu0 %232
    %234 = vst [vmem:[%s229] sm:$0xff] %v233
    %s235 = scalar_lea.vmem [#allocation1], 144
    %s236 = scalar_lea.vmem [#allocation0], 144
    %v237 = vld [vmem:[%s236] sm:$0xff]
    %238 = vperm.xlu0 %4, %v237
    %v239 = vpop.permute.xlu0 %238
    %240 = vst [vmem:[%s235] sm:$0xff] %v239
    %s241 = scalar_lea.vmem %s235, 8 [#allocation1]
    %s242 = scalar_lea.vmem %s236, 8 [#allocation0]
    %v243 = vld [vmem:[%s242] sm:$0xff]
    %244 = vperm.xlu0 %4, %v243
    %v245 = vpop.permute.xlu0 %244
    %246 = vst [vmem:[%s241] sm:$0xff] %v245
    %s247 = scalar_lea.vmem [#allocation1], 160
    %s248 = scalar_lea.vmem [#allocation0], 160
    %v249 = vld [vmem:[%s248] sm:$0xff]
    %250 = vperm.xlu0 %4, %v249
    %v251 = vpop.permute.xlu0 %250
    %252 = vst [vmem:[%s247] sm:$0xff] %v251
    %s253 = scalar_lea.vmem %s247, 8 [#allocation1]
    %s254 = scalar_lea.vmem %s248, 8 [#allocation0]
    %v255 = vld [vmem:[%s254] sm:$0xff]
    %256 = vperm.xlu0 %4, %v255
    %v257 = vpop.permute.xlu0 %256
    %258 = vst [vmem:[%s253] sm:$0xff] %v257
    %s259 = scalar_lea.vmem [#allocation1], 176
    %s260 = scalar_lea.vmem [#allocation0], 176
    %v261 = vld [vmem:[%s260] sm:$0xff]
    %262 = vperm.xlu0 %4, %v261
    %v263 = vpop.permute.xlu0 %262
    %264 = vst [vmem:[%s259] sm:$0xff] %v263
    %s265 = scalar_lea.vmem %s259, 8 [#allocation1]
    %s266 = scalar_lea.vmem %s260, 8 [#allocation0]
    %v267 = vld [vmem:[%s266] sm:$0xff]
    %268 = vperm.xlu0 %4, %v267
    %v269 = vpop.permute.xlu0 %268
    %270 = vst [vmem:[%s265] sm:$0xff] %v269
    // Predicated region
    $region36: #{reverse.1} parent=1 // pred_check
      _
    $region37: #{reverse.1} parent=1 // pred_check_branch
      %272 = sbr.rel (0) target = $region39
    $region38: #{reverse.1} parent=1 // pred_region
      // Predicated region
      $region40: #{reverse.1} parent=38 // pred_check
        _
      $region41: #{reverse.1} parent=38 // pred_check_branch
        %274 = sbr.rel (0) target = $region43
      $region42: #{reverse.1} parent=38 // pred_region
        // Predicated region
        $region55: #{reverse.1} parent=42 // pred_check
          _
        $region56: #{reverse.1} parent=42 // pred_check_branch
          %335 = sbr.rel (0) target = $region58
        $region57: #{reverse.1} parent=42 // pred_region
          loop: start=0, step=1, limit=1
          $region59: #{reverse.1} parent=57 // loop_pre_header
            _
          $region60: #{reverse.1} parent=57 // loop_header
            %s337 = sphi 0, %s341
            %p338 = scmp.ge.s32.totalorder %s337, 1
            %s342 = sphi [#allocation1], [#allocation1]
            %s343 = sphi %s1, %s1
          $region61: #{reverse.1} parent=57 // loop_header_branch
            %340 = sbr.rel (%p338) target = $region65
          $region62: #{reverse.1} parent=57 // loop_body
            %v344 = vld [vmem:[%s342] sm:$0xff]
            %345 = vst [vmem:[%s343] sm:$0xff] %v344
            %v346 = vld [vmem:[%s342 + $0x8] sm:$0xff]
            %347 = vst [vmem:[%s343 + $0x8] sm:$0xff] %v346
            %v348 = vld [vmem:[%s342 + $0x10] sm:$0xff]
            %349 = vst [vmem:[%s343 + $0x10] sm:$0xff] %v348
            %v350 = vld [vmem:[%s342 + $0x18] sm:$0xff]
            %351 = vst [vmem:[%s343 + $0x18] sm:$0xff] %v350
            %v352 = vld [vmem:[%s342 + $0x20] sm:$0xff]
            %353 = vst [vmem:[%s343 + $0x20] sm:$0xff] %v352
            %v354 = vld [vmem:[%s342 + $0x28] sm:$0xff]
            %355 = vst [vmem:[%s343 + $0x28] sm:$0xff] %v354
            %v356 = vld [vmem:[%s342 + $0x30] sm:$0xff]
            %357 = vst [vmem:[%s343 + $0x30] sm:$0xff] %v356
            %v358 = vld [vmem:[%s342 + $0x38] sm:$0xff]
            %359 = vst [vmem:[%s343 + $0x38] sm:$0xff] %v358
            %v360 = vld [vmem:[%s342 + $0x40] sm:$0xff]
            %361 = vst [vmem:[%s343 + $0x40] sm:$0xff] %v360
            %v362 = vld [vmem:[%s342 + $0x48] sm:$0xff]
            %363 = vst [vmem:[%s343 + $0x48] sm:$0xff] %v362
            %v364 = vld [vmem:[%s342 + $0x50] sm:$0xff]
            %365 = vst [vmem:[%s343 + $0x50] sm:$0xff] %v364
            %v366 = vld [vmem:[%s342 + $0x58] sm:$0xff]
            %367 = vst [vmem:[%s343 + $0x58] sm:$0xff] %v366
            %v368 = vld [vmem:[%s342 + $0x60] sm:$0xff]
            %369 = vst [vmem:[%s343 + $0x60] sm:$0xff] %v368
            %v370 = vld [vmem:[%s342 + $0x68] sm:$0xff]
            %371 = vst [vmem:[%s343 + $0x68] sm:$0xff] %v370
            %v372 = vld [vmem:[%s342 + $0x70] sm:$0xff]
            %373 = vst [vmem:[%s343 + $0x70] sm:$0xff] %v372
            %v374 = vld [vmem:[%s342 + $0x78] sm:$0xff]
            %375 = vst [vmem:[%s343 + $0x78] sm:$0xff] %v374
            %v376 = vld [vmem:[%s342 + $0x80] sm:$0xff]
            %377 = vst [vmem:[%s343 + $0x80] sm:$0xff] %v376
            %v378 = vld [vmem:[%s342 + $0x88] sm:$0xff]
            %379 = vst [vmem:[%s343 + $0x88] sm:$0xff] %v378
            %v380 = vld [vmem:[%s342 + $0x90] sm:$0xff]
            %381 = vst [vmem:[%s343 + $0x90] sm:$0xff] %v380
            %v382 = vld [vmem:[%s342 + $0x98] sm:$0xff]
            %383 = vst [vmem:[%s343 + $0x98] sm:$0xff] %v382
            %v384 = vld [vmem:[%s342 + $0xa0] sm:$0xff]
            %385 = vst [vmem:[%s343 + $0xa0] sm:$0xff] %v384
            %v386 = vld [vmem:[%s342 + $0xa8] sm:$0xff]
            %387 = vst [vmem:[%s343 + $0xa8] sm:$0xff] %v386
            %v388 = vld [vmem:[%s342 + $0xb0] sm:$0xff]
            %389 = vst [vmem:[%s343 + $0xb0] sm:$0xff] %v388
            %v390 = vld [vmem:[%s342 + $0xb8] sm:$0xff]
            %391 = vst [vmem:[%s343 + $0xb8] sm:$0xff] %v390
          $region63: #{reverse.1} parent=57 // loop_footer
            %s341 = sadd.s32 1, %s337
          $region64: #{reverse.1} parent=57 // loop_footer_branch
            %336 = sbr.rel target = $region60
          $region65: #{reverse.1} parent=57 // loop_exit
            _
        $region58: #{reverse.1} parent=42 // pred_fallthru
          _
        // Predicated region
        $region66: #{reverse.1} parent=42 // pred_check
          _
        $region67: #{reverse.1} parent=42 // pred_check_branch
          %393 = sbr.rel target = $region69
        $region68: #{reverse.1} parent=42 // pred_region
          _
        $region69: #{reverse.1} parent=42 // pred_fallthru
          _
      $region43: #{reverse.1} parent=38 // pred_fallthru
        _
      // Predicated region
      $region44: #{reverse.1} parent=38 // pred_check
        _
      $region45: #{reverse.1} parent=38 // pred_check_branch
        %276 = sbr.rel target = $region47
      $region46: #{reverse.1} parent=38 // pred_region
        loop: start=0, step=1, limit=1
        $region48: #{reverse.1} parent=46 // loop_pre_header
          _
        $region49: #{reverse.1} parent=46 // loop_header
          %s279 = sphi 0, %s283
          %p280 = scmp.ge.s32.totalorder %s279, 1
          %s284 = sphi [#allocation1], [#allocation1]
          %s285 = sphi %s1, %s1
        $region50: #{reverse.1} parent=46 // loop_header_branch
          %282 = sbr.rel (%p280) target = $region54
        $region51: #{reverse.1} parent=46 // loop_body
          %v286 = vld [vmem:[%s284] sm:$0xff]
          %287 = vst [vmem:[%s285] sm:$0xff] %v286
          %v288 = vld [vmem:[%s284 + $0x8] sm:$0xff]
          %289 = vst [vmem:[%s285 + $0x8] sm:$0xff] %v288
          %v290 = vld [vmem:[%s284 + $0x10] sm:$0xff]
          %291 = vst [vmem:[%s285 + $0x10] sm:$0xff] %v290
          %v292 = vld [vmem:[%s284 + $0x18] sm:$0xff]
          %293 = vst [vmem:[%s285 + $0x18] sm:$0xff] %v292
          %v294 = vld [vmem:[%s284 + $0x20] sm:$0xff]
          %295 = vst [vmem:[%s285 + $0x20] sm:$0xff] %v294
          %v296 = vld [vmem:[%s284 + $0x28] sm:$0xff]
          %297 = vst [vmem:[%s285 + $0x28] sm:$0xff] %v296
          %v298 = vld [vmem:[%s284 + $0x30] sm:$0xff]
          %299 = vst [vmem:[%s285 + $0x30] sm:$0xff] %v298
          %v300 = vld [vmem:[%s284 + $0x38] sm:$0xff]
          %301 = vst [vmem:[%s285 + $0x38] sm:$0xff] %v300
          %v302 = vld [vmem:[%s284 + $0x40] sm:$0xff]
          %303 = vst [vmem:[%s285 + $0x40] sm:$0xff] %v302
          %v304 = vld [vmem:[%s284 + $0x48] sm:$0xff]
          %305 = vst [vmem:[%s285 + $0x48] sm:$0xff] %v304
          %v306 = vld [vmem:[%s284 + $0x50] sm:$0xff]
          %307 = vst [vmem:[%s285 + $0x50] sm:$0xff] %v306
          %v308 = vld [vmem:[%s284 + $0x58] sm:$0xff]
          %309 = vst [vmem:[%s285 + $0x58] sm:$0xff] %v308
          %v310 = vld [vmem:[%s284 + $0x60] sm:$0xff]
          %311 = vst [vmem:[%s285 + $0x60] sm:$0xff] %v310
          %v312 = vld [vmem:[%s284 + $0x68] sm:$0xff]
          %313 = vst [vmem:[%s285 + $0x68] sm:$0xff] %v312
          %v314 = vld [vmem:[%s284 + $0x70] sm:$0xff]
          %315 = vst [vmem:[%s285 + $0x70] sm:$0xff] %v314
          %v316 = vld [vmem:[%s284 + $0x78] sm:$0xff]
          %317 = vst [vmem:[%s285 + $0x78] sm:$0xff] %v316
          %v318 = vld [vmem:[%s284 + $0x80] sm:$0xff]
          %319 = vst [vmem:[%s285 + $0x80] sm:$0xff] %v318
          %v320 = vld [vmem:[%s284 + $0x88] sm:$0xff]
          %321 = vst [vmem:[%s285 + $0x88] sm:$0xff] %v320
          %v322 = vld [vmem:[%s284 + $0x90] sm:$0xff]
          %323 = vst [vmem:[%s285 + $0x90] sm:$0xff] %v322
          %v324 = vld [vmem:[%s284 + $0x98] sm:$0xff]
          %325 = vst [vmem:[%s285 + $0x98] sm:$0xff] %v324
          %v326 = vld [vmem:[%s284 + $0xa0] sm:$0xff]
          %327 = vst [vmem:[%s285 + $0xa0] sm:$0xff] %v326
          %v328 = vld [vmem:[%s284 + $0xa8] sm:$0xff]
          %329 = vst [vmem:[%s285 + $0xa8] sm:$0xff] %v328
          %v330 = vld [vmem:[%s284 + $0xb0] sm:$0xff]
          %331 = vst [vmem:[%s285 + $0xb0] sm:$0xff] %v330
          %v332 = vld [vmem:[%s284 + $0xb8] sm:$0xff]
          %333 = vst [vmem:[%s285 + $0xb8] sm:$0xff] %v332
        $region52: #{reverse.1} parent=46 // loop_footer
          %s283 = sadd.s32 1, %s279
        $region53: #{reverse.1} parent=46 // loop_footer_branch
          %278 = sbr.rel target = $region49
        $region54: #{reverse.1} parent=46 // loop_exit
          _
      $region47: #{reverse.1} parent=38 // pred_fallthru
        _
    $region39: #{reverse.1} parent=1 // pred_fallthru
      _
    %394 = vnop

// kernel: spherical_conv_forward.1
$region0: #{spherical_conv_forward.1}
  #allocation0 [shape = 'u32[]', space=smem, size = 0x4, offset = 0x4, fixed_abs, tag = 'smem constant byte address 0x4 - core index']
  #allocation1 [shape = 'u32[144,128]{1,0:T(1,128)}', space=vmem, size = 0x12000, scoped, tag = 'internal scratch']
  #allocation2 [shape = 'f32[16,8,16]{2,1,0:T(8,128)}', space=vmem, size = 0x10000, scoped, tag = 'scratch operand']
  %s0 = inlined_call_operand.vmem [shape: bf16[8,16,16], index: 0, kind: input, shape index: {}]
  %s1 = inlined_call_operand.vmem [shape: bf16[8,16,16], index: 1, kind: input, shape index: {}]
  %s2 = inlined_call_operand.vmem [shape: bf16[8,16,16], index: 2, kind: input, shape index: {}]
  %s3 = inlined_call_operand.vmem [shape: bf16[16,16,24], index: 3, kind: input, shape index: {}]
  %s4 = inlined_call_operand.vmem [shape: f32[24,128], index: 4, kind: output, shape index: {}]
  %s5 = sld [smem:[#allocation0]]
  $region26: #{spherical_conv_forward.1} parent=0
    _
  %s7 = ssub.s32 1, %s5
  %s8 = scalar_select 0, %s7, %s5
  // Predicated region
  $region2: #{spherical_conv_forward.1} parent=0 // pred_check
    _
  $region3: #{spherical_conv_forward.1} parent=0 // pred_check_branch
    %10 = sbr.rel (0) target = $region5
  $region4: #{spherical_conv_forward.1} parent=0 // pred_region
    _
  $region5: #{spherical_conv_forward.1} parent=0 // pred_fallthru
    _
  // Predicated region
  $region6: #{spherical_conv_forward.1} parent=0 // pred_check
    _
  $region7: #{spherical_conv_forward.1} parent=0 // pred_check_branch
    %12 = sbr.rel (0) target = $region9
  $region8: #{spherical_conv_forward.1} parent=0 // pred_region
    _
  $region9: #{spherical_conv_forward.1} parent=0 // pred_fallthru
    _
  // Predicated region
  $region10: #{spherical_conv_forward.1} parent=0 // pred_check
    _
  $region11: #{spherical_conv_forward.1} parent=0 // pred_check_branch
    %14 = sbr.rel (0) target = $region13
  $region12: #{spherical_conv_forward.1} parent=0 // pred_region
    _
  $region13: #{spherical_conv_forward.1} parent=0 // pred_fallthru
    _
  // Predicated region
  $region14: #{spherical_conv_forward.1} parent=0 // pred_check
    _
  $region15: #{spherical_conv_forward.1} parent=0 // pred_check_branch
    %16 = sbr.rel (0) target = $region17
  $region16: #{spherical_conv_forward.1} parent=0 // pred_region
    _
  $region17: #{spherical_conv_forward.1} parent=0 // pred_fallthru
    _
  %v18 = vld [vmem:[%s1] sm:$0xf]
  %v19 = vld [vmem:[%s1 + $0x4] sm:$0xf]
  %v20 = vld [vmem:[%s0] sm:$0xf]
  %v21 = vld [vmem:[%s0 + $0x4] sm:$0xf]
  %v24 = vunpack.c.l.b16 %v18
  %v25 = vunpack.c.l.b16 %v19
  %v26 = vpack.c.b16 %v25, %v24
  %v29 = vunpack.c.l.b16 %v20
  %v30 = vunpack.c.l.b16 %v21
  %v31 = vpack.c.b16 %v30, %v29
  %vm33 = vcmask 130048
  %v35 = vsel %vm33, %v26, 0
  %37 = vmatprep.subr.bf16.mxu0 0
  %38 = vmatpush1.bf16.msra.mxu0 %v31
  %39 = vmatprep.subr.bf16.mxu0 0
  %40 = vmatpush1.bf16.msra.mxu0 0
  %41 = vmatprep.subr.bf16.mxu0 0
  %42 = vmatpush1.bf16.msra.mxu0 0
  %43 = vmatprep.subr.bf16.mxu0 0
  %44 = vmatpush1.bf16.msra.mxu0 0
  %45 = vmatprep.subr.bf16.mxu0 0
  %46 = vmatpush1.bf16.msra.mxu0 0
  %47 = vmatprep.subr.bf16.mxu0 0
  %48 = vmatpush1.bf16.msra.mxu0 0
  %49 = vmatprep.subr.bf16.mxu0 0
  %50 = vmatpush1.bf16.msra.mxu0 0
  %51 = vmatprep.subr.bf16.mxu0 0
  %52 = vmatpush1.bf16.msra.mxu0 0
  %53 = vmatprep.subr.bf16.mxu0 0
  %54 = vmatpush1.bf16.msra.mxu0 0
  %55 = vmatprep.subr.bf16.mxu0 0
  %56 = vmatpush1.bf16.msra.mxu0 0
  %57 = vmatprep.subr.bf16.mxu0 0
  %58 = vmatpush1.bf16.msra.mxu0 0
  %59 = vmatprep.subr.bf16.mxu0 0
  %60 = vmatpush1.bf16.msra.mxu0 0
  %61 = vmatprep.subr.bf16.mxu0 0
  %62 = vmatpush1.bf16.msra.mxu0 0
  %63 = vmatprep.subr.bf16.mxu0 0
  %64 = vmatpush1.bf16.msra.mxu0 0
  %65 = vmatprep.subr.bf16.mxu0 0
  %66 = vmatpush1.bf16.msra.mxu0 0
  %67 = vmatprep.subr.bf16.mxu0 0
  %68 = vmatpush1.bf16.msra.mxu0 0
  %69 = vmatprep.mubr.bf16.mxu0 0
  %70 = vmatmul.mubr.bf16.gmra.mrb[0].mxu0 %v35
  %v71 = vpop.f32.mrb[0].mxu0
  %v72 = vadd.f32 0.0, %v71
  %v73 = vpop.f32.mrb[0].mxu0
  %v74 = vpop.f32.mrb[0].mxu0
  %v75 = vadd.f32 0.0, %v74
  %v76 = vpop.f32.mrb[0].mxu0
  %77 = vdwg.mxu0
  %v80 = vcombine.high %v72, %v72
  %v82 = vunpack.c.l.s4 1966171168
  %v83 = vunpack.c.0.s8 %v82
  %v84 = vlaneseq
  %v85 = vshrl.u32 %v84, 7
  %v86 = vsub.s32 %v83, %v85
  %v87 = vrot.slane %v72, %v86
  %v89 = vunpack.c.l.s4 1966171168
  %v90 = vunpack.c.0.s8 %v89
  %v91 = vlaneseq
  %v92 = vshrl.u32 %v91, 7
  %v93 = vsub.s32 %v90, %v92
  %v94 = vrot.slane %v80, %v93
  %v95 = vcombine.high %v87, %v87
  %v96 = vcombine.high %v94, %v94
  %v98 = vunpack.c.l.s4 1966171168
  %v99 = vunpack.c.0.s8 %v98
  %v100 = vlaneseq
  %v101 = vshrl.u32 %v100, 7
  %v102 = vsub.s32 %v99, %v101
  %v103 = vrot.slane %v87, %v102
  %v105 = vunpack.c.l.s4 1966171168
  %v106 = vunpack.c.0.s8 %v105
  %v107 = vlaneseq
  %v108 = vshrl.u32 %v107, 7
  %v109 = vsub.s32 %v106, %v108
  %v110 = vrot.slane %v94, %v109
  %v112 = vunpack.c.l.s4 1966171168
  %v113 = vunpack.c.0.s8 %v112
  %v114 = vlaneseq
  %v115 = vshrl.u32 %v114, 7
  %v116 = vsub.s32 %v113, %v115
  %v117 = vrot.slane %v95, %v116
  %v119 = vunpack.c.l.s4 1966171168
  %v120 = vunpack.c.0.s8 %v119
  %v121 = vlaneseq
  %v122 = vshrl.u32 %v121, 7
  %v123 = vsub.s32 %v120, %v122
  %v124 = vrot.slane %v96, %v123
  %v125 = vcombine.high %v103, %v103
  %v126 = vcombine.high %v110, %v110
  %v127 = vcombine.high %v117, %v117
  %v128 = vcombine.high %v124, %v124
  %v129 = vcombine.high %v75, %v75
  %v131 = vunpack.c.l.s4 1966171168
  %v132 = vunpack.c.0.s8 %v131
  %v133 = vlaneseq
  %v134 = vshrl.u32 %v133, 7
  %v135 = vsub.s32 %v132, %v134
  %v136 = vrot.slane %v75, %v135
  %v138 = vunpack.c.l.s4 1966171168
  %v139 = vunpack.c.0.s8 %v138
  %v140 = vlaneseq
  %v141 = vshrl.u32 %v140, 7
  %v142 = vsub.s32 %v139, %v141
  %v143 = vrot.slane %v129, %v142
  %v144 = vcombine.high %v136, %v136
  %v145 = vcombine.high %v143, %v143
  %v147 = vunpack.c.l.s4 1966171168
  %v148 = vunpack.c.0.s8 %v147
  %v149 = vlaneseq
  %v150 = vshrl.u32 %v149, 7
  %v151 = vsub.s32 %v148, %v150
  %v152 = vrot.slane %v136, %v151
  %v154 = vunpack.c.l.s4 1966171168
  %v155 = vunpack.c.0.s8 %v154
  %v156 = vlaneseq
  %v157 = vshrl.u32 %v156, 7
  %v158 = vsub.s32 %v155, %v157
  %v159 = vrot.slane %v143, %v158
  %v161 = vunpack.c.l.s4 1966171168
  %v162 = vunpack.c.0.s8 %v161
  %v163 = vlaneseq
  %v164 = vshrl.u32 %v163, 7
  %v165 = vsub.s32 %v162, %v164
  %v166 = vrot.slane %v144, %v165
  %v168 = vunpack.c.l.s4 1966171168
  %v169 = vunpack.c.0.s8 %v168
  %v170 = vlaneseq
  %v171 = vshrl.u32 %v170, 7
  %v172 = vsub.s32 %v169, %v171
  %v173 = vrot.slane %v145, %v172
  %v174 = vcombine.high %v152, %v152
  %v175 = vcombine.high %v159, %v159
  %v176 = vcombine.high %v166, %v166
  %v177 = vcombine.high %v173, %v173
  %vm194 = vcmask 122880
  %195 = vst.msk [vmem:[#allocation2] sm:$0x1] %vm194, %v103
  %196 = vst.msk [vmem:[#allocation2 + $0x8] sm:$0x1] %vm194, %v117
  %197 = vst.msk [vmem:[#allocation2 + $0x10] sm:$0x1] %vm194, %v125
  %198 = vst.msk [vmem:[#allocation2 + $0x18] sm:$0x1] %vm194, %v127
  %199 = vst.msk [vmem:[#allocation2 + $0x20] sm:$0x1] %vm194, %v110
  %200 = vst.msk [vmem:[#allocation2 + $0x28] sm:$0x1] %vm194, %v124
  %201 = vst.msk [vmem:[#allocation2 + $0x30] sm:$0x1] %vm194, %v126
  %202 = vst.msk [vmem:[#allocation2 + $0x38] sm:$0x1] %vm194, %v128
  %203 = vst.msk [vmem:[#allocation2 + $0x40] sm:$0x1] %vm194, %v152
  %204 = vst.msk [vmem:[#allocation2 + $0x48] sm:$0x1] %vm194, %v166
  %205 = vst.msk [vmem:[#allocation2 + $0x50] sm:$0x1] %vm194, %v174
  %206 = vst.msk [vmem:[#allocation2 + $0x58] sm:$0x1] %vm194, %v176
  %207 = vst.msk [vmem:[#allocation2 + $0x60] sm:$0x1] %vm194, %v159
  %208 = vst.msk [vmem:[#allocation2 + $0x68] sm:$0x1] %vm194, %v173
  %209 = vst.msk [vmem:[#allocation2 + $0x70] sm:$0x1] %vm194, %v175
  %210 = vst.msk [vmem:[#allocation2 + $0x78] sm:$0x1] %vm194, %v177
  %s211 = scalar_lea.vmem %s1, 8
  %v212 = vld [vmem:[%s211] sm:$0xf]
  %v213 = vld [vmem:[%s211 + $0x4] sm:$0xf]
  %s214 = scalar_lea.vmem %s0, 8
  %v215 = vld [vmem:[%s214] sm:$0xf]
  %v216 = vld [vmem:[%s214 + $0x4] sm:$0xf]
  %v219 = vunpack.c.l.b16 %v212
  %v220 = vunpack.c.l.b16 %v213
  %v221 = vpack.c.b16 %v220, %v219
  %v224 = vunpack.c.l.b16 %v215
  %v225 = vunpack.c.l.b16 %v216
  %v226 = vpack.c.b16 %v225, %v224
  %v229 = vsel %vm33, %v221, 0
  %231 = vmatprep.subr.bf16.mxu0 0
  %232 = vmatpush1.bf16.msra.mxu0 %v226
  %233 = vmatprep.subr.bf16.mxu0 0
  %234 = vmatpush1.bf16.msra.mxu0 0
  %235 = vmatprep.subr.bf16.mxu0 0
  %236 = vmatpush1.bf16.msra.mxu0 0
  %237 = vmatprep.subr.bf16.mxu0 0
  %238 = vmatpush1.bf16.msra.mxu0 0
  %239 = vmatprep.subr.bf16.mxu0 0
  %240 = vmatpush1.bf16.msra.mxu0 0
  %241 = vmatprep.subr.bf16.mxu0 0
  %242 = vmatpush1.bf16.msra.mxu0 0
  %243 = vmatprep.subr.bf16.mxu0 0
  %244 = vmatpush1.bf16.msra.mxu0 0
  %245 = vmatprep.subr.bf16.mxu0 0
  %246 = vmatpush1.bf16.msra.mxu0 0
  %247 = vmatprep.subr.bf16.mxu0 0
  %248 = vmatpush1.bf16.msra.mxu0 0
  %249 = vmatprep.subr.bf16.mxu0 0
  %250 = vmatpush1.bf16.msra.mxu0 0
  %251 = vmatprep.subr.bf16.mxu0 0
  %252 = vmatpush1.bf16.msra.mxu0 0
  %253 = vmatprep.subr.bf16.mxu0 0
  %254 = vmatpush1.bf16.msra.mxu0 0
  %255 = vmatprep.subr.bf16.mxu0 0
  %256 = vmatpush1.bf16.msra.mxu0 0
  %257 = vmatprep.subr.bf16.mxu0 0
  %258 = vmatpush1.bf16.msra.mxu0 0
  %259 = vmatprep.subr.bf16.mxu0 0
  %260 = vmatpush1.bf16.msra.mxu0 0
  %261 = vmatprep.subr.bf16.mxu0 0
  %262 = vmatpush1.bf16.msra.mxu0 0
  %263 = vmatprep.mubr.bf16.mxu0 0
  %264 = vmatmul.mubr.bf16.gmra.mrb[0].mxu0 %v229
  %v265 = vpop.f32.mrb[0].mxu0
  %v266 = vadd.f32 0.0, %v265
  %v267 = vpop.f32.mrb[0].mxu0
  %v268 = vpop.f32.mrb[0].mxu0
  %v269 = vadd.f32 0.0, %v268
  %v270 = vpop.f32.mrb[0].mxu0
  %271 = vdwg.mxu0
  %v274 = vcombine.high %v266, %v266
  %v276 = vunpack.c.l.s4 1966171168
  %v277 = vunpack.c.0.s8 %v276
  %v278 = vlaneseq
  %v279 = vshrl.u32 %v278, 7
  %v280 = vsub.s32 %v277, %v279
  %v281 = vrot.slane %v266, %v280
  %v283 = vunpack.c.l.s4 1966171168
  %v284 = vunpack.c.0.s8 %v283
  %v285 = vlaneseq
  %v286 = vshrl.u32 %v285, 7
  %v287 = vsub.s32 %v284, %v286
  %v288 = vrot.slane %v274, %v287
  %v289 = vcombine.high %v281, %v281
  %v290 = vcombine.high %v288, %v288
  %v292 = vunpack.c.l.s4 1966171168
  %v293 = vunpack.c.0.s8 %v292
  %v294 = vlaneseq
  %v295 = vshrl.u32 %v294, 7
  %v296 = vsub.s32 %v293, %v295
  %v297 = vrot.slane %v281, %v296
  %v299 = vunpack.c.l.s4 1966171168
  %v300 = vunpack.c.0.s8 %v299
  %v301 = vlaneseq
  %v302 = vshrl.u32 %v301, 7
  %v303 = vsub.s32 %v300, %v302
  %v304 = vrot.slane %v288, %v303
  %v306 = vunpack.c.l.s4 1966171168
  %v307 = vunpack.c.0.s8 %v306
  %v308 = vlaneseq
  %v309 = vshrl.u32 %v308, 7
  %v310 = vsub.s32 %v307, %v309
  %v311 = vrot.slane %v289, %v310
  %v313 = vunpack.c.l.s4 1966171168
  %v314 = vunpack.c.0.s8 %v313
  %v315 = vlaneseq
  %v316 = vshrl.u32 %v315, 7
  %v317 = vsub.s32 %v314, %v316
  %v318 = vrot.slane %v290, %v317
  %v319 = vcombine.high %v297, %v297
  %v320 = vcombine.high %v304, %v304
  %v321 = vcombine.high %v311, %v311
  %v322 = vcombine.high %v318, %v318
  %v323 = vcombine.high %v269, %v269
  %v325 = vunpack.c.l.s4 1966171168
  %v326 = vunpack.c.0.s8 %v325
  %v327 = vlaneseq
  %v328 = vshrl.u32 %v327, 7
  %v329 = vsub.s32 %v326, %v328
  %v330 = vrot.slane %v269, %v329
  %v332 = vunpack.c.l.s4 1966171168
  %v333 = vunpack.c.0.s8 %v332
  %v334 = vlaneseq
  %v335 = vshrl.u32 %v334, 7
  %v336 = vsub.s32 %v333, %v335
  %v337 = vrot.slane %v323, %v336
  %v338 = vcombine.high %v330, %v330
  %v339 = vcombine.high %v337, %v337
  %v341 = vunpack.c.l.s4 1966171168
  %v342 = vunpack.c.0.s8 %v341
  %v343 = vlaneseq
  %v344 = vshrl.u32 %v343, 7
  %v345 = vsub.s32 %v342, %v344
  %v346 = vrot.slane %v330, %v345
  %v348 = vunpack.c.l.s4 1966171168
  %v349 = vunpack.c.0.s8 %v348
  %v350 = vlaneseq
  %v351 = vshrl.u32 %v350, 7
  %v352 = vsub.s32 %v349, %v351
  %v353 = vrot.slane %v337, %v352
  %v355 = vunpack.c.l.s4 1966171168
  %v356 = vunpack.c.0.s8 %v355
  %v357 = vlaneseq
  %v358 = vshrl.u32 %v357, 7
  %v359 = vsub.s32 %v356, %v358
  %v360 = vrot.slane %v338, %v359
  %v362 = vunpack.c.l.s4 1966171168
  %v363 = vunpack.c.0.s8 %v362
  %v364 = vlaneseq
  %v365 = vshrl.u32 %v364, 7
  %v366 = vsub.s32 %v363, %v365
  %v367 = vrot.slane %v339, %v366
  %v368 = vcombine.high %v346, %v346
  %v369 = vcombine.high %v353, %v353
  %v370 = vcombine.high %v360, %v360
  %v371 = vcombine.high %v367, %v367
  %388 = vst.msk [vmem:[#allocation2 + $0x1] sm:$0x1] %vm194, %v297
  %389 = vst.msk [vmem:[#allocation2 + $0x9] sm:$0x1] %vm194, %v311
  %390 = vst.msk [vmem:[#allocation2 + $0x11] sm:$0x1] %vm194, %v319
  %391 = vst.msk [vmem:[#allocation2 + $0x19] sm:$0x1] %vm194, %v321
  %392 = vst.msk [vmem:[#allocation2 + $0x21] sm:$0x1] %vm194, %v304
  %393 = vst.msk [vmem:[#allocation2 + $0x29] sm:$0x1] %vm194, %v318
  %394 = vst.msk [vmem:[#allocation2 + $0x31] sm:$0x1] %vm194, %v320
  %395 = vst.msk [vmem:[#allocation2 + $0x39] sm:$0x1] %vm194, %v322
  %396 = vst.msk [vmem:[#allocation2 + $0x41] sm:$0x1] %vm194, %v346
  %397 = vst.msk [vmem:[#allocation2 + $0x49] sm:$0x1] %vm194, %v360
  %398 = vst.msk [vmem:[#allocation2 + $0x51] sm:$0x1] %vm194, %v368
  %399 = vst.msk [vmem:[#allocation2 + $0x59] sm:$0x1] %vm194, %v370
  %400 = vst.msk [vmem:[#allocation2 + $0x61] sm:$0x1] %vm194, %v353
  %401 = vst.msk [vmem:[#allocation2 + $0x69] sm:$0x1] %vm194, %v367
  %402 = vst.msk [vmem:[#allocation2 + $0x71] sm:$0x1] %vm194, %v369
  %403 = vst.msk [vmem:[#allocation2 + $0x79] sm:$0x1] %vm194, %v371
  %s404 = scalar_lea.vmem %s1, 16
  %v405 = vld [vmem:[%s404] sm:$0xf]
  %v406 = vld [vmem:[%s404 + $0x4] sm:$0xf]
  %s407 = scalar_lea.vmem %s0, 16
  %v408 = vld [vmem:[%s407] sm:$0xf]
  %v409 = vld [vmem:[%s407 + $0x4] sm:$0xf]
  %v412 = vunpack.c.l.b16 %v405
  %v413 = vunpack.c.l.b16 %v406
  %v414 = vpack.c.b16 %v413, %v412
  %v417 = vunpack.c.l.b16 %v408
  %v418 = vunpack.c.l.b16 %v409
  %v419 = vpack.c.b16 %v418, %v417
  %v422 = vsel %vm33, %v414, 0
  %424 = vmatprep.subr.bf16.mxu0 0
  %425 = vmatpush1.bf16.msra.mxu0 %v419
  %426 = vmatprep.subr.bf16.mxu0 0
  %427 = vmatpush1.bf16.msra.mxu0 0
  %428 = vmatprep.subr.bf16.mxu0 0
  %429 = vmatpush1.bf16.msra.mxu0 0
  %430 = vmatprep.subr.bf16.mxu0 0
  %431 = vmatpush1.bf16.msra.mxu0 0
  %432 = vmatprep.subr.bf16.mxu0 0
  %433 = vmatpush1.bf16.msra.mxu0 0
  %434 = vmatprep.subr.bf16.mxu0 0
  %435 = vmatpush1.bf16.msra.mxu0 0
  %436 = vmatprep.subr.bf16.mxu0 0
  %437 = vmatpush1.bf16.msra.mxu0 0
  %438 = vmatprep.subr.bf16.mxu0 0
  %439 = vmatpush1.bf16.msra.mxu0 0
  %440 = vmatprep.subr.bf16.mxu0 0
  %441 = vmatpush1.bf16.msra.mxu0 0
  %442 = vmatprep.subr.bf16.mxu0 0
  %443 = vmatpush1.bf16.msra.mxu0 0
  %444 = vmatprep.subr.bf16.mxu0 0
  %445 = vmatpush1.bf16.msra.mxu0 0
  %446 = vmatprep.subr.bf16.mxu0 0
  %447 = vmatpush1.bf16.msra.mxu0 0
  %448 = vmatprep.subr.bf16.mxu0 0
  %449 = vmatpush1.bf16.msra.mxu0 0
  %450 = vmatprep.subr.bf16.mxu0 0
  %451 = vmatpush1.bf16.msra.mxu0 0
  %452 = vmatprep.subr.bf16.mxu0 0
  %453 = vmatpush1.bf16.msra.mxu0 0
  %454 = vmatprep.subr.bf16.mxu0 0
  %455 = vmatpush1.bf16.msra.mxu0 0
  %456 = vmatprep.mubr.bf16.mxu0 0
  %457 = vmatmul.mubr.bf16.gmra.mrb[0].mxu0 %v422
  %v458 = vpop.f32.mrb[0].mxu0
  %v459 = vadd.f32 0.0, %v458
  %v460 = vpop.f32.mrb[0].mxu0
  %v461 = vpop.f32.mrb[0].mxu0
  %v462 = vadd.f32 0.0, %v461
  %v463 = vpop.f32.mrb[0].mxu0
  %464 = vdwg.mxu0
  %v467 = vcombine.high %v459, %v459
  %v469 = vunpack.c.l.s4 1966171168
  %v470 = vunpack.c.0.s8 %v469
  %v471 = vlaneseq
  %v472 = vshrl.u32 %v471, 7
  %v473 = vsub.s32 %v470, %v472
  %v474 = vrot.slane %v459, %v473
  %v476 = vunpack.c.l.s4 1966171168
  %v477 = vunpack.c.0.s8 %v476
  %v478 = vlaneseq
  %v479 = vshrl.u32 %v478, 7
  %v480 = vsub.s32 %v477, %v479
  %v481 = vrot.slane %v467, %v480
  %v482 = vcombine.high %v474, %v474
  %v483 = vcombine.high %v481, %v481
  %v485 = vunpack.c.l.s4 1966171168
  %v486 = vunpack.c.0.s8 %v485
  %v487 = vlaneseq
  %v488 = vshrl.u32 %v487, 7
  %v489 = vsub.s32 %v486, %v488
  %v490 = vrot.slane %v474, %v489
  %v492 = vunpack.c.l.s4 1966171168
  %v493 = vunpack.c.0.s8 %v492
  %v494 = vlaneseq
  %v495 = vshrl.u32 %v494, 7
  %v496 = vsub.s32 %v493, %v495
  %v497 = vrot.slane %v481, %v496
  %v499 = vunpack.c.l.s4 1966171168
  %v500 = vunpack.c.0.s8 %v499
  %v501 = vlaneseq
  %v502 = vshrl.u32 %v501, 7
  %v503 = vsub.s32 %v500, %v502
  %v504 = vrot.slane %v482, %v503
  %v506 = vunpack.c.l.s4 1966171168
  %v507 = vunpack.c.0.s8 %v506
  %v508 = vlaneseq
  %v509 = vshrl.u32 %v508, 7
  %v510 = vsub.s32 %v507, %v509
  %v511 = vrot.slane %v483, %v510
  %v512 = vcombine.high %v490, %v490
  %v513 = vcombine.high %v497, %v497
  %v514 = vcombine.high %v504, %v504
  %v515 = vcombine.high %v511, %v511
  %v516 = vcombine.high %v462, %v462
  %v518 = vunpack.c.l.s4 1966171168
  %v519 = vunpack.c.0.s8 %v518
  %v520 = vlaneseq
  %v521 = vshrl.u32 %v520, 7
  %v522 = vsub.s32 %v519, %v521
  %v523 = vrot.slane %v462, %v522
  %v525 = vunpack.c.l.s4 1966171168
  %v526 = vunpack.c.0.s8 %v525
  %v527 = vlaneseq
  %v528 = vshrl.u32 %v527, 7
  %v529 = vsub.s32 %v526, %v528
  %v530 = vrot.slane %v516, %v529
  %v531 = vcombine.high %v523, %v523
  %v532 = vcombine.high %v530, %v530
  %v534 = vunpack.c.l.s4 1966171168
  %v535 = vunpack.c.0.s8 %v534
  %v536 = vlaneseq
  %v537 = vshrl.u32 %v536, 7
  %v538 = vsub.s32 %v535, %v537
  %v539 = vrot.slane %v523, %v538
  %v541 = vunpack.c.l.s4 1966171168
  %v542 = vunpack.c.0.s8 %v541
  %v543 = vlaneseq
  %v544 = vshrl.u32 %v543, 7
  %v545 = vsub.s32 %v542, %v544
  %v546 = vrot.slane %v530, %v545
  %v548 = vunpack.c.l.s4 1966171168
  %v549 = vunpack.c.0.s8 %v548
  %v550 = vlaneseq
  %v551 = vshrl.u32 %v550, 7
  %v552 = vsub.s32 %v549, %v551
  %v553 = vrot.slane %v531, %v552
  %v555 = vunpack.c.l.s4 1966171168
  %v556 = vunpack.c.0.s8 %v555
  %v557 = vlaneseq
  %v558 = vshrl.u32 %v557, 7
  %v559 = vsub.s32 %v556, %v558
  %v560 = vrot.slane %v532, %v559
  %v561 = vcombine.high %v539, %v539
  %v562 = vcombine.high %v546, %v546
  %v563 = vcombine.high %v553, %v553
  %v564 = vcombine.high %v560, %v560
  %581 = vst.msk [vmem:[#allocation2 + $0x2] sm:$0x1] %vm194, %v490
  %582 = vst.msk [vmem:[#allocation2 + $0xa] sm:$0x1] %vm194, %v504
  %583 = vst.msk [vmem:[#allocation2 + $0x12] sm:$0x1] %vm194, %v512
  %584 = vst.msk [vmem:[#allocation2 + $0x1a] sm:$0x1] %vm194, %v514
  %585 = vst.msk [vmem:[#allocation2 + $0x22] sm:$0x1] %vm194, %v497
  %586 = vst.msk [vmem:[#allocation2 + $0x2a] sm:$0x1] %vm194, %v511
  %587 = vst.msk [vmem:[#allocation2 + $0x32] sm:$0x1] %vm194, %v513
  %588 = vst.msk [vmem:[#allocation2 + $0x3a] sm:$0x1] %vm194, %v515
  %589 = vst.msk [vmem:[#allocation2 + $0x42] sm:$0x1] %vm194, %v539
  %590 = vst.msk [vmem:[#allocation2 + $0x4a] sm:$0x1] %vm194, %v553
  %591 = vst.msk [vmem:[#allocation2 + $0x52] sm:$0x1] %vm194, %v561
  %592 = vst.msk [vmem:[#allocation2 + $0x5a] sm:$0x1] %vm194, %v563
  %593 = vst.msk [vmem:[#allocation2 + $0x62] sm:$0x1] %vm194, %v546
  %594 = vst.msk [vmem:[#allocation2 + $0x6a] sm:$0x1] %vm194, %v560
  %595 = vst.msk [vmem:[#allocation2 + $0x72] sm:$0x1] %vm194, %v562
  %596 = vst.msk [vmem:[#allocation2 + $0x7a] sm:$0x1] %vm194, %v564
  %s597 = scalar_lea.vmem %s1, 24
  %v598 = vld [vmem:[%s597] sm:$0xf]
  %v599 = vld [vmem:[%s597 + $0x4] sm:$0xf]
  %s600 = scalar_lea.vmem %s0, 24
  %v601 = vld [vmem:[%s600] sm:$0xf]
  %v602 = vld [vmem:[%s600 + $0x4] sm:$0xf]
  %v605 = vunpack.c.l.b16 %v598
  %v606 = vunpack.c.l.b16 %v599
  %v607 = vpack.c.b16 %v606, %v605
  %v610 = vunpack.c.l.b16 %v601
  %v611 = vunpack.c.l.b16 %v602
  %v612 = vpack.c.b16 %v611, %v610
  %v615 = vsel %vm33, %v607, 0
  %617 = vmatprep.subr.bf16.mxu0 0
  %618 = vmatpush1.bf16.msra.mxu0 %v612
  %619 = vmatprep.subr.bf16.mxu0 0
  %620 = vmatpush1.bf16.msra.mxu0 0
  %621 = vmatprep.subr.bf16.mxu0 0
  %622 = vmatpush1.bf16.msra.mxu0 0
  %623 = vmatprep.subr.bf16.mxu0 0
  %624 = vmatpush1.bf16.msra.mxu0 0
  %625 = vmatprep.subr.bf16.mxu0 0
  %626 = vmatpush1.bf16.msra.mxu0 0
  %627 = vmatprep.subr.bf16.mxu0 0
  %628 = vmatpush1.bf16.msra.mxu0 0
  %629 = vmatprep.subr.bf16.mxu0 0
  %630 = vmatpush1.bf16.msra.mxu0 0
  %631 = vmatprep.subr.bf16.mxu0 0
  %632 = vmatpush1.bf16.msra.mxu0 0
  %633 = vmatprep.subr.bf16.mxu0 0
  %634 = vmatpush1.bf16.msra.mxu0 0
  %635 = vmatprep.subr.bf16.mxu0 0
  %636 = vmatpush1.bf16.msra.mxu0 0
  %637 = vmatprep.subr.bf16.mxu0 0
  %638 = vmatpush1.bf16.msra.mxu0 0
  %639 = vmatprep.subr.bf16.mxu0 0
  %640 = vmatpush1.bf16.msra.mxu0 0
  %641 = vmatprep.subr.bf16.mxu0 0
  %642 = vmatpush1.bf16.msra.mxu0 0
  %643 = vmatprep.subr.bf16.mxu0 0
  %644 = vmatpush1.bf16.msra.mxu0 0
  %645 = vmatprep.subr.bf16.mxu0 0
  %646 = vmatpush1.bf16.msra.mxu0 0
  %647 = vmatprep.subr.bf16.mxu0 0
  %648 = vmatpush1.bf16.msra.mxu0 0
  %649 = vmatprep.mubr.bf16.mxu0 0
  %650 = vmatmul.mubr.bf16.gmra.mrb[0].mxu0 %v615
  %v651 = vpop.f32.mrb[0].mxu0
  %v652 = vadd.f32 0.0, %v651
  %v653 = vpop.f32.mrb[0].mxu0
  %v654 = vpop.f32.mrb[0].mxu0
  %v655 = vadd.f32 0.0, %v654
  %v656 = vpop.f32.mrb[0].mxu0
  %657 = vdwg.mxu0
  %v660 = vcombine.high %v652, %v652
  %v662 = vunpack.c.l.s4 1966171168
  %v663 = vunpack.c.0.s8 %v662
  %v664 = vlaneseq
  %v665 = vshrl.u32 %v664, 7
  %v666 = vsub.s32 %v663, %v665
  %v667 = vrot.slane %v652, %v666
  %v669 = vunpack.c.l.s4 1966171168
  %v670 = vunpack.c.0.s8 %v669
  %v671 = vlaneseq
  %v672 = vshrl.u32 %v671, 7
  %v673 = vsub.s32 %v670, %v672
  %v674 = vrot.slane %v660, %v673
  %v675 = vcombine.high %v667, %v667
  %v676 = vcombine.high %v674, %v674
  %v678 = vunpack.c.l.s4 1966171168
  %v679 = vunpack.c.0.s8 %v678
  %v680 = vlaneseq
  %v681 = vshrl.u32 %v680, 7
  %v682 = vsub.s32 %v679, %v681
  %v683 = vrot.slane %v667, %v682
  %v685 = vunpack.c.l.s4 1966171168
  %v686 = vunpack.c.0.s8 %v685
  %v687 = vlaneseq
  %v688 = vshrl.u32 %v687, 7
  %v689 = vsub.s32 %v686, %v688
  %v690 = vrot.slane %v674, %v689
  %v692 = vunpack.c.l.s4 1966171168
  %v693 = vunpack.c.0.s8 %v692
  %v694 = vlaneseq
  %v695 = vshrl.u32 %v694, 7
  %v696 = vsub.s32 %v693, %v695
  %v697 = vrot.slane %v675, %v696
  %v699 = vunpack.c.l.s4 1966171168
  %v700 = vunpack.c.0.s8 %v699
  %v701 = vlaneseq
  %v702 = vshrl.u32 %v701, 7
  %v703 = vsub.s32 %v700, %v702
  %v704 = vrot.slane %v676, %v703
  %v705 = vcombine.high %v683, %v683
  %v706 = vcombine.high %v690, %v690
  %v707 = vcombine.high %v697, %v697
  %v708 = vcombine.high %v704, %v704
  %v709 = vcombine.high %v655, %v655
  %v711 = vunpack.c.l.s4 1966171168
  %v712 = vunpack.c.0.s8 %v711
  %v713 = vlaneseq
  %v714 = vshrl.u32 %v713, 7
  %v715 = vsub.s32 %v712, %v714
  %v716 = vrot.slane %v655, %v715
  %v718 = vunpack.c.l.s4 1966171168
  %v719 = vunpack.c.0.s8 %v718
  %v720 = vlaneseq
  %v721 = vshrl.u32 %v720, 7
  %v722 = vsub.s32 %v719, %v721
  %v723 = vrot.slane %v709, %v722
  %v724 = vcombine.high %v716, %v716
  %v725 = vcombine.high %v723, %v723
  %v727 = vunpack.c.l.s4 1966171168
  %v728 = vunpack.c.0.s8 %v727
  %v729 = vlaneseq
  %v730 = vshrl.u32 %v729, 7
  %v731 = vsub.s32 %v728, %v730
  %v732 = vrot.slane %v716, %v731
  %v734 = vunpack.c.l.s4 1966171168
  %v735 = vunpack.c.0.s8 %v734
  %v736 = vlaneseq
  %v737 = vshrl.u32 %v736, 7
  %v738 = vsub.s32 %v735, %v737
  %v739 = vrot.slane %v723, %v738
  %v741 = vunpack.c.l.s4 1966171168
  %v742 = vunpack.c.0.s8 %v741
  %v743 = vlaneseq
  %v744 = vshrl.u32 %v743, 7
  %v745 = vsub.s32 %v742, %v744
  %v746 = vrot.slane %v724, %v745
  %v748 = vunpack.c.l.s4 1966171168
  %v749 = vunpack.c.0.s8 %v748
  %v750 = vlaneseq
  %v751 = vshrl.u32 %v750, 7
  %v752 = vsub.s32 %v749, %v751
  %v753 = vrot.slane %v725, %v752
  %v754 = vcombine.high %v732, %v732
  %v755 = vcombine.high %v739, %v739
  %v756 = vcombine.high %v746, %v746
  %v757 = vcombine.high %v753, %v753
  %774 = vst.msk [vmem:[#allocation2 + $0x3] sm:$0x1] %vm194, %v683
  %775 = vst.msk [vmem:[#allocation2 + $0xb] sm:$0x1] %vm194, %v697
  %776 = vst.msk [vmem:[#allocation2 + $0x13] sm:$0x1] %vm194, %v705
  %777 = vst.msk [vmem:[#allocation2 + $0x1b] sm:$0x1] %vm194, %v707
  %778 = vst.msk [vmem:[#allocation2 + $0x23] sm:$0x1] %vm194, %v690
  %779 = vst.msk [vmem:[#allocation2 + $0x2b] sm:$0x1] %vm194, %v704
  %780 = vst.msk [vmem:[#allocation2 + $0x33] sm:$0x1] %vm194, %v706
  %781 = vst.msk [vmem:[#allocation2 + $0x3b] sm:$0x1] %vm194, %v708
  %782 = vst.msk [vmem:[#allocation2 + $0x43] sm:$0x1] %vm194, %v732
  %783 = vst.msk [vmem:[#allocation2 + $0x4b] sm:$0x1] %vm194, %v746
  %784 = vst.msk [vmem:[#allocation2 + $0x53] sm:$0x1] %vm194, %v754
  %785 = vst.msk [vmem:[#allocation2 + $0x5b] sm:$0x1] %vm194, %v756
  %786 = vst.msk [vmem:[#allocation2 + $0x63] sm:$0x1] %vm194, %v739
  %787 = vst.msk [vmem:[#allocation2 + $0x6b] sm:$0x1] %vm194, %v753
  %788 = vst.msk [vmem:[#allocation2 + $0x73] sm:$0x1] %vm194, %v755
  %789 = vst.msk [vmem:[#allocation2 + $0x7b] sm:$0x1] %vm194, %v757
  %s790 = scalar_lea.vmem %s1, 32
  %v791 = vld [vmem:[%s790] sm:$0xf]
  %v792 = vld [vmem:[%s790 + $0x4] sm:$0xf]
  %s793 = scalar_lea.vmem %s0, 32
  %v794 = vld [vmem:[%s793] sm:$0xf]
  %v795 = vld [vmem:[%s793 + $0x4] sm:$0xf]
  %v798 = vunpack.c.l.b16 %v791
  %v799 = vunpack.c.l.b16 %v792
  %v800 = vpack.c.b16 %v799, %v798
  %v803 = vunpack.c.l.b16 %v794
  %v804 = vunpack.c.l.b16 %v795
  %v805 = vpack.c.b16 %v804, %v803
  %v808 = vsel %vm33, %v800, 0
  %810 = vmatprep.subr.bf16.mxu0 0
  %811 = vmatpush1.bf16.msra.mxu0 %v805
  %812 = vmatprep.subr.bf16.mxu0 0
  %813 = vmatpush1.bf16.msra.mxu0 0
  %814 = vmatprep.subr.bf16.mxu0 0
  %815 = vmatpush1.bf16.msra.mxu0 0
  %816 = vmatprep.subr.bf16.mxu0 0
  %817 = vmatpush1.bf16.msra.mxu0 0
  %818 = vmatprep.subr.bf16.mxu0 0
  %819 = vmatpush1.bf16.msra.mxu0 0
  %820 = vmatprep.subr.bf16.mxu0 0
  %821 = vmatpush1.bf16.msra.mxu0 0
  %822 = vmatprep.subr.bf16.mxu0 0
  %823 = vmatpush1.bf16.msra.mxu0 0
  %824 = vmatprep.subr.bf16.mxu0 0
  %825 = vmatpush1.bf16.msra.mxu0 0
  %826 = vmatprep.subr.bf16.mxu0 0
  %827 = vmatpush1.bf16.msra.mxu0 0
  %828 = vmatprep.subr.bf16.mxu0 0
  %829 = vmatpush1.bf16.msra.mxu0 0
  %830 = vmatprep.subr.bf16.mxu0 0
  %831 = vmatpush1.bf16.msra.mxu0 0
  %832 = vmatprep.subr.bf16.mxu0 0
  %833 = vmatpush1.bf16.msra.mxu0 0
  %834 = vmatprep.subr.bf16.mxu0 0
  %835 = vmatpush1.bf16.msra.mxu0 0
  %836 = vmatprep.subr.bf16.mxu0 0
  %837 = vmatpush1.bf16.msra.mxu0 0
  %838 = vmatprep.subr.bf16.mxu0 0
  %839 = vmatpush1.bf16.msra.mxu0 0
  %840 = vmatprep.subr.bf16.mxu0 0
  %841 = vmatpush1.bf16.msra.mxu0 0
  %842 = vmatprep.mubr.bf16.mxu0 0
  %843 = vmatmul.mubr.bf16.gmra.mrb[0].mxu0 %v808
  %v844 = vpop.f32.mrb[0].mxu0
  %v845 = vadd.f32 0.0, %v844
  %v846 = vpop.f32.mrb[0].mxu0
  %v847 = vpop.f32.mrb[0].mxu0
  %v848 = vadd.f32 0.0, %v847
  %v849 = vpop.f32.mrb[0].mxu0
  %850 = vdwg.mxu0
  %v853 = vcombine.high %v845, %v845
  %v855 = vunpack.c.l.s4 1966171168
  %v856 = vunpack.c.0.s8 %v855
  %v857 = vlaneseq
  %v858 = vshrl.u32 %v857, 7
  %v859 = vsub.s32 %v856, %v858
  %v860 = vrot.slane %v845, %v859
  %v862 = vunpack.c.l.s4 1966171168
  %v863 = vunpack.c.0.s8 %v862
  %v864 = vlaneseq
  %v865 = vshrl.u32 %v864, 7
  %v866 = vsub.s32 %v863, %v865
  %v867 = vrot.slane %v853, %v866
  %v868 = vcombine.high %v860, %v860
  %v869 = vcombine.high %v867, %v867
  %v871 = vunpack.c.l.s4 1966171168
  %v872 = vunpack.c.0.s8 %v871
  %v873 = vlaneseq
  %v874 = vshrl.u32 %v873, 7
  %v875 = vsub.s32 %v872, %v874
  %v876 = vrot.slane %v860, %v875
  %v878 = vunpack.c.l.s4 1966171168
  %v879 = vunpack.c.0.s8 %v878
  %v880 = vlaneseq
  %v881 = vshrl.u32 %v880, 7
  %v882 = vsub.s32 %v879, %v881
  %v883 = vrot.slane %v867, %v882
  %v885 = vunpack.c.l.s4 1966171168
  %v886 = vunpack.c.0.s8 %v885
  %v887 = vlaneseq
  %v888 = vshrl.u32 %v887, 7
  %v889 = vsub.s32 %v886, %v888
  %v890 = vrot.slane %v868, %v889
  %v892 = vunpack.c.l.s4 1966171168
  %v893 = vunpack.c.0.s8 %v892
  %v894 = vlaneseq
  %v895 = vshrl.u32 %v894, 7
  %v896 = vsub.s32 %v893, %v895
  %v897 = vrot.slane %v869, %v896
  %v898 = vcombine.high %v876, %v876
  %v899 = vcombine.high %v883, %v883
  %v900 = vcombine.high %v890, %v890
  %v901 = vcombine.high %v897, %v897
  %v902 = vcombine.high %v848, %v848
  %v904 = vunpack.c.l.s4 1966171168
  %v905 = vunpack.c.0.s8 %v904
  %v906 = vlaneseq
  %v907 = vshrl.u32 %v906, 7
  %v908 = vsub.s32 %v905, %v907
  %v909 = vrot.slane %v848, %v908
  %v911 = vunpack.c.l.s4 1966171168
  %v912 = vunpack.c.0.s8 %v911
  %v913 = vlaneseq
  %v914 = vshrl.u32 %v913, 7
  %v915 = vsub.s32 %v912, %v914
  %v916 = vrot.slane %v902, %v915
  %v917 = vcombine.high %v909, %v909
  %v918 = vcombine.high %v916, %v916
  %v920 = vunpack.c.l.s4 1966171168
  %v921 = vunpack.c.0.s8 %v920
  %v922 = vlaneseq
  %v923 = vshrl.u32 %v922, 7
  %v924 = vsub.s32 %v921, %v923
  %v925 = vrot.slane %v909, %v924
  %v927 = vunpack.c.l.s4 1966171168
  %v928 = vunpack.c.0.s8 %v927
  %v929 = vlaneseq
  %v930 = vshrl.u32 %v929, 7
  %v931 = vsub.s32 %v928, %v930
  %v932 = vrot.slane %v916, %v931
  %v934 = vunpack.c.l.s4 1966171168
  %v935 = vunpack.c.0.s8 %v934
  %v936 = vlaneseq
  %v937 = vshrl.u32 %v936, 7
  %v938 = vsub.s32 %v935, %v937
  %v939 = vrot.slane %v917, %v938
  %v941 = vunpack.c.l.s4 1966171168
  %v942 = vunpack.c.0.s8 %v941
  %v943 = vlaneseq
  %v944 = vshrl.u32 %v943, 7
  %v945 = vsub.s32 %v942, %v944
  %v946 = vrot.slane %v918, %v945
  %v947 = vcombine.high %v925, %v925
  %v948 = vcombine.high %v932, %v932
  %v949 = vcombine.high %v939, %v939
  %v950 = vcombine.high %v946, %v946
  %967 = vst.msk [vmem:[#allocation2 + $0x4] sm:$0x1] %vm194, %v876
  %968 = vst.msk [vmem:[#allocation2 + $0xc] sm:$0x1] %vm194, %v890
  %969 = vst.msk [vmem:[#allocation2 + $0x14] sm:$0x1] %vm194, %v898
  %970 = vst.msk [vmem:[#allocation2 + $0x1c] sm:$0x1] %vm194, %v900
  %971 = vst.msk [vmem:[#allocation2 + $0x24] sm:$0x1] %vm194, %v883
  %972 = vst.msk [vmem:[#allocation2 + $0x2c] sm:$0x1] %vm194, %v897
  %973 = vst.msk [vmem:[#allocation2 + $0x34] sm:$0x1] %vm194, %v899
  %974 = vst.msk [vmem:[#allocation2 + $0x3c] sm:$0x1] %vm194, %v901
  %975 = vst.msk [vmem:[#allocation2 + $0x44] sm:$0x1] %vm194, %v925
  %976 = vst.msk [vmem:[#allocation2 + $0x4c] sm:$0x1] %vm194, %v939
  %977 = vst.msk [vmem:[#allocation2 + $0x54] sm:$0x1] %vm194, %v947
  %978 = vst.msk [vmem:[#allocation2 + $0x5c] sm:$0x1] %vm194, %v949
  %979 = vst.msk [vmem:[#allocation2 + $0x64] sm:$0x1] %vm194, %v932
  %980 = vst.msk [vmem:[#allocation2 + $0x6c] sm:$0x1] %vm194, %v946
  %981 = vst.msk [vmem:[#allocation2 + $0x74] sm:$0x1] %vm194, %v948
  %982 = vst.msk [vmem:[#allocation2 + $0x7c] sm:$0x1] %vm194, %v950
  %s983 = scalar_lea.vmem %s1, 40
  %v984 = vld [vmem:[%s983] sm:$0xf]
  %v985 = vld [vmem:[%s983 + $0x4] sm:$0xf]
  %s986 = scalar_lea.vmem %s0, 40
  %v987 = vld [vmem:[%s986] sm:$0xf]
  %v988 = vld [vmem:[%s986 + $0x4] sm:$0xf]
  %v991 = vunpack.c.l.b16 %v984
  %v992 = vunpack.c.l.b16 %v985
  %v993 = vpack.c.b16 %v992, %v991
  %v996 = vunpack.c.l.b16 %v987
  %v997 = vunpack.c.l.b16 %v988
  %v998 = vpack.c.b16 %v997, %v996
  %v1001 = vsel %vm33, %v993, 0
  %1003 = vmatprep.subr.bf16.mxu0 0
  %1004 = vmatpush1.bf16.msra.mxu0 %v998
  %1005 = vmatprep.subr.bf16.mxu0 0
  %1006 = vmatpush1.bf16.msra.mxu0 0
  %1007 = vmatprep.subr.bf16.mxu0 0
  %1008 = vmatpush1.bf16.msra.mxu0 0
  %1009 = vmatprep.subr.bf16.mxu0 0
  %1010 = vmatpush1.bf16.msra.mxu0 0
  %1011 = vmatprep.subr.bf16.mxu0 0
  %1012 = vmatpush1.bf16.msra.mxu0 0
  %1013 = vmatprep.subr.bf16.mxu0 0
  %1014 = vmatpush1.bf16.msra.mxu0 0
  %1015 = vmatprep.subr.bf16.mxu0 0
  %1016 = vmatpush1.bf16.msra.mxu0 0
  %1017 = vmatprep.subr.bf16.mxu0 0
  %1018 = vmatpush1.bf16.msra.mxu0 0
  %1019 = vmatprep.subr.bf16.mxu0 0
  %1020 = vmatpush1.bf16.msra.mxu0 0
  %1021 = vmatprep.subr.bf16.mxu0 0
  %1022 = vmatpush1.bf16.msra.mxu0 0
  %1023 = vmatprep.subr.bf16.mxu0 0
  %1024 = vmatpush1.bf16.msra.mxu0 0
  %1025 = vmatprep.subr.bf16.mxu0 0
  %1026 = vmatpush1.bf16.msra.mxu0 0
  %1027 = vmatprep.subr.bf16.mxu0 0
  %1028 = vmatpush1.bf16.msra.mxu0 0
  %1029 = vmatprep.subr.bf16.mxu0 0
  %1030 = vmatpush1.bf16.msra.mxu0 0
  %1031 = vmatprep.subr.bf16.mxu0 0
  %1032 = vmatpush1.bf16.msra.mxu0 0
  %1033 = vmatprep.subr.bf16.mxu0 0
  %1034 = vmatpush1.bf16.msra.mxu0 0
  %1035 = vmatprep.mubr.bf16.mxu0 0
  %1036 = vmatmul.mubr.bf16.gmra.mrb[0].mxu0 %v1001
  %v1037 = vpop.f32.mrb[0].mxu0
  %v1038 = vadd.f32 0.0, %v1037
  %v1039 = vpop.f32.mrb[0].mxu0
  %v1040 = vpop.f32.mrb[0].mxu0
  %v1041 = vadd.f32 0.0, %v1040
  %v1042 = vpop.f32.mrb[0].mxu0
  %1043 = vdwg.mxu0
  %v1046 = vcombine.high %v1038, %v1038
  %v1048 = vunpack.c.l.s4 1966171168
  %v1049 = vunpack.c.0.s8 %v1048
  %v1050 = vlaneseq
  %v1051 = vshrl.u32 %v1050, 7
  %v1052 = vsub.s32 %v1049, %v1051
  %v1053 = vrot.slane %v1038, %v1052
  %v1055 = vunpack.c.l.s4 1966171168
  %v1056 = vunpack.c.0.s8 %v1055
  %v1057 = vlaneseq
  %v1058 = vshrl.u32 %v1057, 7
  %v1059 = vsub.s32 %v1056, %v1058
  %v1060 = vrot.slane %v1046, %v1059
  %v1061 = vcombine.high %v1053, %v1053
  %v1062 = vcombine.high %v1060, %v1060
  %v1064 = vunpack.c.l.s4 1966171168
  %v1065 = vunpack.c.0.s8 %v1064
  %v1066 = vlaneseq
  %v1067 = vshrl.u32 %v1066, 7
  %v1068 = vsub.s32 %v1065, %v1067
  %v1069 = vrot.slane %v1053, %v1068
  %v1071 = vunpack.c.l.s4 1966171168
  %v1072 = vunpack.c.0.s8 %v1071
  %v1073 = vlaneseq
  %v1074 = vshrl.u32 %v1073, 7
  %v1075 = vsub.s32 %v1072, %v1074
  %v1076 = vrot.slane %v1060, %v1075
  %v1078 = vunpack.c.l.s4 1966171168
  %v1079 = vunpack.c.0.s8 %v1078
  %v1080 = vlaneseq
  %v1081 = vshrl.u32 %v1080, 7
  %v1082 = vsub.s32 %v1079, %v1081
  %v1083 = vrot.slane %v1061, %v1082
  %v1085 = vunpack.c.l.s4 1966171168
  %v1086 = vunpack.c.0.s8 %v1085
  %v1087 = vlaneseq
  %v1088 = vshrl.u32 %v1087, 7
  %v1089 = vsub.s32 %v1086, %v1088
  %v1090 = vrot.slane %v1062, %v1089
  %v1091 = vcombine.high %v1069, %v1069
  %v1092 = vcombine.high %v1076, %v1076
  %v1093 = vcombine.high %v1083, %v1083
  %v1094 = vcombine.high %v1090, %v1090
  %v1095 = vcombine.high %v1041, %v1041
  %v1097 = vunpack.c.l.s4 1966171168
  %v1098 = vunpack.c.0.s8 %v1097
  %v1099 = vlaneseq
  %v1100 = vshrl.u32 %v1099, 7
  %v1101 = vsub.s32 %v1098, %v1100
  %v1102 = vrot.slane %v1041, %v1101
  %v1104 = vunpack.c.l.s4 1966171168
  %v1105 = vunpack.c.0.s8 %v1104
  %v1106 = vlaneseq
  %v1107 = vshrl.u32 %v1106, 7
  %v1108 = vsub.s32 %v1105, %v1107
  %v1109 = vrot.slane %v1095, %v1108
  %v1110 = vcombine.high %v1102, %v1102
  %v1111 = vcombine.high %v1109, %v1109
  %v1113 = vunpack.c.l.s4 1966171168
  %v1114 = vunpack.c.0.s8 %v1113
  %v1115 = vlaneseq
  %v1116 = vshrl.u32 %v1115, 7
  %v1117 = vsub.s32 %v1114, %v1116
  %v1118 = vrot.slane %v1102, %v1117
  %v1120 = vunpack.c.l.s4 1966171168
  %v1121 = vunpack.c.0.s8 %v1120
  %v1122 = vlaneseq
  %v1123 = vshrl.u32 %v1122, 7
  %v1124 = vsub.s32 %v1121, %v1123
  %v1125 = vrot.slane %v1109, %v1124
  %v1127 = vunpack.c.l.s4 1966171168
  %v1128 = vunpack.c.0.s8 %v1127
  %v1129 = vlaneseq
  %v1130 = vshrl.u32 %v1129, 7
  %v1131 = vsub.s32 %v1128, %v1130
  %v1132 = vrot.slane %v1110, %v1131
  %v1134 = vunpack.c.l.s4 1966171168
  %v1135 = vunpack.c.0.s8 %v1134
  %v1136 = vlaneseq
  %v1137 = vshrl.u32 %v1136, 7
  %v1138 = vsub.s32 %v1135, %v1137
  %v1139 = vrot.slane %v1111, %v1138
  %v1140 = vcombine.high %v1118, %v1118
  %v1141 = vcombine.high %v1125, %v1125
  %v1142 = vcombine.high %v1132, %v1132
  %v1143 = vcombine.high %v1139, %v1139
  %1160 = vst.msk [vmem:[#allocation2 + $0x5] sm:$0x1] %vm194, %v1069
  %1161 = vst.msk [vmem:[#allocation2 + $0xd] sm:$0x1] %vm194, %v1083
  %1162 = vst.msk [vmem:[#allocation2 + $0x15] sm:$0x1] %vm194, %v1091
  %1163 = vst.msk [vmem:[#allocation2 + $0x1d] sm:$0x1] %vm194, %v1093
  %1164 = vst.msk [vmem:[#allocation2 + $0x25] sm:$0x1] %vm194, %v1076
  %1165 = vst.msk [vmem:[#allocation2 + $0x2d] sm:$0x1] %vm194, %v1090
  %1166 = vst.msk [vmem:[#allocation2 + $0x35] sm:$0x1] %vm194, %v1092
  %1167 = vst.msk [vmem:[#allocation2 + $0x3d] sm:$0x1] %vm194, %v1094
  %1168 = vst.msk [vmem:[#allocation2 + $0x45] sm:$0x1] %vm194, %v1118
  %1169 = vst.msk [vmem:[#allocation2 + $0x4d] sm:$0x1] %vm194, %v1132
  %1170 = vst.msk [vmem:[#allocation2 + $0x55] sm:$0x1] %vm194, %v1140
  %1171 = vst.msk [vmem:[#allocation2 + $0x5d] sm:$0x1] %vm194, %v1142
  %1172 = vst.msk [vmem:[#allocation2 + $0x65] sm:$0x1] %vm194, %v1125
  %1173 = vst.msk [vmem:[#allocation2 + $0x6d] sm:$0x1] %vm194, %v1139
  %1174 = vst.msk [vmem:[#allocation2 + $0x75] sm:$0x1] %vm194, %v1141
  %1175 = vst.msk [vmem:[#allocation2 + $0x7d] sm:$0x1] %vm194, %v1143
  %s1176 = scalar_lea.vmem %s1, 48
  %v1177 = vld [vmem:[%s1176] sm:$0xf]
  %v1178 = vld [vmem:[%s1176 + $0x4] sm:$0xf]
  %s1179 = scalar_lea.vmem %s0, 48
  %v1180 = vld [vmem:[%s1179] sm:$0xf]
  %v1181 = vld [vmem:[%s1179 + $0x4] sm:$0xf]
  %v1184 = vunpack.c.l.b16 %v1177
  %v1185 = vunpack.c.l.b16 %v1178
  %v1186 = vpack.c.b16 %v1185, %v1184
  %v1189 = vunpack.c.l.b16 %v1180
  %v1190 = vunpack.c.l.b16 %v1181
  %v1191 = vpack.c.b16 %v1190, %v1189
  %v1194 = vsel %vm33, %v1186, 0
  %1196 = vmatprep.subr.bf16.mxu0 0
  %1197 = vmatpush1.bf16.msra.mxu0 %v1191
  %1198 = vmatprep.subr.bf16.mxu0 0
  %1199 = vmatpush1.bf16.msra.mxu0 0
  %1200 = vmatprep.subr.bf16.mxu0 0
  %1201 = vmatpush1.bf16.msra.mxu0 0
  %1202 = vmatprep.subr.bf16.mxu0 0
  %1203 = vmatpush1.bf16.msra.mxu0 0
  %1204 = vmatprep.subr.bf16.mxu0 0
  %1205 = vmatpush1.bf16.msra.mxu0 0
  %1206 = vmatprep.subr.bf16.mxu0 0
  %1207 = vmatpush1.bf16.msra.mxu0 0
  %1208 = vmatprep.subr.bf16.mxu0 0
  %1209 = vmatpush1.bf16.msra.mxu0 0
  %1210 = vmatprep.subr.bf16.mxu0 0
  %1211 = vmatpush1.bf16.msra.mxu0 0
  %1212 = vmatprep.subr.bf16.mxu0 0
  %1213 = vmatpush1.bf16.msra.mxu0 0
  %1214 = vmatprep.subr.bf16.mxu0 0
  %1215 = vmatpush1.bf16.msra.mxu0 0
  %1216 = vmatprep.subr.bf16.mxu0 0
  %1217 = vmatpush1.bf16.msra.mxu0 0
  %1218 = vmatprep.subr.bf16.mxu0 0
  %1219 = vmatpush1.bf16.msra.mxu0 0
  %1220 = vmatprep.subr.bf16.mxu0 0
  %1221 = vmatpush1.bf16.msra.mxu0 0
  %1222 = vmatprep.subr.bf16.mxu0 0
  %1223 = vmatpush1.bf16.msra.mxu0 0
  %1224 = vmatprep.subr.bf16.mxu0 0
  %1225 = vmatpush1.bf16.msra.mxu0 0
  %1226 = vmatprep.subr.bf16.mxu0 0
  %1227 = vmatpush1.bf16.msra.mxu0 0
  %1228 = vmatprep.mubr.bf16.mxu0 0
  %1229 = vmatmul.mubr.bf16.gmra.mrb[0].mxu0 %v1194
  %v1230 = vpop.f32.mrb[0].mxu0
  %v1231 = vadd.f32 0.0, %v1230
  %v1232 = vpop.f32.mrb[0].mxu0
  %v1233 = vpop.f32.mrb[0].mxu0
  %v1234 = vadd.f32 0.0, %v1233
  %v1235 = vpop.f32.mrb[0].mxu0
  %1236 = vdwg.mxu0
  %v1239 = vcombine.high %v1231, %v1231
  %v1241 = vunpack.c.l.s4 1966171168
  %v1242 = vunpack.c.0.s8 %v1241
  %v1243 = vlaneseq
  %v1244 = vshrl.u32 %v1243, 7
  %v1245 = vsub.s32 %v1242, %v1244
  %v1246 = vrot.slane %v1231, %v1245
  %v1248 = vunpack.c.l.s4 1966171168
  %v1249 = vunpack.c.0.s8 %v1248
  %v1250 = vlaneseq
  %v1251 = vshrl.u32 %v1250, 7
  %v1252 = vsub.s32 %v1249, %v1251
  %v1253 = vrot.slane %v1239, %v1252
  %v1254 = vcombine.high %v1246, %v1246
  %v1255 = vcombine.high %v1253, %v1253
  %v1257 = vunpack.c.l.s4 1966171168
  %v1258 = vunpack.c.0.s8 %v1257
  %v1259 = vlaneseq
  %v1260 = vshrl.u32 %v1259, 7
  %v1261 = vsub.s32 %v1258, %v1260
  %v1262 = vrot.slane %v1246, %v1261
  %v1264 = vunpack.c.l.s4 1966171168
  %v1265 = vunpack.c.0.s8 %v1264
  %v1266 = vlaneseq
  %v1267 = vshrl.u32 %v1266, 7
  %v1268 = vsub.s32 %v1265, %v1267
  %v1269 = vrot.slane %v1253, %v1268
  %v1271 = vunpack.c.l.s4 1966171168
  %v1272 = vunpack.c.0.s8 %v1271
  %v1273 = vlaneseq
  %v1274 = vshrl.u32 %v1273, 7
  %v1275 = vsub.s32 %v1272, %v1274
  %v1276 = vrot.slane %v1254, %v1275
  %v1278 = vunpack.c.l.s4 1966171168
  %v1279 = vunpack.c.0.s8 %v1278
  %v1280 = vlaneseq
  %v1281 = vshrl.u32 %v1280, 7
  %v1282 = vsub.s32 %v1279, %v1281
  %v1283 = vrot.slane %v1255, %v1282
  %v1284 = vcombine.high %v1262, %v1262
  %v1285 = vcombine.high %v1269, %v1269
  %v1286 = vcombine.high %v1276, %v1276
  %v1287 = vcombine.high %v1283, %v1283
  %v1288 = vcombine.high %v1234, %v1234
  %v1290 = vunpack.c.l.s4 1966171168
  %v1291 = vunpack.c.0.s8 %v1290
  %v1292 = vlaneseq
  %v1293 = vshrl.u32 %v1292, 7
  %v1294 = vsub.s32 %v1291, %v1293
  %v1295 = vrot.slane %v1234, %v1294
  %v1297 = vunpack.c.l.s4 1966171168
  %v1298 = vunpack.c.0.s8 %v1297
  %v1299 = vlaneseq
  %v1300 = vshrl.u32 %v1299, 7
  %v1301 = vsub.s32 %v1298, %v1300
  %v1302 = vrot.slane %v1288, %v1301
  %v1303 = vcombine.high %v1295, %v1295
  %v1304 = vcombine.high %v1302, %v1302
  %v1306 = vunpack.c.l.s4 1966171168
  %v1307 = vunpack.c.0.s8 %v1306
  %v1308 = vlaneseq
  %v1309 = vshrl.u32 %v1308, 7
  %v1310 = vsub.s32 %v1307, %v1309
  %v1311 = vrot.slane %v1295, %v1310
  %v1313 = vunpack.c.l.s4 1966171168
  %v1314 = vunpack.c.0.s8 %v1313
  %v1315 = vlaneseq
  %v1316 = vshrl.u32 %v1315, 7
  %v1317 = vsub.s32 %v1314, %v1316
  %v1318 = vrot.slane %v1302, %v1317
  %v1320 = vunpack.c.l.s4 1966171168
  %v1321 = vunpack.c.0.s8 %v1320
  %v1322 = vlaneseq
  %v1323 = vshrl.u32 %v1322, 7
  %v1324 = vsub.s32 %v1321, %v1323
  %v1325 = vrot.slane %v1303, %v1324
  %v1327 = vunpack.c.l.s4 1966171168
  %v1328 = vunpack.c.0.s8 %v1327
  %v1329 = vlaneseq
  %v1330 = vshrl.u32 %v1329, 7
  %v1331 = vsub.s32 %v1328, %v1330
  %v1332 = vrot.slane %v1304, %v1331
  %v1333 = vcombine.high %v1311, %v1311
  %v1334 = vcombine.high %v1318, %v1318
  %v1335 = vcombine.high %v1325, %v1325
  %v1336 = vcombine.high %v1332, %v1332
  %1353 = vst.msk [vmem:[#allocation2 + $0x6] sm:$0x1] %vm194, %v1262
  %1354 = vst.msk [vmem:[#allocation2 + $0xe] sm:$0x1] %vm194, %v1276
  %1355 = vst.msk [vmem:[#allocation2 + $0x16] sm:$0x1] %vm194, %v1284
  %1356 = vst.msk [vmem:[#allocation2 + $0x1e] sm:$0x1] %vm194, %v1286
  %1357 = vst.msk [vmem:[#allocation2 + $0x26] sm:$0x1] %vm194, %v1269
  %1358 = vst.msk [vmem:[#allocation2 + $0x2e] sm:$0x1] %vm194, %v1283
  %1359 = vst.msk [vmem:[#allocation2 + $0x36] sm:$0x1] %vm194, %v1285
  %1360 = vst.msk [vmem:[#allocation2 + $0x3e] sm:$0x1] %vm194, %v1287
  %1361 = vst.msk [vmem:[#allocation2 + $0x46] sm:$0x1] %vm194, %v1311
  %1362 = vst.msk [vmem:[#allocation2 + $0x4e] sm:$0x1] %vm194, %v1325
  %1363 = vst.msk [vmem:[#allocation2 + $0x56] sm:$0x1] %vm194, %v1333
  %1364 = vst.msk [vmem:[#allocation2 + $0x5e] sm:$0x1] %vm194, %v1335
  %1365 = vst.msk [vmem:[#allocation2 + $0x66] sm:$0x1] %vm194, %v1318
  %1366 = vst.msk [vmem:[#allocation2 + $0x6e] sm:$0x1] %vm194, %v1332
  %1367 = vst.msk [vmem:[#allocation2 + $0x76] sm:$0x1] %vm194, %v1334
  %1368 = vst.msk [vmem:[#allocation2 + $0x7e] sm:$0x1] %vm194, %v1336
  %s1369 = scalar_lea.vmem %s1, 56
  %v1370 = vld [vmem:[%s1369] sm:$0xf]
  %v1371 = vld [vmem:[%s1369 + $0x4] sm:$0xf]
  %s1372 = scalar_lea.vmem %s0, 56
  %v1373 = vld [vmem:[%s1372] sm:$0xf]
  %v1374 = vld [vmem:[%s1372 + $0x4] sm:$0xf]
  %v1377 = vunpack.c.l.b16 %v1370
  %v1378 = vunpack.c.l.b16 %v1371
  %v1379 = vpack.c.b16 %v1378, %v1377
  %v1382 = vunpack.c.l.b16 %v1373
  %v1383 = vunpack.c.l.b16 %v1374
  %v1384 = vpack.c.b16 %v1383, %v1382
  %v1387 = vsel %vm33, %v1379, 0
  %1389 = vmatprep.subr.bf16.mxu0 0
  %1390 = vmatpush1.bf16.msra.mxu0 %v1384
  %1391 = vmatprep.subr.bf16.mxu0 0
  %1392 = vmatpush1.bf16.msra.mxu0 0
  %1393 = vmatprep.subr.bf16.mxu0 0
  %1394 = vmatpush1.bf16.msra.mxu0 0
  %1395 = vmatprep.subr.bf16.mxu0 0
  %1396 = vmatpush1.bf16.msra.mxu0 0
  %1397 = vmatprep.subr.bf16.mxu0 0
  %1398 = vmatpush1.bf16.msra.mxu0 0
  %1399 = vmatprep.subr.bf16.mxu0 0
  %1400 = vmatpush1.bf16.msra.mxu0 0
  %1401 = vmatprep.subr.bf16.mxu0 0
  %1402 = vmatpush1.bf16.msra.mxu0 0
  %1403 = vmatprep.subr.bf16.mxu0 0
  %1404 = vmatpush1.bf16.msra.mxu0 0
  %1405 = vmatprep.subr.bf16.mxu0 0
  %1406 = vmatpush1.bf16.msra.mxu0 0
  %1407 = vmatprep.subr.bf16.mxu0 0
  %1408 = vmatpush1.bf16.msra.mxu0 0
  %1409 = vmatprep.subr.bf16.mxu0 0
  %1410 = vmatpush1.bf16.msra.mxu0 0
  %1411 = vmatprep.subr.bf16.mxu0 0
  %1412 = vmatpush1.bf16.msra.mxu0 0
  %1413 = vmatprep.subr.bf16.mxu0 0
  %1414 = vmatpush1.bf16.msra.mxu0 0
  %1415 = vmatprep.subr.bf16.mxu0 0
  %1416 = vmatpush1.bf16.msra.mxu0 0
  %1417 = vmatprep.subr.bf16.mxu0 0
  %1418 = vmatpush1.bf16.msra.mxu0 0
  %1419 = vmatprep.subr.bf16.mxu0 0
  %1420 = vmatpush1.bf16.msra.mxu0 0
  %1421 = vmatprep.mubr.bf16.mxu0 0
  %1422 = vmatmul.mubr.bf16.gmra.mrb[0].mxu0 %v1387
  %v1423 = vpop.f32.mrb[0].mxu0
  %v1424 = vadd.f32 0.0, %v1423
  %v1425 = vpop.f32.mrb[0].mxu0
  %v1426 = vpop.f32.mrb[0].mxu0
  %v1427 = vadd.f32 0.0, %v1426
  %v1428 = vpop.f32.mrb[0].mxu0
  %1429 = vdwg.mxu0
  %v1432 = vcombine.high %v1424, %v1424
  %v1434 = vunpack.c.l.s4 1966171168
  %v1435 = vunpack.c.0.s8 %v1434
  %v1436 = vlaneseq
  %v1437 = vshrl.u32 %v1436, 7
  %v1438 = vsub.s32 %v1435, %v1437
  %v1439 = vrot.slane %v1424, %v1438
  %v1441 = vunpack.c.l.s4 1966171168
  %v1442 = vunpack.c.0.s8 %v1441
  %v1443 = vlaneseq
  %v1444 = vshrl.u32 %v1443, 7
  %v1445 = vsub.s32 %v1442, %v1444
  %v1446 = vrot.slane %v1432, %v1445
  %v1447 = vcombine.high %v1439, %v1439
  %v1448 = vcombine.high %v1446, %v1446
  %v1450 = vunpack.c.l.s4 1966171168
  %v1451 = vunpack.c.0.s8 %v1450
  %v1452 = vlaneseq
  %v1453 = vshrl.u32 %v1452, 7
  %v1454 = vsub.s32 %v1451, %v1453
  %v1455 = vrot.slane %v1439, %v1454
  %v1457 = vunpack.c.l.s4 1966171168
  %v1458 = vunpack.c.0.s8 %v1457
  %v1459 = vlaneseq
  %v1460 = vshrl.u32 %v1459, 7
  %v1461 = vsub.s32 %v1458, %v1460
  %v1462 = vrot.slane %v1446, %v1461
  %v1464 = vunpack.c.l.s4 1966171168
  %v1465 = vunpack.c.0.s8 %v1464
  %v1466 = vlaneseq
  %v1467 = vshrl.u32 %v1466, 7
  %v1468 = vsub.s32 %v1465, %v1467
  %v1469 = vrot.slane %v1447, %v1468
  %v1471 = vunpack.c.l.s4 1966171168
  %v1472 = vunpack.c.0.s8 %v1471
  %v1473 = vlaneseq
  %v1474 = vshrl.u32 %v1473, 7
  %v1475 = vsub.s32 %v1472, %v1474
  %v1476 = vrot.slane %v1448, %v1475
  %v1477 = vcombine.high %v1455, %v1455
  %v1478 = vcombine.high %v1462, %v1462
  %v1479 = vcombine.high %v1469, %v1469
  %v1480 = vcombine.high %v1476, %v1476
  %v1481 = vcombine.high %v1427, %v1427
  %v1483 = vunpack.c.l.s4 1966171168
  %v1484 = vunpack.c.0.s8 %v1483
  %v1485 = vlaneseq
  %v1486 = vshrl.u32 %v1485, 7
  %v1487 = vsub.s32 %v1484, %v1486
  %v1488 = vrot.slane %v1427, %v1487
  %v1490 = vunpack.c.l.s4 1966171168
  %v1491 = vunpack.c.0.s8 %v1490
  %v1492 = vlaneseq
  %v1493 = vshrl.u32 %v1492, 7
  %v1494 = vsub.s32 %v1491, %v1493
  %v1495 = vrot.slane %v1481, %v1494
  %v1496 = vcombine.high %v1488, %v1488
  %v1497 = vcombine.high %v1495, %v1495
  %v1499 = vunpack.c.l.s4 1966171168
  %v1500 = vunpack.c.0.s8 %v1499
  %v1501 = vlaneseq
  %v1502 = vshrl.u32 %v1501, 7
  %v1503 = vsub.s32 %v1500, %v1502
  %v1504 = vrot.slane %v1488, %v1503
  %v1506 = vunpack.c.l.s4 1966171168
  %v1507 = vunpack.c.0.s8 %v1506
  %v1508 = vlaneseq
  %v1509 = vshrl.u32 %v1508, 7
  %v1510 = vsub.s32 %v1507, %v1509
  %v1511 = vrot.slane %v1495, %v1510
  %v1513 = vunpack.c.l.s4 1966171168
  %v1514 = vunpack.c.0.s8 %v1513
  %v1515 = vlaneseq
  %v1516 = vshrl.u32 %v1515, 7
  %v1517 = vsub.s32 %v1514, %v1516
  %v1518 = vrot.slane %v1496, %v1517
  %v1520 = vunpack.c.l.s4 1966171168
  %v1521 = vunpack.c.0.s8 %v1520
  %v1522 = vlaneseq
  %v1523 = vshrl.u32 %v1522, 7
  %v1524 = vsub.s32 %v1521, %v1523
  %v1525 = vrot.slane %v1497, %v1524
  %v1526 = vcombine.high %v1504, %v1504
  %v1527 = vcombine.high %v1511, %v1511
  %v1528 = vcombine.high %v1518, %v1518
  %v1529 = vcombine.high %v1525, %v1525
  %1546 = vst.msk [vmem:[#allocation2 + $0x7] sm:$0x1] %vm194, %v1455
  %1547 = vst.msk [vmem:[#allocation2 + $0xf] sm:$0x1] %vm194, %v1469
  %1548 = vst.msk [vmem:[#allocation2 + $0x17] sm:$0x1] %vm194, %v1477
  %1549 = vst.msk [vmem:[#allocation2 + $0x1f] sm:$0x1] %vm194, %v1479
  %1550 = vst.msk [vmem:[#allocation2 + $0x27] sm:$0x1] %vm194, %v1462
  %1551 = vst.msk [vmem:[#allocation2 + $0x2f] sm:$0x1] %vm194, %v1476
  %1552 = vst.msk [vmem:[#allocation2 + $0x37] sm:$0x1] %vm194, %v1478
  %1553 = vst.msk [vmem:[#allocation2 + $0x3f] sm:$0x1] %vm194, %v1480
  %1554 = vst.msk [vmem:[#allocation2 + $0x47] sm:$0x1] %vm194, %v1504
  %1555 = vst.msk [vmem:[#allocation2 + $0x4f] sm:$0x1] %vm194, %v1518
  %1556 = vst.msk [vmem:[#allocation2 + $0x57] sm:$0x1] %vm194, %v1526
  %1557 = vst.msk [vmem:[#allocation2 + $0x5f] sm:$0x1] %vm194, %v1528
  %1558 = vst.msk [vmem:[#allocation2 + $0x67] sm:$0x1] %vm194, %v1511
  %1559 = vst.msk [vmem:[#allocation2 + $0x6f] sm:$0x1] %vm194, %v1525
  %1560 = vst.msk [vmem:[#allocation2 + $0x77] sm:$0x1] %vm194, %v1527
  %1561 = vst.msk [vmem:[#allocation2 + $0x7f] sm:$0x1] %vm194, %v1529
  %v1562 = vld [vmem:[#allocation2] sm:$0xff]
  %v1563 = vld [vmem:[#allocation2 + $0x8] sm:$0xff]
  %v1564 = vld [vmem:[#allocation2 + $0x10] sm:$0xff]
  %v1565 = vld [vmem:[#allocation2 + $0x18] sm:$0xff]
  %v1566 = vld [vmem:[#allocation2 + $0x20] sm:$0xff]
  %v1567 = vld [vmem:[#allocation2 + $0x28] sm:$0xff]
  %v1568 = vld [vmem:[#allocation2 + $0x30] sm:$0xff]
  %v1569 = vld [vmem:[#allocation2 + $0x38] sm:$0xff]
  %v1570 = vld [vmem:[#allocation2 + $0x40] sm:$0xff]
  %v1571 = vld [vmem:[#allocation2 + $0x48] sm:$0xff]
  %v1572 = vld [vmem:[#allocation2 + $0x50] sm:$0xff]
  %v1573 = vld [vmem:[#allocation2 + $0x58] sm:$0xff]
  %v1574 = vld [vmem:[#allocation2 + $0x60] sm:$0xff]
  %v1575 = vld [vmem:[#allocation2 + $0x68] sm:$0xff]
  %v1576 = vld [vmem:[#allocation2 + $0x70] sm:$0xff]
  %v1577 = vld [vmem:[#allocation2 + $0x78] sm:$0xff]
  %v1578 = vpack.c.bf16 %v1562, %v1562
  %v1579 = vpack.c.bf16 %v1563, %v1563
  %v1580 = vpack.c.bf16 %v1564, %v1564
  %v1581 = vpack.c.bf16 %v1565, %v1565
  %v1582 = vpack.c.bf16 %v1566, %v1566
  %v1583 = vpack.c.bf16 %v1567, %v1567
  %v1584 = vpack.c.bf16 %v1568, %v1568
  %v1585 = vpack.c.bf16 %v1569, %v1569
  %v1586 = vpack.c.bf16 %v1570, %v1570
  %v1587 = vpack.c.bf16 %v1571, %v1571
  %v1588 = vpack.c.bf16 %v1572, %v1572
  %v1589 = vpack.c.bf16 %v1573, %v1573
  %v1590 = vpack.c.bf16 %v1574, %v1574
  %v1591 = vpack.c.bf16 %v1575, %v1575
  %v1592 = vpack.c.bf16 %v1576, %v1576
  %v1593 = vpack.c.bf16 %v1577, %v1577
  %v1594 = vld [vmem:[%s3] sm:$0xf]
  %v1595 = vld [vmem:[%s3 + $0x4] sm:$0xf]
  %v1596 = vld [vmem:[%s3 + $0x8] sm:$0xf]
  %v1597 = vld [vmem:[%s3 + $0xc] sm:$0xf]
  %v1598 = vld [vmem:[%s3 + $0x10] sm:$0xf]
  %v1599 = vld [vmem:[%s3 + $0x14] sm:$0xf]
  %v1600 = vld [vmem:[%s3 + $0x18] sm:$0xf]
  %v1601 = vld [vmem:[%s3 + $0x1c] sm:$0xf]
  %v1602 = vld [vmem:[%s3 + $0x20] sm:$0xf]
  %v1603 = vld [vmem:[%s3 + $0x24] sm:$0xf]
  %v1604 = vld [vmem:[%s3 + $0x28] sm:$0xf]
  %v1605 = vld [vmem:[%s3 + $0x2c] sm:$0xf]
  %v1606 = vld [vmem:[%s3 + $0x30] sm:$0xf]
  %v1607 = vld [vmem:[%s3 + $0x34] sm:$0xf]
  %v1608 = vld [vmem:[%s3 + $0x38] sm:$0xf]
  %v1609 = vld [vmem:[%s3 + $0x3c] sm:$0xf]
  %v1610 = vld [vmem:[%s3 + $0x40] sm:$0xf]
  %v1611 = vld [vmem:[%s3 + $0x44] sm:$0xf]
  %v1612 = vld [vmem:[%s3 + $0x48] sm:$0xf]
  %v1613 = vld [vmem:[%s3 + $0x4c] sm:$0xf]
  %v1614 = vld [vmem:[%s3 + $0x50] sm:$0xf]
  %v1615 = vld [vmem:[%s3 + $0x54] sm:$0xf]
  %v1616 = vld [vmem:[%s3 + $0x58] sm:$0xf]
  %v1617 = vld [vmem:[%s3 + $0x5c] sm:$0xf]
  %v1618 = vld [vmem:[%s3 + $0x60] sm:$0xf]
  %v1619 = vld [vmem:[%s3 + $0x64] sm:$0xf]
  %v1620 = vld [vmem:[%s3 + $0x68] sm:$0xf]
  %v1621 = vld [vmem:[%s3 + $0x6c] sm:$0xf]
  %v1622 = vld [vmem:[%s3 + $0x70] sm:$0xf]
  %v1623 = vld [vmem:[%s3 + $0x74] sm:$0xf]
  %v1624 = vld [vmem:[%s3 + $0x78] sm:$0xf]
  %v1625 = vld [vmem:[%s3 + $0x7c] sm:$0xf]
  %v1628 = vunpack.c.l.b16 %v1594
  %v1629 = vunpack.c.l.b16 %v1595
  %v1630 = vpack.c.b16 %v1629, %v1628
  %v1633 = vsel %vm33, %v1578, 0
  %1635 = vmatprep.subr.bf16.mxu0 0
  %1636 = vmatpush1.bf16.msra.mxu0 %v1630
  %1637 = vmatprep.subr.bf16.mxu0 0
  %1638 = vmatpush1.bf16.msra.mxu0 0
  %1639 = vmatprep.subr.bf16.mxu0 0
  %1640 = vmatpush1.bf16.msra.mxu0 0
  %1641 = vmatprep.subr.bf16.mxu0 0
  %1642 = vmatpush1.bf16.msra.mxu0 0
  %1643 = vmatprep.subr.bf16.mxu0 0
  %1644 = vmatpush1.bf16.msra.mxu0 0
  %1645 = vmatprep.subr.bf16.mxu0 0
  %1646 = vmatpush1.bf16.msra.mxu0 0
  %1647 = vmatprep.subr.bf16.mxu0 0
  %1648 = vmatpush1.bf16.msra.mxu0 0
  %1649 = vmatprep.subr.bf16.mxu0 0
  %1650 = vmatpush1.bf16.msra.mxu0 0
  %1651 = vmatprep.subr.bf16.mxu0 0
  %1652 = vmatpush1.bf16.msra.mxu0 0
  %1653 = vmatprep.subr.bf16.mxu0 0
  %1654 = vmatpush1.bf16.msra.mxu0 0
  %1655 = vmatprep.subr.bf16.mxu0 0
  %1656 = vmatpush1.bf16.msra.mxu0 0
  %1657 = vmatprep.subr.bf16.mxu0 0
  %1658 = vmatpush1.bf16.msra.mxu0 0
  %1659 = vmatprep.subr.bf16.mxu0 0
  %1660 = vmatpush1.bf16.msra.mxu0 0
  %1661 = vmatprep.subr.bf16.mxu0 0
  %1662 = vmatpush1.bf16.msra.mxu0 0
  %1663 = vmatprep.subr.bf16.mxu0 0
  %1664 = vmatpush1.bf16.msra.mxu0 0
  %1665 = vmatprep.subr.bf16.mxu0 0
  %1666 = vmatpush1.bf16.msra.mxu0 0
  %1667 = vmatprep.mubr.bf16.mxu0 0
  %1668 = vmatmul.mubr.bf16.gmra.mrb[0].mxu0 %v1633
  %v1669 = vpop.f32.mrb[0].mxu0
  %v1670 = vadd.f32 0.0, %v1669
  %v1671 = vpop.f32.mrb[0].mxu0
  %v1672 = vpop.f32.mrb[0].mxu0
  %v1673 = vpop.f32.mrb[0].mxu0
  %1674 = vdwg.mxu0
  %v1677 = vunpack.c.l.b16 %v1596
  %v1678 = vunpack.c.l.b16 %v1597
  %v1679 = vpack.c.b16 %v1678, %v1677
  %v1682 = vsel %vm33, %v1579, 0
  %1684 = vmatprep.subr.bf16.mxu0 0
  %1685 = vmatpush1.bf16.msra.mxu0 %v1679
  %1686 = vmatprep.subr.bf16.mxu0 0
  %1687 = vmatpush1.bf16.msra.mxu0 0
  %1688 = vmatprep.subr.bf16.mxu0 0
  %1689 = vmatpush1.bf16.msra.mxu0 0
  %1690 = vmatprep.subr.bf16.mxu0 0
  %1691 = vmatpush1.bf16.msra.mxu0 0
  %1692 = vmatprep.subr.bf16.mxu0 0
  %1693 = vmatpush1.bf16.msra.mxu0 0
  %1694 = vmatprep.subr.bf16.mxu0 0
  %1695 = vmatpush1.bf16.msra.mxu0 0
  %1696 = vmatprep.subr.bf16.mxu0 0
  %1697 = vmatpush1.bf16.msra.mxu0 0
  %1698 = vmatprep.subr.bf16.mxu0 0
  %1699 = vmatpush1.bf16.msra.mxu0 0
  %1700 = vmatprep.subr.bf16.mxu0 0
  %1701 = vmatpush1.bf16.msra.mxu0 0
  %1702 = vmatprep.subr.bf16.mxu0 0
  %1703 = vmatpush1.bf16.msra.mxu0 0
  %1704 = vmatprep.subr.bf16.mxu0 0
  %1705 = vmatpush1.bf16.msra.mxu0 0
  %1706 = vmatprep.subr.bf16.mxu0 0
  %1707 = vmatpush1.bf16.msra.mxu0 0
  %1708 = vmatprep.subr.bf16.mxu0 0
  %1709 = vmatpush1.bf16.msra.mxu0 0
  %1710 = vmatprep.subr.bf16.mxu0 0
  %1711 = vmatpush1.bf16.msra.mxu0 0
  %1712 = vmatprep.subr.bf16.mxu0 0
  %1713 = vmatpush1.bf16.msra.mxu0 0
  %1714 = vmatprep.subr.bf16.mxu0 0
  %1715 = vmatpush1.bf16.msra.mxu0 0
  %1716 = vmatprep.mubr.bf16.mxu0 0
  %1717 = vmatmul.mubr.bf16.gmra.mrb[0].mxu0 %v1682
  %v1718 = vpop.f32.mrb[0].mxu0
  %v1719 = vadd.f32 0.0, %v1718
  %v1720 = vpop.f32.mrb[0].mxu0
  %v1721 = vpop.f32.mrb[0].mxu0
  %v1722 = vpop.f32.mrb[0].mxu0
  %1723 = vdwg.mxu0
  %v1726 = vunpack.c.l.b16 %v1598
  %v1727 = vunpack.c.l.b16 %v1599
  %v1728 = vpack.c.b16 %v1727, %v1726
  %v1731 = vsel %vm33, %v1580, 0
  %1733 = vmatprep.subr.bf16.mxu0 0
  %1734 = vmatpush1.bf16.msra.mxu0 %v1728
  %1735 = vmatprep.subr.bf16.mxu0 0
  %1736 = vmatpush1.bf16.msra.mxu0 0
  %1737 = vmatprep.subr.bf16.mxu0 0
  %1738 = vmatpush1.bf16.msra.mxu0 0
  %1739 = vmatprep.subr.bf16.mxu0 0
  %1740 = vmatpush1.bf16.msra.mxu0 0
  %1741 = vmatprep.subr.bf16.mxu0 0
  %1742 = vmatpush1.bf16.msra.mxu0 0
  %1743 = vmatprep.subr.bf16.mxu0 0
  %1744 = vmatpush1.bf16.msra.mxu0 0
  %1745 = vmatprep.subr.bf16.mxu0 0
  %1746 = vmatpush1.bf16.msra.mxu0 0
  %1747 = vmatprep.subr.bf16.mxu0 0
  %1748 = vmatpush1.bf16.msra.mxu0 0
  %1749 = vmatprep.subr.bf16.mxu0 0
  %1750 = vmatpush1.bf16.msra.mxu0 0
  %1751 = vmatprep.subr.bf16.mxu0 0
  %1752 = vmatpush1.bf16.msra.mxu0 0
  %1753 = vmatprep.subr.bf16.mxu0 0
  %1754 = vmatpush1.bf16.msra.mxu0 0
  %1755 = vmatprep.subr.bf16.mxu0 0
  %1756 = vmatpush1.bf16.msra.mxu0 0
  %1757 = vmatprep.subr.bf16.mxu0 0
  %1758 = vmatpush1.bf16.msra.mxu0 0
  %1759 = vmatprep.subr.bf16.mxu0 0
  %1760 = vmatpush1.bf16.msra.mxu0 0
  %1761 = vmatprep.subr.bf16.mxu0 0
  %1762 = vmatpush1.bf16.msra.mxu0 0
  %1763 = vmatprep.subr.bf16.mxu0 0
  %1764 = vmatpush1.bf16.msra.mxu0 0
  %1765 = vmatprep.mubr.bf16.mxu0 0
  %1766 = vmatmul.mubr.bf16.gmra.mrb[0].mxu0 %v1731
  %v1767 = vpop.f32.mrb[0].mxu0
  %v1768 = vadd.f32 0.0, %v1767
  %v1769 = vpop.f32.mrb[0].mxu0
  %v1770 = vpop.f32.mrb[0].mxu0
  %v1771 = vpop.f32.mrb[0].mxu0
  %1772 = vdwg.mxu0
  %v1775 = vunpack.c.l.b16 %v1600
  %v1776 = vunpack.c.l.b16 %v1601
  %v1777 = vpack.c.b16 %v1776, %v1775
  %v1780 = vsel %vm33, %v1581, 0
  %1782 = vmatprep.subr.bf16.mxu0 0
  %1783 = vmatpush1.bf16.msra.mxu0 %v1777
  %1784 = vmatprep.subr.bf16.mxu0 0
  %1785 = vmatpush1.bf16.msra.mxu0 0
  %1786 = vmatprep.subr.bf16.mxu0 0
  %1787 = vmatpush1.bf16.msra.mxu0 0
  %1788 = vmatprep.subr.bf16.mxu0 0
  %1789 = vmatpush1.bf16.msra.mxu0 0
  %1790 = vmatprep.subr.bf16.mxu0 0
  %1791 = vmatpush1.bf16.msra.mxu0 0
  %1792 = vmatprep.subr.bf16.mxu0 0
  %1793 = vmatpush1.bf16.msra.mxu0 0
  %1794 = vmatprep.subr.bf16.mxu0 0
  %1795 = vmatpush1.bf16.msra.mxu0 0
  %1796 = vmatprep.subr.bf16.mxu0 0
  %1797 = vmatpush1.bf16.msra.mxu0 0
  %1798 = vmatprep.subr.bf16.mxu0 0
  %1799 = vmatpush1.bf16.msra.mxu0 0
  %1800 = vmatprep.subr.bf16.mxu0 0
  %1801 = vmatpush1.bf16.msra.mxu0 0
  %1802 = vmatprep.subr.bf16.mxu0 0
  %1803 = vmatpush1.bf16.msra.mxu0 0
  %1804 = vmatprep.subr.bf16.mxu0 0
  %1805 = vmatpush1.bf16.msra.mxu0 0
  %1806 = vmatprep.subr.bf16.mxu0 0
  %1807 = vmatpush1.bf16.msra.mxu0 0
  %1808 = vmatprep.subr.bf16.mxu0 0
  %1809 = vmatpush1.bf16.msra.mxu0 0
  %1810 = vmatprep.subr.bf16.mxu0 0
  %1811 = vmatpush1.bf16.msra.mxu0 0
  %1812 = vmatprep.subr.bf16.mxu0 0
  %1813 = vmatpush1.bf16.msra.mxu0 0
  %1814 = vmatprep.mubr.bf16.mxu0 0
  %1815 = vmatmul.mubr.bf16.gmra.mrb[0].mxu0 %v1780
  %v1816 = vpop.f32.mrb[0].mxu0
  %v1817 = vadd.f32 0.0, %v1816
  %v1818 = vpop.f32.mrb[0].mxu0
  %v1819 = vpop.f32.mrb[0].mxu0
  %v1820 = vpop.f32.mrb[0].mxu0
  %1821 = vdwg.mxu0
  %v1824 = vunpack.c.l.b16 %v1602
  %v1825 = vunpack.c.l.b16 %v1603
  %v1826 = vpack.c.b16 %v1825, %v1824
  %v1829 = vsel %vm33, %v1582, 0
  %1831 = vmatprep.subr.bf16.mxu0 0
  %1832 = vmatpush1.bf16.msra.mxu0 %v1826
  %1833 = vmatprep.subr.bf16.mxu0 0
  %1834 = vmatpush1.bf16.msra.mxu0 0
  %1835 = vmatprep.subr.bf16.mxu0 0
  %1836 = vmatpush1.bf16.msra.mxu0 0
  %1837 = vmatprep.subr.bf16.mxu0 0
  %1838 = vmatpush1.bf16.msra.mxu0 0
  %1839 = vmatprep.subr.bf16.mxu0 0
  %1840 = vmatpush1.bf16.msra.mxu0 0
  %1841 = vmatprep.subr.bf16.mxu0 0
  %1842 = vmatpush1.bf16.msra.mxu0 0
  %1843 = vmatprep.subr.bf16.mxu0 0
  %1844 = vmatpush1.bf16.msra.mxu0 0
  %1845 = vmatprep.subr.bf16.mxu0 0
  %1846 = vmatpush1.bf16.msra.mxu0 0
  %1847 = vmatprep.subr.bf16.mxu0 0
  %1848 = vmatpush1.bf16.msra.mxu0 0
  %1849 = vmatprep.subr.bf16.mxu0 0
  %1850 = vmatpush1.bf16.msra.mxu0 0
  %1851 = vmatprep.subr.bf16.mxu0 0
  %1852 = vmatpush1.bf16.msra.mxu0 0
  %1853 = vmatprep.subr.bf16.mxu0 0
  %1854 = vmatpush1.bf16.msra.mxu0 0
  %1855 = vmatprep.subr.bf16.mxu0 0
  %1856 = vmatpush1.bf16.msra.mxu0 0
  %1857 = vmatprep.subr.bf16.mxu0 0
  %1858 = vmatpush1.bf16.msra.mxu0 0
  %1859 = vmatprep.subr.bf16.mxu0 0
  %1860 = vmatpush1.bf16.msra.mxu0 0
  %1861 = vmatprep.subr.bf16.mxu0 0
  %1862 = vmatpush1.bf16.msra.mxu0 0
  %1863 = vmatprep.mubr.bf16.mxu0 0
  %1864 = vmatmul.mubr.bf16.gmra.mrb[0].mxu0 %v1829
  %v1865 = vpop.f32.mrb[0].mxu0
  %v1866 = vadd.f32 0.0, %v1865
  %v1867 = vpop.f32.mrb[0].mxu0
  %v1868 = vpop.f32.mrb[0].mxu0
  %v1869 = vpop.f32.mrb[0].mxu0
  %1870 = vdwg.mxu0
  %v1873 = vunpack.c.l.b16 %v1604
  %v1874 = vunpack.c.l.b16 %v1605
  %v1875 = vpack.c.b16 %v1874, %v1873
  %v1878 = vsel %vm33, %v1583, 0
  %1880 = vmatprep.subr.bf16.mxu0 0
  %1881 = vmatpush1.bf16.msra.mxu0 %v1875
  %1882 = vmatprep.subr.bf16.mxu0 0
  %1883 = vmatpush1.bf16.msra.mxu0 0
  %1884 = vmatprep.subr.bf16.mxu0 0
  %1885 = vmatpush1.bf16.msra.mxu0 0
  %1886 = vmatprep.subr.bf16.mxu0 0
  %1887 = vmatpush1.bf16.msra.mxu0 0
  %1888 = vmatprep.subr.bf16.mxu0 0
  %1889 = vmatpush1.bf16.msra.mxu0 0
  %1890 = vmatprep.subr.bf16.mxu0 0
  %1891 = vmatpush1.bf16.msra.mxu0 0
  %1892 = vmatprep.subr.bf16.mxu0 0
  %1893 = vmatpush1.bf16.msra.mxu0 0
  %1894 = vmatprep.subr.bf16.mxu0 0
  %1895 = vmatpush1.bf16.msra.mxu0 0
  %1896 = vmatprep.subr.bf16.mxu0 0
  %1897 = vmatpush1.bf16.msra.mxu0 0
  %1898 = vmatprep.subr.bf16.mxu0 0
  %1899 = vmatpush1.bf16.msra.mxu0 0
  %1900 = vmatprep.subr.bf16.mxu0 0
  %1901 = vmatpush1.bf16.msra.mxu0 0
  %1902 = vmatprep.subr.bf16.mxu0 0
  %1903 = vmatpush1.bf16.msra.mxu0 0
  %1904 = vmatprep.subr.bf16.mxu0 0
  %1905 = vmatpush1.bf16.msra.mxu0 0
  %1906 = vmatprep.subr.bf16.mxu0 0
  %1907 = vmatpush1.bf16.msra.mxu0 0
  %1908 = vmatprep.subr.bf16.mxu0 0
  %1909 = vmatpush1.bf16.msra.mxu0 0
  %1910 = vmatprep.subr.bf16.mxu0 0
  %1911 = vmatpush1.bf16.msra.mxu0 0
  %1912 = vmatprep.mubr.bf16.mxu0 0
  %1913 = vmatmul.mubr.bf16.gmra.mrb[0].mxu0 %v1878
  %v1914 = vpop.f32.mrb[0].mxu0
  %v1915 = vadd.f32 0.0, %v1914
  %v1916 = vpop.f32.mrb[0].mxu0
  %v1917 = vpop.f32.mrb[0].mxu0
  %v1918 = vpop.f32.mrb[0].mxu0
  %1919 = vdwg.mxu0
  %v1922 = vunpack.c.l.b16 %v1606
  %v1923 = vunpack.c.l.b16 %v1607
  %v1924 = vpack.c.b16 %v1923, %v1922
  %v1927 = vsel %vm33, %v1584, 0
  %1929 = vmatprep.subr.bf16.mxu0 0
  %1930 = vmatpush1.bf16.msra.mxu0 %v1924
  %1931 = vmatprep.subr.bf16.mxu0 0
  %1932 = vmatpush1.bf16.msra.mxu0 0
  %1933 = vmatprep.subr.bf16.mxu0 0
  %1934 = vmatpush1.bf16.msra.mxu0 0
  %1935 = vmatprep.subr.bf16.mxu0 0
  %1936 = vmatpush1.bf16.msra.mxu0 0
  %1937 = vmatprep.subr.bf16.mxu0 0
  %1938 = vmatpush1.bf16.msra.mxu0 0
  %1939 = vmatprep.subr.bf16.mxu0 0
  %1940 = vmatpush1.bf16.msra.mxu0 0
  %1941 = vmatprep.subr.bf16.mxu0 0
  %1942 = vmatpush1.bf16.msra.mxu0 0
  %1943 = vmatprep.subr.bf16.mxu0 0
  %1944 = vmatpush1.bf16.msra.mxu0 0
  %1945 = vmatprep.subr.bf16.mxu0 0
  %1946 = vmatpush1.bf16.msra.mxu0 0
  %1947 = vmatprep.subr.bf16.mxu0 0
  %1948 = vmatpush1.bf16.msra.mxu0 0
  %1949 = vmatprep.subr.bf16.mxu0 0
  %1950 = vmatpush1.bf16.msra.mxu0 0
  %1951 = vmatprep.subr.bf16.mxu0 0
  %1952 = vmatpush1.bf16.msra.mxu0 0
  %1953 = vmatprep.subr.bf16.mxu0 0
  %1954 = vmatpush1.bf16.msra.mxu0 0
  %1955 = vmatprep.subr.bf16.mxu0 0
  %1956 = vmatpush1.bf16.msra.mxu0 0
  %1957 = vmatprep.subr.bf16.mxu0 0
  %1958 = vmatpush1.bf16.msra.mxu0 0
  %1959 = vmatprep.subr.bf16.mxu0 0
  %1960 = vmatpush1.bf16.msra.mxu0 0
  %1961 = vmatprep.mubr.bf16.mxu0 0
  %1962 = vmatmul.mubr.bf16.gmra.mrb[0].mxu0 %v1927
  %v1963 = vpop.f32.mrb[0].mxu0
  %v1964 = vadd.f32 0.0, %v1963
  %v1965 = vpop.f32.mrb[0].mxu0
  %v1966 = vpop.f32.mrb[0].mxu0
  %v1967 = vpop.f32.mrb[0].mxu0
  %1968 = vdwg.mxu0
  %v1971 = vunpack.c.l.b16 %v1608
  %v1972 = vunpack.c.l.b16 %v1609
  %v1973 = vpack.c.b16 %v1972, %v1971
  %v1976 = vsel %vm33, %v1585, 0
  %1978 = vmatprep.subr.bf16.mxu0 0
  %1979 = vmatpush1.bf16.msra.mxu0 %v1973
  %1980 = vmatprep.subr.bf16.mxu0 0
  %1981 = vmatpush1.bf16.msra.mxu0 0
  %1982 = vmatprep.subr.bf16.mxu0 0
  %1983 = vmatpush1.bf16.msra.mxu0 0
  %1984 = vmatprep.subr.bf16.mxu0 0
  %1985 = vmatpush1.bf16.msra.mxu0 0
  %1986 = vmatprep.subr.bf16.mxu0 0
  %1987 = vmatpush1.bf16.msra.mxu0 0
  %1988 = vmatprep.subr.bf16.mxu0 0
  %1989 = vmatpush1.bf16.msra.mxu0 0
  %1990 = vmatprep.subr.bf16.mxu0 0
  %1991 = vmatpush1.bf16.msra.mxu0 0
  %1992 = vmatprep.subr.bf16.mxu0 0
  %1993 = vmatpush1.bf16.msra.mxu0 0
  %1994 = vmatprep.subr.bf16.mxu0 0
  %1995 = vmatpush1.bf16.msra.mxu0 0
  %1996 = vmatprep.subr.bf16.mxu0 0
  %1997 = vmatpush1.bf16.msra.mxu0 0
  %1998 = vmatprep.subr.bf16.mxu0 0
  %1999 = vmatpush1.bf16.msra.mxu0 0
  %2000 = vmatprep.subr.bf16.mxu0 0
  %2001 = vmatpush1.bf16.msra.mxu0 0
  %2002 = vmatprep.subr.bf16.mxu0 0
  %2003 = vmatpush1.bf16.msra.mxu0 0
  %2004 = vmatprep.subr.bf16.mxu0 0
  %2005 = vmatpush1.bf16.msra.mxu0 0
  %2006 = vmatprep.subr.bf16.mxu0 0
  %2007 = vmatpush1.bf16.msra.mxu0 0
  %2008 = vmatprep.subr.bf16.mxu0 0
  %2009 = vmatpush1.bf16.msra.mxu0 0
  %2010 = vmatprep.mubr.bf16.mxu0 0
  %2011 = vmatmul.mubr.bf16.gmra.mrb[0].mxu0 %v1976
  %v2012 = vpop.f32.mrb[0].mxu0
  %v2013 = vadd.f32 0.0, %v2012
  %v2014 = vpop.f32.mrb[0].mxu0
  %v2015 = vpop.f32.mrb[0].mxu0
  %v2016 = vpop.f32.mrb[0].mxu0
  %2017 = vdwg.mxu0
  %v2020 = vunpack.c.l.b16 %v1610
  %v2021 = vunpack.c.l.b16 %v1611
  %v2022 = vpack.c.b16 %v2021, %v2020
  %v2025 = vsel %vm33, %v1586, 0
  %2027 = vmatprep.subr.bf16.mxu0 0
  %2028 = vmatpush1.bf16.msra.mxu0 %v2022
  %2029 = vmatprep.subr.bf16.mxu0 0
  %2030 = vmatpush1.bf16.msra.mxu0 0
  %2031 = vmatprep.subr.bf16.mxu0 0
  %2032 = vmatpush1.bf16.msra.mxu0 0
  %2033 = vmatprep.subr.bf16.mxu0 0
  %2034 = vmatpush1.bf16.msra.mxu0 0
  %2035 = vmatprep.subr.bf16.mxu0 0
  %2036 = vmatpush1.bf16.msra.mxu0 0
  %2037 = vmatprep.subr.bf16.mxu0 0
  %2038 = vmatpush1.bf16.msra.mxu0 0
  %2039 = vmatprep.subr.bf16.mxu0 0
  %2040 = vmatpush1.bf16.msra.mxu0 0
  %2041 = vmatprep.subr.bf16.mxu0 0
  %2042 = vmatpush1.bf16.msra.mxu0 0
  %2043 = vmatprep.subr.bf16.mxu0 0
  %2044 = vmatpush1.bf16.msra.mxu0 0
  %2045 = vmatprep.subr.bf16.mxu0 0
  %2046 = vmatpush1.bf16.msra.mxu0 0
  %2047 = vmatprep.subr.bf16.mxu0 0
  %2048 = vmatpush1.bf16.msra.mxu0 0
  %2049 = vmatprep.subr.bf16.mxu0 0
  %2050 = vmatpush1.bf16.msra.mxu0 0
  %2051 = vmatprep.subr.bf16.mxu0 0
  %2052 = vmatpush1.bf16.msra.mxu0 0
  %2053 = vmatprep.subr.bf16.mxu0 0
  %2054 = vmatpush1.bf16.msra.mxu0 0
  %2055 = vmatprep.subr.bf16.mxu0 0
  %2056 = vmatpush1.bf16.msra.mxu0 0
  %2057 = vmatprep.subr.bf16.mxu0 0
  %2058 = vmatpush1.bf16.msra.mxu0 0
  %2059 = vmatprep.mubr.bf16.mxu0 0
  %2060 = vmatmul.mubr.bf16.gmra.mrb[0].mxu0 %v2025
  %v2061 = vpop.f32.mrb[0].mxu0
  %v2062 = vadd.f32 0.0, %v2061
  %v2063 = vpop.f32.mrb[0].mxu0
  %v2064 = vpop.f32.mrb[0].mxu0
  %v2065 = vpop.f32.mrb[0].mxu0
  %2066 = vdwg.mxu0
  %v2069 = vunpack.c.l.b16 %v1612
  %v2070 = vunpack.c.l.b16 %v1613
  %v2071 = vpack.c.b16 %v2070, %v2069
  %v2074 = vsel %vm33, %v1587, 0
  %2076 = vmatprep.subr.bf16.mxu0 0
  %2077 = vmatpush1.bf16.msra.mxu0 %v2071
  %2078 = vmatprep.subr.bf16.mxu0 0
  %2079 = vmatpush1.bf16.msra.mxu0 0
  %2080 = vmatprep.subr.bf16.mxu0 0
  %2081 = vmatpush1.bf16.msra.mxu0 0
  %2082 = vmatprep.subr.bf16.mxu0 0
  %2083 = vmatpush1.bf16.msra.mxu0 0
  %2084 = vmatprep.subr.bf16.mxu0 0
  %2085 = vmatpush1.bf16.msra.mxu0 0
  %2086 = vmatprep.subr.bf16.mxu0 0
  %2087 = vmatpush1.bf16.msra.mxu0 0
  %2088 = vmatprep.subr.bf16.mxu0 0
  %2089 = vmatpush1.bf16.msra.mxu0 0
  %2090 = vmatprep.subr.bf16.mxu0 0
  %2091 = vmatpush1.bf16.msra.mxu0 0
  %2092 = vmatprep.subr.bf16.mxu0 0
  %2093 = vmatpush1.bf16.msra.mxu0 0
  %2094 = vmatprep.subr.bf16.mxu0 0
  %2095 = vmatpush1.bf16.msra.mxu0 0
  %2096 = vmatprep.subr.bf16.mxu0 0
  %2097 = vmatpush1.bf16.msra.mxu0 0
  %2098 = vmatprep.subr.bf16.mxu0 0
  %2099 = vmatpush1.bf16.msra.mxu0 0
  %2100 = vmatprep.subr.bf16.mxu0 0
  %2101 = vmatpush1.bf16.msra.mxu0 0
  %2102 = vmatprep.subr.bf16.mxu0 0
  %2103 = vmatpush1.bf16.msra.mxu0 0
  %2104 = vmatprep.subr.bf16.mxu0 0
  %2105 = vmatpush1.bf16.msra.mxu0 0
  %2106 = vmatprep.subr.bf16.mxu0 0
  %2107 = vmatpush1.bf16.msra.mxu0 0
  %2108 = vmatprep.mubr.bf16.mxu0 0
  %2109 = vmatmul.mubr.bf16.gmra.mrb[0].mxu0 %v2074
  %v2110 = vpop.f32.mrb[0].mxu0
  %v2111 = vadd.f32 0.0, %v2110
  %v2112 = vpop.f32.mrb[0].mxu0
  %v2113 = vpop.f32.mrb[0].mxu0
  %v2114 = vpop.f32.mrb[0].mxu0
  %2115 = vdwg.mxu0
  %v2118 = vunpack.c.l.b16 %v1614
  %v2119 = vunpack.c.l.b16 %v1615
  %v2120 = vpack.c.b16 %v2119, %v2118
  %v2123 = vsel %vm33, %v1588, 0
  %2125 = vmatprep.subr.bf16.mxu0 0
  %2126 = vmatpush1.bf16.msra.mxu0 %v2120
  %2127 = vmatprep.subr.bf16.mxu0 0
  %2128 = vmatpush1.bf16.msra.mxu0 0
  %2129 = vmatprep.subr.bf16.mxu0 0
  %2130 = vmatpush1.bf16.msra.mxu0 0
  %2131 = vmatprep.subr.bf16.mxu0 0
  %2132 = vmatpush1.bf16.msra.mxu0 0
  %2133 = vmatprep.subr.bf16.mxu0 0
  %2134 = vmatpush1.bf16.msra.mxu0 0
  %2135 = vmatprep.subr.bf16.mxu0 0
  %2136 = vmatpush1.bf16.msra.mxu0 0
  %2137 = vmatprep.subr.bf16.mxu0 0
  %2138 = vmatpush1.bf16.msra.mxu0 0
  %2139 = vmatprep.subr.bf16.mxu0 0
  %2140 = vmatpush1.bf16.msra.mxu0 0
  %2141 = vmatprep.subr.bf16.mxu0 0
  %2142 = vmatpush1.bf16.msra.mxu0 0
  %2143 = vmatprep.subr.bf16.mxu0 0
  %2144 = vmatpush1.bf16.msra.mxu0 0
  %2145 = vmatprep.subr.bf16.mxu0 0
  %2146 = vmatpush1.bf16.msra.mxu0 0
  %2147 = vmatprep.subr.bf16.mxu0 0
  %2148 = vmatpush1.bf16.msra.mxu0 0
  %2149 = vmatprep.subr.bf16.mxu0 0
  %2150 = vmatpush1.bf16.msra.mxu0 0
  %2151 = vmatprep.subr.bf16.mxu0 0
  %2152 = vmatpush1.bf16.msra.mxu0 0
  %2153 = vmatprep.subr.bf16.mxu0 0
  %2154 = vmatpush1.bf16.msra.mxu0 0
  %2155 = vmatprep.subr.bf16.mxu0 0
  %2156 = vmatpush1.bf16.msra.mxu0 0
  %2157 = vmatprep.mubr.bf16.mxu0 0
  %2158 = vmatmul.mubr.bf16.gmra.mrb[0].mxu0 %v2123
  %v2159 = vpop.f32.mrb[0].mxu0
  %v2160 = vadd.f32 0.0, %v2159
  %v2161 = vpop.f32.mrb[0].mxu0
  %v2162 = vpop.f32.mrb[0].mxu0
  %v2163 = vpop.f32.mrb[0].mxu0
  %2164 = vdwg.mxu0
  %v2167 = vunpack.c.l.b16 %v1616
  %v2168 = vunpack.c.l.b16 %v1617
  %v2169 = vpack.c.b16 %v2168, %v2167
  %v2172 = vsel %vm33, %v1589, 0
  %2174 = vmatprep.subr.bf16.mxu0 0
  %2175 = vmatpush1.bf16.msra.mxu0 %v2169
  %2176 = vmatprep.subr.bf16.mxu0 0
  %2177 = vmatpush1.bf16.msra.mxu0 0
  %2178 = vmatprep.subr.bf16.mxu0 0
  %2179 = vmatpush1.bf16.msra.mxu0 0
  %2180 = vmatprep.subr.bf16.mxu0 0
  %2181 = vmatpush1.bf16.msra.mxu0 0
  %2182 = vmatprep.subr.bf16.mxu0 0
  %2183 = vmatpush1.bf16.msra.mxu0 0
  %2184 = vmatprep.subr.bf16.mxu0 0
  %2185 = vmatpush1.bf16.msra.mxu0 0
  %2186 = vmatprep.subr.bf16.mxu0 0
  %2187 = vmatpush1.bf16.msra.mxu0 0
  %2188 = vmatprep.subr.bf16.mxu0 0
  %2189 = vmatpush1.bf16.msra.mxu0 0
  %2190 = vmatprep.subr.bf16.mxu0 0
  %2191 = vmatpush1.bf16.msra.mxu0 0
  %2192 = vmatprep.subr.bf16.mxu0 0
  %2193 = vmatpush1.bf16.msra.mxu0 0
  %2194 = vmatprep.subr.bf16.mxu0 0
  %2195 = vmatpush1.bf16.msra.mxu0 0
  %2196 = vmatprep.subr.bf16.mxu0 0
  %2197 = vmatpush1.bf16.msra.mxu0 0
  %2198 = vmatprep.subr.bf16.mxu0 0
  %2199 = vmatpush1.bf16.msra.mxu0 0
  %2200 = vmatprep.subr.bf16.mxu0 0
  %2201 = vmatpush1.bf16.msra.mxu0 0
  %2202 = vmatprep.subr.bf16.mxu0 0
  %2203 = vmatpush1.bf16.msra.mxu0 0
  %2204 = vmatprep.subr.bf16.mxu0 0
  %2205 = vmatpush1.bf16.msra.mxu0 0
  %2206 = vmatprep.mubr.bf16.mxu0 0
  %2207 = vmatmul.mubr.bf16.gmra.mrb[0].mxu0 %v2172
  %v2208 = vpop.f32.mrb[0].mxu0
  %v2209 = vadd.f32 0.0, %v2208
  %v2210 = vpop.f32.mrb[0].mxu0
  %v2211 = vpop.f32.mrb[0].mxu0
  %v2212 = vpop.f32.mrb[0].mxu0
  %2213 = vdwg.mxu0
  %v2216 = vunpack.c.l.b16 %v1618
  %v2217 = vunpack.c.l.b16 %v1619
  %v2218 = vpack.c.b16 %v2217, %v2216
  %v2221 = vsel %vm33, %v1590, 0
  %2223 = vmatprep.subr.bf16.mxu0 0
  %2224 = vmatpush1.bf16.msra.mxu0 %v2218
  %2225 = vmatprep.subr.bf16.mxu0 0
  %2226 = vmatpush1.bf16.msra.mxu0 0
  %2227 = vmatprep.subr.bf16.mxu0 0
  %2228 = vmatpush1.bf16.msra.mxu0 0
  %2229 = vmatprep.subr.bf16.mxu0 0
  %2230 = vmatpush1.bf16.msra.mxu0 0
  %2231 = vmatprep.subr.bf16.mxu0 0
  %2232 = vmatpush1.bf16.msra.mxu0 0
  %2233 = vmatprep.subr.bf16.mxu0 0
  %2234 = vmatpush1.bf16.msra.mxu0 0
  %2235 = vmatprep.subr.bf16.mxu0 0
  %2236 = vmatpush1.bf16.msra.mxu0 0
  %2237 = vmatprep.subr.bf16.mxu0 0
  %2238 = vmatpush1.bf16.msra.mxu0 0
  %2239 = vmatprep.subr.bf16.mxu0 0
  %2240 = vmatpush1.bf16.msra.mxu0 0
  %2241 = vmatprep.subr.bf16.mxu0 0
  %2242 = vmatpush1.bf16.msra.mxu0 0
  %2243 = vmatprep.subr.bf16.mxu0 0
  %2244 = vmatpush1.bf16.msra.mxu0 0
  %2245 = vmatprep.subr.bf16.mxu0 0
  %2246 = vmatpush1.bf16.msra.mxu0 0
  %2247 = vmatprep.subr.bf16.mxu0 0
  %2248 = vmatpush1.bf16.msra.mxu0 0
  %2249 = vmatprep.subr.bf16.mxu0 0
  %2250 = vmatpush1.bf16.msra.mxu0 0
  %2251 = vmatprep.subr.bf16.mxu0 0
  %2252 = vmatpush1.bf16.msra.mxu0 0
  %2253 = vmatprep.subr.bf16.mxu0 0
  %2254 = vmatpush1.bf16.msra.mxu0 0
  %2255 = vmatprep.mubr.bf16.mxu0 0
  %2256 = vmatmul.mubr.bf16.gmra.mrb[0].mxu0 %v2221
  %v2257 = vpop.f32.mrb[0].mxu0
  %v2258 = vadd.f32 0.0, %v2257
  %v2259 = vpop.f32.mrb[0].mxu0
  %v2260 = vpop.f32.mrb[0].mxu0
  %v2261 = vpop.f32.mrb[0].mxu0
  %2262 = vdwg.mxu0
  %v2265 = vunpack.c.l.b16 %v1620
  %v2266 = vunpack.c.l.b16 %v1621
  %v2267 = vpack.c.b16 %v2266, %v2265
  %v2270 = vsel %vm33, %v1591, 0
  %2272 = vmatprep.subr.bf16.mxu0 0
  %2273 = vmatpush1.bf16.msra.mxu0 %v2267
  %2274 = vmatprep.subr.bf16.mxu0 0
  %2275 = vmatpush1.bf16.msra.mxu0 0
  %2276 = vmatprep.subr.bf16.mxu0 0
  %2277 = vmatpush1.bf16.msra.mxu0 0
  %2278 = vmatprep.subr.bf16.mxu0 0
  %2279 = vmatpush1.bf16.msra.mxu0 0
  %2280 = vmatprep.subr.bf16.mxu0 0
  %2281 = vmatpush1.bf16.msra.mxu0 0
  %2282 = vmatprep.subr.bf16.mxu0 0
  %2283 = vmatpush1.bf16.msra.mxu0 0
  %2284 = vmatprep.subr.bf16.mxu0 0
  %2285 = vmatpush1.bf16.msra.mxu0 0
  %2286 = vmatprep.subr.bf16.mxu0 0
  %2287 = vmatpush1.bf16.msra.mxu0 0
  %2288 = vmatprep.subr.bf16.mxu0 0
  %2289 = vmatpush1.bf16.msra.mxu0 0
  %2290 = vmatprep.subr.bf16.mxu0 0
  %2291 = vmatpush1.bf16.msra.mxu0 0
  %2292 = vmatprep.subr.bf16.mxu0 0
  %2293 = vmatpush1.bf16.msra.mxu0 0
  %2294 = vmatprep.subr.bf16.mxu0 0
  %2295 = vmatpush1.bf16.msra.mxu0 0
  %2296 = vmatprep.subr.bf16.mxu0 0
  %2297 = vmatpush1.bf16.msra.mxu0 0
  %2298 = vmatprep.subr.bf16.mxu0 0
  %2299 = vmatpush1.bf16.msra.mxu0 0
  %2300 = vmatprep.subr.bf16.mxu0 0
  %2301 = vmatpush1.bf16.msra.mxu0 0
  %2302 = vmatprep.subr.bf16.mxu0 0
  %2303 = vmatpush1.bf16.msra.mxu0 0
  %2304 = vmatprep.mubr.bf16.mxu0 0
  %2305 = vmatmul.mubr.bf16.gmra.mrb[0].mxu0 %v2270
  %v2306 = vpop.f32.mrb[0].mxu0
  %v2307 = vadd.f32 0.0, %v2306
  %v2308 = vpop.f32.mrb[0].mxu0
  %v2309 = vpop.f32.mrb[0].mxu0
  %v2310 = vpop.f32.mrb[0].mxu0
  %2311 = vdwg.mxu0
  %v2314 = vunpack.c.l.b16 %v1622
  %v2315 = vunpack.c.l.b16 %v1623
  %v2316 = vpack.c.b16 %v2315, %v2314
  %v2319 = vsel %vm33, %v1592, 0
  %2321 = vmatprep.subr.bf16.mxu0 0
  %2322 = vmatpush1.bf16.msra.mxu0 %v2316
  %2323 = vmatprep.subr.bf16.mxu0 0
  %2324 = vmatpush1.bf16.msra.mxu0 0
  %2325 = vmatprep.subr.bf16.mxu0 0
  %2326 = vmatpush1.bf16.msra.mxu0 0
  %2327 = vmatprep.subr.bf16.mxu0 0
  %2328 = vmatpush1.bf16.msra.mxu0 0
  %2329 = vmatprep.subr.bf16.mxu0 0
  %2330 = vmatpush1.bf16.msra.mxu0 0
  %2331 = vmatprep.subr.bf16.mxu0 0
  %2332 = vmatpush1.bf16.msra.mxu0 0
  %2333 = vmatprep.subr.bf16.mxu0 0
  %2334 = vmatpush1.bf16.msra.mxu0 0
  %2335 = vmatprep.subr.bf16.mxu0 0
  %2336 = vmatpush1.bf16.msra.mxu0 0
  %2337 = vmatprep.subr.bf16.mxu0 0
  %2338 = vmatpush1.bf16.msra.mxu0 0
  %2339 = vmatprep.subr.bf16.mxu0 0
  %2340 = vmatpush1.bf16.msra.mxu0 0
  %2341 = vmatprep.subr.bf16.mxu0 0
  %2342 = vmatpush1.bf16.msra.mxu0 0
  %2343 = vmatprep.subr.bf16.mxu0 0
  %2344 = vmatpush1.bf16.msra.mxu0 0
  %2345 = vmatprep.subr.bf16.mxu0 0
  %2346 = vmatpush1.bf16.msra.mxu0 0
  %2347 = vmatprep.subr.bf16.mxu0 0
  %2348 = vmatpush1.bf16.msra.mxu0 0
  %2349 = vmatprep.subr.bf16.mxu0 0
  %2350 = vmatpush1.bf16.msra.mxu0 0
  %2351 = vmatprep.subr.bf16.mxu0 0
  %2352 = vmatpush1.bf16.msra.mxu0 0
  %2353 = vmatprep.mubr.bf16.mxu0 0
  %2354 = vmatmul.mubr.bf16.gmra.mrb[0].mxu0 %v2319
  %v2355 = vpop.f32.mrb[0].mxu0
  %v2356 = vadd.f32 0.0, %v2355
  %v2357 = vpop.f32.mrb[0].mxu0
  %v2358 = vpop.f32.mrb[0].mxu0
  %v2359 = vpop.f32.mrb[0].mxu0
  %2360 = vdwg.mxu0
  %v2363 = vunpack.c.l.b16 %v1624
  %v2364 = vunpack.c.l.b16 %v1625
  %v2365 = vpack.c.b16 %v2364, %v2363
  %v2368 = vsel %vm33, %v1593, 0
  %2370 = vmatprep.subr.bf16.mxu0 0
  %2371 = vmatpush1.bf16.msra.mxu0 %v2365
  %2372 = vmatprep.subr.bf16.mxu0 0
  %2373 = vmatpush1.bf16.msra.mxu0 0
  %2374 = vmatprep.subr.bf16.mxu0 0
  %2375 = vmatpush1.bf16.msra.mxu0 0
  %2376 = vmatprep.subr.bf16.mxu0 0
  %2377 = vmatpush1.bf16.msra.mxu0 0
  %2378 = vmatprep.subr.bf16.mxu0 0
  %2379 = vmatpush1.bf16.msra.mxu0 0
  %2380 = vmatprep.subr.bf16.mxu0 0
  %2381 = vmatpush1.bf16.msra.mxu0 0
  %2382 = vmatprep.subr.bf16.mxu0 0
  %2383 = vmatpush1.bf16.msra.mxu0 0
  %2384 = vmatprep.subr.bf16.mxu0 0
  %2385 = vmatpush1.bf16.msra.mxu0 0
  %2386 = vmatprep.subr.bf16.mxu0 0
  %2387 = vmatpush1.bf16.msra.mxu0 0
  %2388 = vmatprep.subr.bf16.mxu0 0
  %2389 = vmatpush1.bf16.msra.mxu0 0
  %2390 = vmatprep.subr.bf16.mxu0 0
  %2391 = vmatpush1.bf16.msra.mxu0 0
  %2392 = vmatprep.subr.bf16.mxu0 0
  %2393 = vmatpush1.bf16.msra.mxu0 0
  %2394 = vmatprep.subr.bf16.mxu0 0
  %2395 = vmatpush1.bf16.msra.mxu0 0
  %2396 = vmatprep.subr.bf16.mxu0 0
  %2397 = vmatpush1.bf16.msra.mxu0 0
  %2398 = vmatprep.subr.bf16.mxu0 0
  %2399 = vmatpush1.bf16.msra.mxu0 0
  %2400 = vmatprep.subr.bf16.mxu0 0
  %2401 = vmatpush1.bf16.msra.mxu0 0
  %2402 = vmatprep.mubr.bf16.mxu0 0
  %2403 = vmatmul.mubr.bf16.gmra.mrb[0].mxu0 %v2368
  %v2404 = vpop.f32.mrb[0].mxu0
  %v2405 = vadd.f32 0.0, %v2404
  %v2406 = vpop.f32.mrb[0].mxu0
  %v2407 = vpop.f32.mrb[0].mxu0
  %v2408 = vpop.f32.mrb[0].mxu0
  %2409 = vdwg.mxu0
  %v2426 = vrot.slane %v1719, 7
  %vm2427 = vcmask 1041409
  %v2428 = vsel %vm2427, %v2426, %v1670
  %v2429 = vrot.slane %v1768, 6
  %vm2430 = vcmask 1042434
  %v2431 = vsel %vm2430, %v2429, %v2428
  %v2432 = vrot.slane %v1817, 5
  %vm2433 = vcmask 1043459
  %v2434 = vsel %vm2433, %v2432, %v2431
  %v2435 = vrot.slane %v1866, 4
  %vm2436 = vcmask 1044484
  %v2437 = vsel %vm2436, %v2435, %v2434
  %v2438 = vrot.slane %v1915, 3
  %vm2439 = vcmask 1045509
  %v2440 = vsel %vm2439, %v2438, %v2437
  %v2441 = vrot.slane %v1964, 2
  %vm2442 = vcmask 1046534
  %v2443 = vsel %vm2442, %v2441, %v2440
  %v2444 = vrot.slane %v2013, 1
  %vm2445 = vcmask 1047559
  %v2446 = vsel %vm2445, %v2444, %v2443
  %v2447 = vrot.slane %v2111, 7
  %v2448 = vsel %vm2427, %v2447, %v2062
  %v2449 = vrot.slane %v2160, 6
  %v2450 = vsel %vm2430, %v2449, %v2448
  %v2451 = vrot.slane %v2209, 5
  %v2452 = vsel %vm2433, %v2451, %v2450
  %v2453 = vrot.slane %v2258, 4
  %v2454 = vsel %vm2436, %v2453, %v2452
  %v2455 = vrot.slane %v2307, 3
  %v2456 = vsel %vm2439, %v2455, %v2454
  %v2457 = vrot.slane %v2356, 2
  %v2458 = vsel %vm2442, %v2457, %v2456
  %v2459 = vrot.slane %v2405, 1
  %v2460 = vsel %vm2445, %v2459, %v2458
  %2463 = vxpose.xlu0.b32.start [1/16] %v2446, 128
  %2464 = vxpose.xlu0.b32.cont [2/16] %v2460, 128
  %2465 = vxpose.xlu0.b32.cont [3/16] 0.0, 128
  %2466 = vxpose.xlu0.b32.cont [4/16] 0.0, 128
  %2467 = vxpose.xlu0.b32.cont [5/16] 0.0, 128
  %2468 = vxpose.xlu0.b32.cont [6/16] 0.0, 128
  %2469 = vxpose.xlu0.b32.cont [7/16] 0.0, 128
  %2470 = vxpose.xlu0.b32.cont [8/16] 0.0, 128
  %2471 = vxpose.xlu0.b32.cont [9/16] 0.0, 128
  %2472 = vxpose.xlu0.b32.cont [10/16] 0.0, 128
  %2473 = vxpose.xlu0.b32.cont [11/16] 0.0, 128
  %2474 = vxpose.xlu0.b32.cont [12/16] 0.0, 128
  %2475 = vxpose.xlu0.b32.cont [13/16] 0.0, 128
  %2476 = vxpose.xlu0.b32.cont [14/16] 0.0, 128
  %2477 = vxpose.xlu0.b32.cont [15/16] 0.0, 128
  %2478 = vxpose.xlu0.b32.end [16/16] 0.0, 128
  %v2479 = vpop.trf.xlu0
  %v2480 = vpop.trf.xlu0
  %v2481 = vpop.trf.xlu0
  %v2482 = vpop.trf.xlu0
  %v2483 = vpop.trf.xlu0
  %v2484 = vpop.trf.xlu0
  %v2485 = vpop.trf.xlu0
  %v2486 = vpop.trf.xlu0
  %v2487 = vpop.trf.xlu0
  %v2488 = vpop.trf.xlu0
  %v2489 = vpop.trf.xlu0
  %v2490 = vpop.trf.xlu0
  %v2491 = vpop.trf.xlu0
  %v2492 = vpop.trf.xlu0
  %v2493 = vpop.trf.xlu0
  %v2494 = vpop.trf.xlu0
  %v2495 = vpack.c.bf16 %v2480, %v2479
  %v2496 = vpack.c.bf16 %v2481, %v2481
  %v2497 = vld [vmem:[%s2] sm:$0xf]
  %v2498 = vld [vmem:[%s2 + $0x4] sm:$0xf]
  %v2501 = vunpack.c.l.b16 %v2497
  %v2502 = vunpack.c.l.b16 %v2498
  %v2503 = vpack.c.b16 %v2502, %v2501
  %v2506 = vsel %vm33, %v2495, 0
  %v2509 = vsel %vm33, %v2496, 0
  %2511 = vmatprep.subr.bf16.mxu0 0
  %2512 = vmatpush1.bf16.msra.mxu0 %v2503
  %2513 = vmatprep.subr.bf16.mxu0 0
  %2514 = vmatpush1.bf16.msra.mxu0 0
  %2515 = vmatprep.subr.bf16.mxu0 0
  %2516 = vmatpush1.bf16.msra.mxu0 0
  %2517 = vmatprep.subr.bf16.mxu0 0
  %2518 = vmatpush1.bf16.msra.mxu0 0
  %2519 = vmatprep.subr.bf16.mxu0 0
  %2520 = vmatpush1.bf16.msra.mxu0 0
  %2521 = vmatprep.subr.bf16.mxu0 0
  %2522 = vmatpush1.bf16.msra.mxu0 0
  %2523 = vmatprep.subr.bf16.mxu0 0
  %2524 = vmatpush1.bf16.msra.mxu0 0
  %2525 = vmatprep.subr.bf16.mxu0 0
  %2526 = vmatpush1.bf16.msra.mxu0 0
  %2527 = vmatprep.subr.bf16.mxu0 0
  %2528 = vmatpush1.bf16.msra.mxu0 0
  %2529 = vmatprep.subr.bf16.mxu0 0
  %2530 = vmatpush1.bf16.msra.mxu0 0
  %2531 = vmatprep.subr.bf16.mxu0 0
  %2532 = vmatpush1.bf16.msra.mxu0 0
  %2533 = vmatprep.subr.bf16.mxu0 0
  %2534 = vmatpush1.bf16.msra.mxu0 0
  %2535 = vmatprep.subr.bf16.mxu0 0
  %2536 = vmatpush1.bf16.msra.mxu0 0
  %2537 = vmatprep.subr.bf16.mxu0 0
  %2538 = vmatpush1.bf16.msra.mxu0 0
  %2539 = vmatprep.subr.bf16.mxu0 0
  %2540 = vmatpush1.bf16.msra.mxu0 0
  %2541 = vmatprep.subr.bf16.mxu0 0
  %2542 = vmatpush1.bf16.msra.mxu0 0
  %2543 = vmatprep.mubr.bf16.mxu0 0
  %2544 = vmatmul.mubr.bf16.gmra.mrb[0].mxu0 %v2506
  %v2545 = vpop.f32.mrb[0].mxu0
  %v2546 = vadd.f32 0.0, %v2545
  %v2547 = vpop.f32.mrb[0].mxu0
  %v2548 = vpop.f32.mrb[0].mxu0
  %v2549 = vadd.f32 0.0, %v2548
  %v2550 = vpop.f32.mrb[0].mxu0
  %2551 = vmatprep.mubr.bf16.mxu0 0
  %2552 = vmatmul.mubr.bf16.gmra.mrb[0].mxu0 %v2509
  %v2553 = vpop.f32.mrb[0].mxu0
  %v2554 = vadd.f32 0.0, %v2553
  %v2555 = vpop.f32.mrb[0].mxu0
  %v2556 = vpop.f32.mrb[0].mxu0
  %v2557 = vpop.f32.mrb[0].mxu0
  %2558 = vdwg.mxu0
  %2559 = vst.msk [vmem:[%s4] sm:$0xff] %vm33, %v2546
  %2560 = vst.msk [vmem:[%s4 + $0x8] sm:$0xff] %vm33, %v2549
  %2561 = vst.msk [vmem:[%s4 + $0x10] sm:$0xff] %vm33, %v2554
  %v2562 = vrot.slane %v1670, 1
  %v2563 = vsel %vm2427, %v1719, %v2562
  %v2564 = vrot.slane %v1768, 7
  %v2565 = vsel %vm2430, %v2564, %v2563
  %v2566 = vrot.slane %v1817, 6
  %v2567 = vsel %vm2433, %v2566, %v2565
  %v2568 = vrot.slane %v1866, 5
  %v2569 = vsel %vm2436, %v2568, %v2567
  %v2570 = vrot.slane %v1915, 4
  %v2571 = vsel %vm2439, %v2570, %v2569
  %v2572 = vrot.slane %v1964, 3
  %v2573 = vsel %vm2442, %v2572, %v2571
  %v2574 = vrot.slane %v2013, 2
  %v2575 = vsel %vm2445, %v2574, %v2573
  %v2576 = vrot.slane %v2062, 1
  %v2577 = vsel %vm2427, %v2111, %v2576
  %v2578 = vrot.slane %v2160, 7
  %v2579 = vsel %vm2430, %v2578, %v2577
  %v2580 = vrot.slane %v2209, 6
  %v2581 = vsel %vm2433, %v2580, %v2579
  %v2582 = vrot.slane %v2258, 5
  %v2583 = vsel %vm2436, %v2582, %v2581
  %v2584 = vrot.slane %v2307, 4
  %v2585 = vsel %vm2439, %v2584, %v2583
  %v2586 = vrot.slane %v2356, 3
  %v2587 = vsel %vm2442, %v2586, %v2585
  %v2588 = vrot.slane %v2405, 2
  %v2589 = vsel %vm2445, %v2588, %v2587
  %2592 = vxpose.xlu0.b32.start [1/16] %v2575, 128
  %2593 = vxpose.xlu0.b32.cont [2/16] %v2589, 128
  %2594 = vxpose.xlu0.b32.cont [3/16] 0.0, 128
  %2595 = vxpose.xlu0.b32.cont [4/16] 0.0, 128
  %2596 = vxpose.xlu0.b32.cont [5/16] 0.0, 128
  %2597 = vxpose.xlu0.b32.cont [6/16] 0.0, 128
  %2598 = vxpose.xlu0.b32.cont [7/16] 0.0, 128
  %2599 = vxpose.xlu0.b32.cont [8/16] 0.0, 128
  %2600 = vxpose.xlu0.b32.cont [9/16] 0.0, 128
  %2601 = vxpose.xlu0.b32.cont [10/16] 0.0, 128
  %2602 = vxpose.xlu0.b32.cont [11/16] 0.0, 128
  %2603 = vxpose.xlu0.b32.cont [12/16] 0.0, 128
  %2604 = vxpose.xlu0.b32.cont [13/16] 0.0, 128
  %2605 = vxpose.xlu0.b32.cont [14/16] 0.0, 128
  %2606 = vxpose.xlu0.b32.cont [15/16] 0.0, 128
  %2607 = vxpose.xlu0.b32.end [16/16] 0.0, 128
  %v2608 = vpop.trf.xlu0
  %v2609 = vpop.trf.xlu0
  %v2610 = vpop.trf.xlu0
  %v2611 = vpop.trf.xlu0
  %v2612 = vpop.trf.xlu0
  %v2613 = vpop.trf.xlu0
  %v2614 = vpop.trf.xlu0
  %v2615 = vpop.trf.xlu0
  %v2616 = vpop.trf.xlu0
  %v2617 = vpop.trf.xlu0
  %v2618 = vpop.trf.xlu0
  %v2619 = vpop.trf.xlu0
  %v2620 = vpop.trf.xlu0
  %v2621 = vpop.trf.xlu0
  %v2622 = vpop.trf.xlu0
  %v2623 = vpop.trf.xlu0
  %v2624 = vpack.c.bf16 %v2609, %v2608
  %v2625 = vpack.c.bf16 %v2610, %v2610
  %s2626 = scalar_lea.vmem %s2, 8
  %v2627 = vld [vmem:[%s2626] sm:$0xf]
  %v2628 = vld [vmem:[%s2626 + $0x4] sm:$0xf]
  %v2631 = vunpack.c.l.b16 %v2627
  %v2632 = vunpack.c.l.b16 %v2628
  %v2633 = vpack.c.b16 %v2632, %v2631
  %v2636 = vsel %vm33, %v2624, 0
  %v2639 = vsel %vm33, %v2625, 0
  %2641 = vmatprep.subr.bf16.mxu0 0
  %2642 = vmatpush1.bf16.msra.mxu0 %v2633
  %2643 = vmatprep.subr.bf16.mxu0 0
  %2644 = vmatpush1.bf16.msra.mxu0 0
  %2645 = vmatprep.subr.bf16.mxu0 0
  %2646 = vmatpush1.bf16.msra.mxu0 0
  %2647 = vmatprep.subr.bf16.mxu0 0
  %2648 = vmatpush1.bf16.msra.mxu0 0
  %2649 = vmatprep.subr.bf16.mxu0 0
  %2650 = vmatpush1.bf16.msra.mxu0 0
  %2651 = vmatprep.subr.bf16.mxu0 0
  %2652 = vmatpush1.bf16.msra.mxu0 0
  %2653 = vmatprep.subr.bf16.mxu0 0
  %2654 = vmatpush1.bf16.msra.mxu0 0
  %2655 = vmatprep.subr.bf16.mxu0 0
  %2656 = vmatpush1.bf16.msra.mxu0 0
  %2657 = vmatprep.subr.bf16.mxu0 0
  %2658 = vmatpush1.bf16.msra.mxu0 0
  %2659 = vmatprep.subr.bf16.mxu0 0
  %2660 = vmatpush1.bf16.msra.mxu0 0
  %2661 = vmatprep.subr.bf16.mxu0 0
  %2662 = vmatpush1.bf16.msra.mxu0 0
  %2663 = vmatprep.subr.bf16.mxu0 0
  %2664 = vmatpush1.bf16.msra.mxu0 0
  %2665 = vmatprep.subr.bf16.mxu0 0
  %2666 = vmatpush1.bf16.msra.mxu0 0
  %2667 = vmatprep.subr.bf16.mxu0 0
  %2668 = vmatpush1.bf16.msra.mxu0 0
  %2669 = vmatprep.subr.bf16.mxu0 0
  %2670 = vmatpush1.bf16.msra.mxu0 0
  %2671 = vmatprep.subr.bf16.mxu0 0
  %2672 = vmatpush1.bf16.msra.mxu0 0
  %2673 = vmatprep.mubr.bf16.mxu0 0
  %2674 = vmatmul.mubr.bf16.gmra.mrb[0].mxu0 %v2636
  %v2675 = vpop.f32.mrb[0].mxu0
  %v2676 = vadd.f32 0.0, %v2675
  %v2677 = vpop.f32.mrb[0].mxu0
  %v2678 = vpop.f32.mrb[0].mxu0
  %v2679 = vadd.f32 0.0, %v2678
  %v2680 = vpop.f32.mrb[0].mxu0
  %2681 = vmatprep.mubr.bf16.mxu0 0
  %2682 = vmatmul.mubr.bf16.gmra.mrb[0].mxu0 %v2639
  %v2683 = vpop.f32.mrb[0].mxu0
  %v2684 = vadd.f32 0.0, %v2683
  %v2685 = vpop.f32.mrb[0].mxu0
  %v2686 = vpop.f32.mrb[0].mxu0
  %v2687 = vpop.f32.mrb[0].mxu0
  %2688 = vdwg.mxu0
  %2692 = vrot.lane.b32.xlu0 %v2676, 16
  %v2693 = vpop.permute.xlu0 %2692
  %2694 = vrot.lane.b32.xlu0 %v2679, 16
  %v2695 = vpop.permute.xlu0 %2694
  %2696 = vrot.lane.b32.xlu0 %v2684, 16
  %v2697 = vpop.permute.xlu0 %2696
  %vm2701 = vcmask 261248
  %2702 = vst.msk [vmem:[%s4] sm:$0xff] %vm2701, %v2693
  %2703 = vst.msk [vmem:[%s4 + $0x8] sm:$0xff] %vm2701, %v2695
  %2704 = vst.msk [vmem:[%s4 + $0x10] sm:$0xff] %vm2701, %v2697
  %v2705 = vrot.slane %v1670, 2
  %v2706 = vrot.slane %v1719, 1
  %v2707 = vsel %vm2427, %v2706, %v2705
  %v2708 = vsel %vm2430, %v1768, %v2707
  %v2709 = vrot.slane %v1817, 7
  %v2710 = vsel %vm2433, %v2709, %v2708
  %v2711 = vrot.slane %v1866, 6
  %v2712 = vsel %vm2436, %v2711, %v2710
  %v2713 = vrot.slane %v1915, 5
  %v2714 = vsel %vm2439, %v2713, %v2712
  %v2715 = vrot.slane %v1964, 4
  %v2716 = vsel %vm2442, %v2715, %v2714
  %v2717 = vrot.slane %v2013, 3
  %v2718 = vsel %vm2445, %v2717, %v2716
  %v2719 = vrot.slane %v2062, 2
  %v2720 = vrot.slane %v2111, 1
  %v2721 = vsel %vm2427, %v2720, %v2719
  %v2722 = vsel %vm2430, %v2160, %v2721
  %v2723 = vrot.slane %v2209, 7
  %v2724 = vsel %vm2433, %v2723, %v2722
  %v2725 = vrot.slane %v2258, 6
  %v2726 = vsel %vm2436, %v2725, %v2724
  %v2727 = vrot.slane %v2307, 5
  %v2728 = vsel %vm2439, %v2727, %v2726
  %v2729 = vrot.slane %v2356, 4
  %v2730 = vsel %vm2442, %v2729, %v2728
  %v2731 = vrot.slane %v2405, 3
  %v2732 = vsel %vm2445, %v2731, %v2730
  %2735 = vxpose.xlu0.b32.start [1/16] %v2718, 128
  %2736 = vxpose.xlu0.b32.cont [2/16] %v2732, 128
  %2737 = vxpose.xlu0.b32.cont [3/16] 0.0, 128
  %2738 = vxpose.xlu0.b32.cont [4/16] 0.0, 128
  %2739 = vxpose.xlu0.b32.cont [5/16] 0.0, 128
  %2740 = vxpose.xlu0.b32.cont [6/16] 0.0, 128
  %2741 = vxpose.xlu0.b32.cont [7/16] 0.0, 128
  %2742 = vxpose.xlu0.b32.cont [8/16] 0.0, 128
  %2743 = vxpose.xlu0.b32.cont [9/16] 0.0, 128
  %2744 = vxpose.xlu0.b32.cont [10/16] 0.0, 128
  %2745 = vxpose.xlu0.b32.cont [11/16] 0.0, 128
  %2746 = vxpose.xlu0.b32.cont [12/16] 0.0, 128
  %2747 = vxpose.xlu0.b32.cont [13/16] 0.0, 128
  %2748 = vxpose.xlu0.b32.cont [14/16] 0.0, 128
  %2749 = vxpose.xlu0.b32.cont [15/16] 0.0, 128
  %2750 = vxpose.xlu0.b32.end [16/16] 0.0, 128
  %v2751 = vpop.trf.xlu0
  %v2752 = vpop.trf.xlu0
  %v2753 = vpop.trf.xlu0
  %v2754 = vpop.trf.xlu0
  %v2755 = vpop.trf.xlu0
  %v2756 = vpop.trf.xlu0
  %v2757 = vpop.trf.xlu0
  %v2758 = vpop.trf.xlu0
  %v2759 = vpop.trf.xlu0
  %v2760 = vpop.trf.xlu0
  %v2761 = vpop.trf.xlu0
  %v2762 = vpop.trf.xlu0
  %v2763 = vpop.trf.xlu0
  %v2764 = vpop.trf.xlu0
  %v2765 = vpop.trf.xlu0
  %v2766 = vpop.trf.xlu0
  %v2767 = vpack.c.bf16 %v2752, %v2751
  %v2768 = vpack.c.bf16 %v2753, %v2753
  %s2769 = scalar_lea.vmem %s2, 16
  %v2770 = vld [vmem:[%s2769] sm:$0xf]
  %v2771 = vld [vmem:[%s2769 + $0x4] sm:$0xf]
  %v2774 = vunpack.c.l.b16 %v2770
  %v2775 = vunpack.c.l.b16 %v2771
  %v2776 = vpack.c.b16 %v2775, %v2774
  %v2779 = vsel %vm33, %v2767, 0
  %v2782 = vsel %vm33, %v2768, 0
  %2784 = vmatprep.subr.bf16.mxu0 0
  %2785 = vmatpush1.bf16.msra.mxu0 %v2776
  %2786 = vmatprep.subr.bf16.mxu0 0
  %2787 = vmatpush1.bf16.msra.mxu0 0
  %2788 = vmatprep.subr.bf16.mxu0 0
  %2789 = vmatpush1.bf16.msra.mxu0 0
  %2790 = vmatprep.subr.bf16.mxu0 0
  %2791 = vmatpush1.bf16.msra.mxu0 0
  %2792 = vmatprep.subr.bf16.mxu0 0
  %2793 = vmatpush1.bf16.msra.mxu0 0
  %2794 = vmatprep.subr.bf16.mxu0 0
  %2795 = vmatpush1.bf16.msra.mxu0 0
  %2796 = vmatprep.subr.bf16.mxu0 0
  %2797 = vmatpush1.bf16.msra.mxu0 0
  %2798 = vmatprep.subr.bf16.mxu0 0
  %2799 = vmatpush1.bf16.msra.mxu0 0
  %2800 = vmatprep.subr.bf16.mxu0 0
  %2801 = vmatpush1.bf16.msra.mxu0 0
  %2802 = vmatprep.subr.bf16.mxu0 0
  %2803 = vmatpush1.bf16.msra.mxu0 0
  %2804 = vmatprep.subr.bf16.mxu0 0
  %2805 = vmatpush1.bf16.msra.mxu0 0
  %2806 = vmatprep.subr.bf16.mxu0 0
  %2807 = vmatpush1.bf16.msra.mxu0 0
  %2808 = vmatprep.subr.bf16.mxu0 0
  %2809 = vmatpush1.bf16.msra.mxu0 0
  %2810 = vmatprep.subr.bf16.mxu0 0
  %2811 = vmatpush1.bf16.msra.mxu0 0
  %2812 = vmatprep.subr.bf16.mxu0 0
  %2813 = vmatpush1.bf16.msra.mxu0 0
  %2814 = vmatprep.subr.bf16.mxu0 0
  %2815 = vmatpush1.bf16.msra.mxu0 0
  %2816 = vmatprep.mubr.bf16.mxu0 0
  %2817 = vmatmul.mubr.bf16.gmra.mrb[0].mxu0 %v2779
  %v2818 = vpop.f32.mrb[0].mxu0
  %v2819 = vadd.f32 0.0, %v2818
  %v2820 = vpop.f32.mrb[0].mxu0
  %v2821 = vpop.f32.mrb[0].mxu0
  %v2822 = vadd.f32 0.0, %v2821
  %v2823 = vpop.f32.mrb[0].mxu0
  %2824 = vmatprep.mubr.bf16.mxu0 0
  %2825 = vmatmul.mubr.bf16.gmra.mrb[0].mxu0 %v2782
  %v2826 = vpop.f32.mrb[0].mxu0
  %v2827 = vadd.f32 0.0, %v2826
  %v2828 = vpop.f32.mrb[0].mxu0
  %v2829 = vpop.f32.mrb[0].mxu0
  %v2830 = vpop.f32.mrb[0].mxu0
  %2831 = vdwg.mxu0
  %2835 = vrot.lane.b32.xlu0 %v2819, 32
  %v2836 = vpop.permute.xlu0 %2835
  %2837 = vrot.lane.b32.xlu0 %v2822, 32
  %v2838 = vpop.permute.xlu0 %2837
  %2839 = vrot.lane.b32.xlu0 %v2827, 32
  %v2840 = vpop.permute.xlu0 %2839
  %vm2844 = vcmask 392448
  %2845 = vst.msk [vmem:[%s4] sm:$0xff] %vm2844, %v2836
  %2846 = vst.msk [vmem:[%s4 + $0x8] sm:$0xff] %vm2844, %v2838
  %2847 = vst.msk [vmem:[%s4 + $0x10] sm:$0xff] %vm2844, %v2840
  %v2848 = vrot.slane %v1670, 3
  %v2849 = vrot.slane %v1719, 2
  %v2850 = vsel %vm2427, %v2849, %v2848
  %v2851 = vrot.slane %v1768, 1
  %v2852 = vsel %vm2430, %v2851, %v2850
  %v2853 = vsel %vm2433, %v1817, %v2852
  %v2854 = vrot.slane %v1866, 7
  %v2855 = vsel %vm2436, %v2854, %v2853
  %v2856 = vrot.slane %v1915, 6
  %v2857 = vsel %vm2439, %v2856, %v2855
  %v2858 = vrot.slane %v1964, 5
  %v2859 = vsel %vm2442, %v2858, %v2857
  %v2860 = vrot.slane %v2013, 4
  %v2861 = vsel %vm2445, %v2860, %v2859
  %v2862 = vrot.slane %v2062, 3
  %v2863 = vrot.slane %v2111, 2
  %v2864 = vsel %vm2427, %v2863, %v2862
  %v2865 = vrot.slane %v2160, 1
  %v2866 = vsel %vm2430, %v2865, %v2864
  %v2867 = vsel %vm2433, %v2209, %v2866
  %v2868 = vrot.slane %v2258, 7
  %v2869 = vsel %vm2436, %v2868, %v2867
  %v2870 = vrot.slane %v2307, 6
  %v2871 = vsel %vm2439, %v2870, %v2869
  %v2872 = vrot.slane %v2356, 5
  %v2873 = vsel %vm2442, %v2872, %v2871
  %v2874 = vrot.slane %v2405, 4
  %v2875 = vsel %vm2445, %v2874, %v2873
  %2878 = vxpose.xlu0.b32.start [1/16] %v2861, 128
  %2879 = vxpose.xlu0.b32.cont [2/16] %v2875, 128
  %2880 = vxpose.xlu0.b32.cont [3/16] 0.0, 128
  %2881 = vxpose.xlu0.b32.cont [4/16] 0.0, 128
  %2882 = vxpose.xlu0.b32.cont [5/16] 0.0, 128
  %2883 = vxpose.xlu0.b32.cont [6/16] 0.0, 128
  %2884 = vxpose.xlu0.b32.cont [7/16] 0.0, 128
  %2885 = vxpose.xlu0.b32.cont [8/16] 0.0, 128
  %2886 = vxpose.xlu0.b32.cont [9/16] 0.0, 128
  %2887 = vxpose.xlu0.b32.cont [10/16] 0.0, 128
  %2888 = vxpose.xlu0.b32.cont [11/16] 0.0, 128
  %2889 = vxpose.xlu0.b32.cont [12/16] 0.0, 128
  %2890 = vxpose.xlu0.b32.cont [13/16] 0.0, 128
  %2891 = vxpose.xlu0.b32.cont [14/16] 0.0, 128
  %2892 = vxpose.xlu0.b32.cont [15/16] 0.0, 128
  %2893 = vxpose.xlu0.b32.end [16/16] 0.0, 128
  %v2894 = vpop.trf.xlu0
  %v2895 = vpop.trf.xlu0
  %v2896 = vpop.trf.xlu0
  %v2897 = vpop.trf.xlu0
  %v2898 = vpop.trf.xlu0
  %v2899 = vpop.trf.xlu0
  %v2900 = vpop.trf.xlu0
  %v2901 = vpop.trf.xlu0
  %v2902 = vpop.trf.xlu0
  %v2903 = vpop.trf.xlu0
  %v2904 = vpop.trf.xlu0
  %v2905 = vpop.trf.xlu0
  %v2906 = vpop.trf.xlu0
  %v2907 = vpop.trf.xlu0
  %v2908 = vpop.trf.xlu0
  %v2909 = vpop.trf.xlu0
  %v2910 = vpack.c.bf16 %v2895, %v2894
  %v2911 = vpack.c.bf16 %v2896, %v2896
  %s2912 = scalar_lea.vmem %s2, 24
  %v2913 = vld [vmem:[%s2912] sm:$0xf]
  %v2914 = vld [vmem:[%s2912 + $0x4] sm:$0xf]
  %v2917 = vunpack.c.l.b16 %v2913
  %v2918 = vunpack.c.l.b16 %v2914
  %v2919 = vpack.c.b16 %v2918, %v2917
  %v2922 = vsel %vm33, %v2910, 0
  %v2925 = vsel %vm33, %v2911, 0
  %2927 = vmatprep.subr.bf16.mxu0 0
  %2928 = vmatpush1.bf16.msra.mxu0 %v2919
  %2929 = vmatprep.subr.bf16.mxu0 0
  %2930 = vmatpush1.bf16.msra.mxu0 0
  %2931 = vmatprep.subr.bf16.mxu0 0
  %2932 = vmatpush1.bf16.msra.mxu0 0
  %2933 = vmatprep.subr.bf16.mxu0 0
  %2934 = vmatpush1.bf16.msra.mxu0 0
  %2935 = vmatprep.subr.bf16.mxu0 0
  %2936 = vmatpush1.bf16.msra.mxu0 0
  %2937 = vmatprep.subr.bf16.mxu0 0
  %2938 = vmatpush1.bf16.msra.mxu0 0
  %2939 = vmatprep.subr.bf16.mxu0 0
  %2940 = vmatpush1.bf16.msra.mxu0 0
  %2941 = vmatprep.subr.bf16.mxu0 0
  %2942 = vmatpush1.bf16.msra.mxu0 0
  %2943 = vmatprep.subr.bf16.mxu0 0
  %2944 = vmatpush1.bf16.msra.mxu0 0
  %2945 = vmatprep.subr.bf16.mxu0 0
  %2946 = vmatpush1.bf16.msra.mxu0 0
  %2947 = vmatprep.subr.bf16.mxu0 0
  %2948 = vmatpush1.bf16.msra.mxu0 0
  %2949 = vmatprep.subr.bf16.mxu0 0
  %2950 = vmatpush1.bf16.msra.mxu0 0
  %2951 = vmatprep.subr.bf16.mxu0 0
  %2952 = vmatpush1.bf16.msra.mxu0 0
  %2953 = vmatprep.subr.bf16.mxu0 0
  %2954 = vmatpush1.bf16.msra.mxu0 0
  %2955 = vmatprep.subr.bf16.mxu0 0
  %2956 = vmatpush1.bf16.msra.mxu0 0
  %2957 = vmatprep.subr.bf16.mxu0 0
  %2958 = vmatpush1.bf16.msra.mxu0 0
  %2959 = vmatprep.mubr.bf16.mxu0 0
  %2960 = vmatmul.mubr.bf16.gmra.mrb[0].mxu0 %v2922
  %v2961 = vpop.f32.mrb[0].mxu0
  %v2962 = vadd.f32 0.0, %v2961
  %v2963 = vpop.f32.mrb[0].mxu0
  %v2964 = vpop.f32.mrb[0].mxu0
  %v2965 = vadd.f32 0.0, %v2964
  %v2966 = vpop.f32.mrb[0].mxu0
  %2967 = vmatprep.mubr.bf16.mxu0 0
  %2968 = vmatmul.mubr.bf16.gmra.mrb[0].mxu0 %v2925
  %v2969 = vpop.f32.mrb[0].mxu0
  %v2970 = vadd.f32 0.0, %v2969
  %v2971 = vpop.f32.mrb[0].mxu0
  %v2972 = vpop.f32.mrb[0].mxu0
  %v2973 = vpop.f32.mrb[0].mxu0
  %2974 = vdwg.mxu0
  %2978 = vrot.lane.b32.xlu0 %v2962, 48
  %v2979 = vpop.permute.xlu0 %2978
  %2980 = vrot.lane.b32.xlu0 %v2965, 48
  %v2981 = vpop.permute.xlu0 %2980
  %2982 = vrot.lane.b32.xlu0 %v2970, 48
  %v2983 = vpop.permute.xlu0 %2982
  %vm2987 = vcmask 523648
  %2988 = vst.msk [vmem:[%s4] sm:$0xff] %vm2987, %v2979
  %2989 = vst.msk [vmem:[%s4 + $0x8] sm:$0xff] %vm2987, %v2981
  %2990 = vst.msk [vmem:[%s4 + $0x10] sm:$0xff] %vm2987, %v2983
  %v2991 = vrot.slane %v1670, 4
  %v2992 = vrot.slane %v1719, 3
  %v2993 = vsel %vm2427, %v2992, %v2991
  %v2994 = vrot.slane %v1768, 2
  %v2995 = vsel %vm2430, %v2994, %v2993
  %v2996 = vrot.slane %v1817, 1
  %v2997 = vsel %vm2433, %v2996, %v2995
  %v2998 = vsel %vm2436, %v1866, %v2997
  %v2999 = vrot.slane %v1915, 7
  %v3000 = vsel %vm2439, %v2999, %v2998
  %v3001 = vrot.slane %v1964, 6
  %v3002 = vsel %vm2442, %v3001, %v3000
  %v3003 = vrot.slane %v2013, 5
  %v3004 = vsel %vm2445, %v3003, %v3002
  %v3005 = vrot.slane %v2062, 4
  %v3006 = vrot.slane %v2111, 3
  %v3007 = vsel %vm2427, %v3006, %v3005
  %v3008 = vrot.slane %v2160, 2
  %v3009 = vsel %vm2430, %v3008, %v3007
  %v3010 = vrot.slane %v2209, 1
  %v3011 = vsel %vm2433, %v3010, %v3009
  %v3012 = vsel %vm2436, %v2258, %v3011
  %v3013 = vrot.slane %v2307, 7
  %v3014 = vsel %vm2439, %v3013, %v3012
  %v3015 = vrot.slane %v2356, 6
  %v3016 = vsel %vm2442, %v3015, %v3014
  %v3017 = vrot.slane %v2405, 5
  %v3018 = vsel %vm2445, %v3017, %v3016
  %3021 = vxpose.xlu0.b32.start [1/16] %v3004, 128
  %3022 = vxpose.xlu0.b32.cont [2/16] %v3018, 128
  %3023 = vxpose.xlu0.b32.cont [3/16] 0.0, 128
  %3024 = vxpose.xlu0.b32.cont [4/16] 0.0, 128
  %3025 = vxpose.xlu0.b32.cont [5/16] 0.0, 128
  %3026 = vxpose.xlu0.b32.cont [6/16] 0.0, 128
  %3027 = vxpose.xlu0.b32.cont [7/16] 0.0, 128
  %3028 = vxpose.xlu0.b32.cont [8/16] 0.0, 128
  %3029 = vxpose.xlu0.b32.cont [9/16] 0.0, 128
  %3030 = vxpose.xlu0.b32.cont [10/16] 0.0, 128
  %3031 = vxpose.xlu0.b32.cont [11/16] 0.0, 128
  %3032 = vxpose.xlu0.b32.cont [12/16] 0.0, 128
  %3033 = vxpose.xlu0.b32.cont [13/16] 0.0, 128
  %3034 = vxpose.xlu0.b32.cont [14/16] 0.0, 128
  %3035 = vxpose.xlu0.b32.cont [15/16] 0.0, 128
  %3036 = vxpose.xlu0.b32.end [16/16] 0.0, 128
  %v3037 = vpop.trf.xlu0
  %v3038 = vpop.trf.xlu0
  %v3039 = vpop.trf.xlu0
  %v3040 = vpop.trf.xlu0
  %v3041 = vpop.trf.xlu0
  %v3042 = vpop.trf.xlu0
  %v3043 = vpop.trf.xlu0
  %v3044 = vpop.trf.xlu0
  %v3045 = vpop.trf.xlu0
  %v3046 = vpop.trf.xlu0
  %v3047 = vpop.trf.xlu0
  %v3048 = vpop.trf.xlu0
  %v3049 = vpop.trf.xlu0
  %v3050 = vpop.trf.xlu0
  %v3051 = vpop.trf.xlu0
  %v3052 = vpop.trf.xlu0
  %v3053 = vpack.c.bf16 %v3038, %v3037
  %v3054 = vpack.c.bf16 %v3039, %v3039
  %s3055 = scalar_lea.vmem %s2, 32
  %v3056 = vld [vmem:[%s3055] sm:$0xf]
  %v3057 = vld [vmem:[%s3055 + $0x4] sm:$0xf]
  %v3060 = vunpack.c.l.b16 %v3056
  %v3061 = vunpack.c.l.b16 %v3057
  %v3062 = vpack.c.b16 %v3061, %v3060
  %v3065 = vsel %vm33, %v3053, 0
  %v3068 = vsel %vm33, %v3054, 0
  %3070 = vmatprep.subr.bf16.mxu0 0
  %3071 = vmatpush1.bf16.msra.mxu0 %v3062
  %3072 = vmatprep.subr.bf16.mxu0 0
  %3073 = vmatpush1.bf16.msra.mxu0 0
  %3074 = vmatprep.subr.bf16.mxu0 0
  %3075 = vmatpush1.bf16.msra.mxu0 0
  %3076 = vmatprep.subr.bf16.mxu0 0
  %3077 = vmatpush1.bf16.msra.mxu0 0
  %3078 = vmatprep.subr.bf16.mxu0 0
  %3079 = vmatpush1.bf16.msra.mxu0 0
  %3080 = vmatprep.subr.bf16.mxu0 0
  %3081 = vmatpush1.bf16.msra.mxu0 0
  %3082 = vmatprep.subr.bf16.mxu0 0
  %3083 = vmatpush1.bf16.msra.mxu0 0
  %3084 = vmatprep.subr.bf16.mxu0 0
  %3085 = vmatpush1.bf16.msra.mxu0 0
  %3086 = vmatprep.subr.bf16.mxu0 0
  %3087 = vmatpush1.bf16.msra.mxu0 0
  %3088 = vmatprep.subr.bf16.mxu0 0
  %3089 = vmatpush1.bf16.msra.mxu0 0
  %3090 = vmatprep.subr.bf16.mxu0 0
  %3091 = vmatpush1.bf16.msra.mxu0 0
  %3092 = vmatprep.subr.bf16.mxu0 0
  %3093 = vmatpush1.bf16.msra.mxu0 0
  %3094 = vmatprep.subr.bf16.mxu0 0
  %3095 = vmatpush1.bf16.msra.mxu0 0
  %3096 = vmatprep.subr.bf16.mxu0 0
  %3097 = vmatpush1.bf16.msra.mxu0 0
  %3098 = vmatprep.subr.bf16.mxu0 0
  %3099 = vmatpush1.bf16.msra.mxu0 0
  %3100 = vmatprep.subr.bf16.mxu0 0
  %3101 = vmatpush1.bf16.msra.mxu0 0
  %3102 = vmatprep.mubr.bf16.mxu0 0
  %3103 = vmatmul.mubr.bf16.gmra.mrb[0].mxu0 %v3065
  %v3104 = vpop.f32.mrb[0].mxu0
  %v3105 = vadd.f32 0.0, %v3104
  %v3106 = vpop.f32.mrb[0].mxu0
  %v3107 = vpop.f32.mrb[0].mxu0
  %v3108 = vadd.f32 0.0, %v3107
  %v3109 = vpop.f32.mrb[0].mxu0
  %3110 = vmatprep.mubr.bf16.mxu0 0
  %3111 = vmatmul.mubr.bf16.gmra.mrb[0].mxu0 %v3068
  %v3112 = vpop.f32.mrb[0].mxu0
  %v3113 = vadd.f32 0.0, %v3112
  %v3114 = vpop.f32.mrb[0].mxu0
  %v3115 = vpop.f32.mrb[0].mxu0
  %v3116 = vpop.f32.mrb[0].mxu0
  %3117 = vdwg.mxu0
  %3121 = vrot.lane.b32.xlu0 %v3105, 64
  %v3122 = vpop.permute.xlu0 %3121
  %3123 = vrot.lane.b32.xlu0 %v3108, 64
  %v3124 = vpop.permute.xlu0 %3123
  %3125 = vrot.lane.b32.xlu0 %v3113, 64
  %v3126 = vpop.permute.xlu0 %3125
  %vm3130 = vcmask 654848
  %3131 = vst.msk [vmem:[%s4] sm:$0xff] %vm3130, %v3122
  %3132 = vst.msk [vmem:[%s4 + $0x8] sm:$0xff] %vm3130, %v3124
  %3133 = vst.msk [vmem:[%s4 + $0x10] sm:$0xff] %vm3130, %v3126
  %v3134 = vrot.slane %v1670, 5
  %v3135 = vrot.slane %v1719, 4
  %v3136 = vsel %vm2427, %v3135, %v3134
  %v3137 = vrot.slane %v1768, 3
  %v3138 = vsel %vm2430, %v3137, %v3136
  %v3139 = vrot.slane %v1817, 2
  %v3140 = vsel %vm2433, %v3139, %v3138
  %v3141 = vrot.slane %v1866, 1
  %v3142 = vsel %vm2436, %v3141, %v3140
  %v3143 = vsel %vm2439, %v1915, %v3142
  %v3144 = vrot.slane %v1964, 7
  %v3145 = vsel %vm2442, %v3144, %v3143
  %v3146 = vrot.slane %v2013, 6
  %v3147 = vsel %vm2445, %v3146, %v3145
  %v3148 = vrot.slane %v2062, 5
  %v3149 = vrot.slane %v2111, 4
  %v3150 = vsel %vm2427, %v3149, %v3148
  %v3151 = vrot.slane %v2160, 3
  %v3152 = vsel %vm2430, %v3151, %v3150
  %v3153 = vrot.slane %v2209, 2
  %v3154 = vsel %vm2433, %v3153, %v3152
  %v3155 = vrot.slane %v2258, 1
  %v3156 = vsel %vm2436, %v3155, %v3154
  %v3157 = vsel %vm2439, %v2307, %v3156
  %v3158 = vrot.slane %v2356, 7
  %v3159 = vsel %vm2442, %v3158, %v3157
  %v3160 = vrot.slane %v2405, 6
  %v3161 = vsel %vm2445, %v3160, %v3159
  %3164 = vxpose.xlu0.b32.start [1/16] %v3147, 128
  %3165 = vxpose.xlu0.b32.cont [2/16] %v3161, 128
  %3166 = vxpose.xlu0.b32.cont [3/16] 0.0, 128
  %3167 = vxpose.xlu0.b32.cont [4/16] 0.0, 128
  %3168 = vxpose.xlu0.b32.cont [5/16] 0.0, 128
  %3169 = vxpose.xlu0.b32.cont [6/16] 0.0, 128
  %3170 = vxpose.xlu0.b32.cont [7/16] 0.0, 128
  %3171 = vxpose.xlu0.b32.cont [8/16] 0.0, 128
  %3172 = vxpose.xlu0.b32.cont [9/16] 0.0, 128
  %3173 = vxpose.xlu0.b32.cont [10/16] 0.0, 128
  %3174 = vxpose.xlu0.b32.cont [11/16] 0.0, 128
  %3175 = vxpose.xlu0.b32.cont [12/16] 0.0, 128
  %3176 = vxpose.xlu0.b32.cont [13/16] 0.0, 128
  %3177 = vxpose.xlu0.b32.cont [14/16] 0.0, 128
  %3178 = vxpose.xlu0.b32.cont [15/16] 0.0, 128
  %3179 = vxpose.xlu0.b32.end [16/16] 0.0, 128
  %v3180 = vpop.trf.xlu0
  %v3181 = vpop.trf.xlu0
  %v3182 = vpop.trf.xlu0
  %v3183 = vpop.trf.xlu0
  %v3184 = vpop.trf.xlu0
  %v3185 = vpop.trf.xlu0
  %v3186 = vpop.trf.xlu0
  %v3187 = vpop.trf.xlu0
  %v3188 = vpop.trf.xlu0
  %v3189 = vpop.trf.xlu0
  %v3190 = vpop.trf.xlu0
  %v3191 = vpop.trf.xlu0
  %v3192 = vpop.trf.xlu0
  %v3193 = vpop.trf.xlu0
  %v3194 = vpop.trf.xlu0
  %v3195 = vpop.trf.xlu0
  %v3196 = vpack.c.bf16 %v3181, %v3180
  %v3197 = vpack.c.bf16 %v3182, %v3182
  %s3198 = scalar_lea.vmem %s2, 40
  %v3199 = vld [vmem:[%s3198] sm:$0xf]
  %v3200 = vld [vmem:[%s3198 + $0x4] sm:$0xf]
  %v3203 = vunpack.c.l.b16 %v3199
  %v3204 = vunpack.c.l.b16 %v3200
  %v3205 = vpack.c.b16 %v3204, %v3203
  %v3208 = vsel %vm33, %v3196, 0
  %v3211 = vsel %vm33, %v3197, 0
  %3213 = vmatprep.subr.bf16.mxu0 0
  %3214 = vmatpush1.bf16.msra.mxu0 %v3205
  %3215 = vmatprep.subr.bf16.mxu0 0
  %3216 = vmatpush1.bf16.msra.mxu0 0
  %3217 = vmatprep.subr.bf16.mxu0 0
  %3218 = vmatpush1.bf16.msra.mxu0 0
  %3219 = vmatprep.subr.bf16.mxu0 0
  %3220 = vmatpush1.bf16.msra.mxu0 0
  %3221 = vmatprep.subr.bf16.mxu0 0
  %3222 = vmatpush1.bf16.msra.mxu0 0
  %3223 = vmatprep.subr.bf16.mxu0 0
  %3224 = vmatpush1.bf16.msra.mxu0 0
  %3225 = vmatprep.subr.bf16.mxu0 0
  %3226 = vmatpush1.bf16.msra.mxu0 0
  %3227 = vmatprep.subr.bf16.mxu0 0
  %3228 = vmatpush1.bf16.msra.mxu0 0
  %3229 = vmatprep.subr.bf16.mxu0 0
  %3230 = vmatpush1.bf16.msra.mxu0 0
  %3231 = vmatprep.subr.bf16.mxu0 0
  %3232 = vmatpush1.bf16.msra.mxu0 0
  %3233 = vmatprep.subr.bf16.mxu0 0
  %3234 = vmatpush1.bf16.msra.mxu0 0
  %3235 = vmatprep.subr.bf16.mxu0 0
  %3236 = vmatpush1.bf16.msra.mxu0 0
  %3237 = vmatprep.subr.bf16.mxu0 0
  %3238 = vmatpush1.bf16.msra.mxu0 0
  %3239 = vmatprep.subr.bf16.mxu0 0
  %3240 = vmatpush1.bf16.msra.mxu0 0
  %3241 = vmatprep.subr.bf16.mxu0 0
  %3242 = vmatpush1.bf16.msra.mxu0 0
  %3243 = vmatprep.subr.bf16.mxu0 0
  %3244 = vmatpush1.bf16.msra.mxu0 0
  %3245 = vmatprep.mubr.bf16.mxu0 0
  %3246 = vmatmul.mubr.bf16.gmra.mrb[0].mxu0 %v3208
  %v3247 = vpop.f32.mrb[0].mxu0
  %v3248 = vadd.f32 0.0, %v3247
  %v3249 = vpop.f32.mrb[0].mxu0
  %v3250 = vpop.f32.mrb[0].mxu0
  %v3251 = vadd.f32 0.0, %v3250
  %v3252 = vpop.f32.mrb[0].mxu0
  %3253 = vmatprep.mubr.bf16.mxu0 0
  %3254 = vmatmul.mubr.bf16.gmra.mrb[0].mxu0 %v3211
  %v3255 = vpop.f32.mrb[0].mxu0
  %v3256 = vadd.f32 0.0, %v3255
  %v3257 = vpop.f32.mrb[0].mxu0
  %v3258 = vpop.f32.mrb[0].mxu0
  %v3259 = vpop.f32.mrb[0].mxu0
  %3260 = vdwg.mxu0
  %3264 = vrot.lane.b32.xlu0 %v3248, 80
  %v3265 = vpop.permute.xlu0 %3264
  %3266 = vrot.lane.b32.xlu0 %v3251, 80
  %v3267 = vpop.permute.xlu0 %3266
  %3268 = vrot.lane.b32.xlu0 %v3256, 80
  %v3269 = vpop.permute.xlu0 %3268
  %vm3273 = vcmask 786048
  %3274 = vst.msk [vmem:[%s4] sm:$0xff] %vm3273, %v3265
  %3275 = vst.msk [vmem:[%s4 + $0x8] sm:$0xff] %vm3273, %v3267
  %3276 = vst.msk [vmem:[%s4 + $0x10] sm:$0xff] %vm3273, %v3269
  %v3277 = vrot.slane %v1670, 6
  %v3278 = vrot.slane %v1719, 5
  %v3279 = vsel %vm2427, %v3278, %v3277
  %v3280 = vrot.slane %v1768, 4
  %v3281 = vsel %vm2430, %v3280, %v3279
  %v3282 = vrot.slane %v1817, 3
  %v3283 = vsel %vm2433, %v3282, %v3281
  %v3284 = vrot.slane %v1866, 2
  %v3285 = vsel %vm2436, %v3284, %v3283
  %v3286 = vrot.slane %v1915, 1
  %v3287 = vsel %vm2439, %v3286, %v3285
  %v3288 = vsel %vm2442, %v1964, %v3287
  %v3289 = vrot.slane %v2013, 7
  %v3290 = vsel %vm2445, %v3289, %v3288
  %v3291 = vrot.slane %v2062, 6
  %v3292 = vrot.slane %v2111, 5
  %v3293 = vsel %vm2427, %v3292, %v3291
  %v3294 = vrot.slane %v2160, 4
  %v3295 = vsel %vm2430, %v3294, %v3293
  %v3296 = vrot.slane %v2209, 3
  %v3297 = vsel %vm2433, %v3296, %v3295
  %v3298 = vrot.slane %v2258, 2
  %v3299 = vsel %vm2436, %v3298, %v3297
  %v3300 = vrot.slane %v2307, 1
  %v3301 = vsel %vm2439, %v3300, %v3299
  %v3302 = vsel %vm2442, %v2356, %v3301
  %v3303 = vrot.slane %v2405, 7
  %v3304 = vsel %vm2445, %v3303, %v3302
  %3307 = vxpose.xlu0.b32.start [1/16] %v3290, 128
  %3308 = vxpose.xlu0.b32.cont [2/16] %v3304, 128
  %3309 = vxpose.xlu0.b32.cont [3/16] 0.0, 128
  %3310 = vxpose.xlu0.b32.cont [4/16] 0.0, 128
  %3311 = vxpose.xlu0.b32.cont [5/16] 0.0, 128
  %3312 = vxpose.xlu0.b32.cont [6/16] 0.0, 128
  %3313 = vxpose.xlu0.b32.cont [7/16] 0.0, 128
  %3314 = vxpose.xlu0.b32.cont [8/16] 0.0, 128
  %3315 = vxpose.xlu0.b32.cont [9/16] 0.0, 128
  %3316 = vxpose.xlu0.b32.cont [10/16] 0.0, 128
  %3317 = vxpose.xlu0.b32.cont [11/16] 0.0, 128
  %3318 = vxpose.xlu0.b32.cont [12/16] 0.0, 128
  %3319 = vxpose.xlu0.b32.cont [13/16] 0.0, 128
  %3320 = vxpose.xlu0.b32.cont [14/16] 0.0, 128
  %3321 = vxpose.xlu0.b32.cont [15/16] 0.0, 128
  %3322 = vxpose.xlu0.b32.end [16/16] 0.0, 128
  %v3323 = vpop.trf.xlu0
  %v3324 = vpop.trf.xlu0
  %v3325 = vpop.trf.xlu0
  %v3326 = vpop.trf.xlu0
  %v3327 = vpop.trf.xlu0
  %v3328 = vpop.trf.xlu0
  %v3329 = vpop.trf.xlu0
  %v3330 = vpop.trf.xlu0
  %v3331 = vpop.trf.xlu0
  %v3332 = vpop.trf.xlu0
  %v3333 = vpop.trf.xlu0
  %v3334 = vpop.trf.xlu0
  %v3335 = vpop.trf.xlu0
  %v3336 = vpop.trf.xlu0
  %v3337 = vpop.trf.xlu0
  %v3338 = vpop.trf.xlu0
  %v3339 = vpack.c.bf16 %v3324, %v3323
  %v3340 = vpack.c.bf16 %v3325, %v3325
  %s3341 = scalar_lea.vmem %s2, 48
  %v3342 = vld [vmem:[%s3341] sm:$0xf]
  %v3343 = vld [vmem:[%s3341 + $0x4] sm:$0xf]
  %v3346 = vunpack.c.l.b16 %v3342
  %v3347 = vunpack.c.l.b16 %v3343
  %v3348 = vpack.c.b16 %v3347, %v3346
  %v3351 = vsel %vm33, %v3339, 0
  %v3354 = vsel %vm33, %v3340, 0
  %3356 = vmatprep.subr.bf16.mxu0 0
  %3357 = vmatpush1.bf16.msra.mxu0 %v3348
  %3358 = vmatprep.subr.bf16.mxu0 0
  %3359 = vmatpush1.bf16.msra.mxu0 0
  %3360 = vmatprep.subr.bf16.mxu0 0
  %3361 = vmatpush1.bf16.msra.mxu0 0
  %3362 = vmatprep.subr.bf16.mxu0 0
  %3363 = vmatpush1.bf16.msra.mxu0 0
  %3364 = vmatprep.subr.bf16.mxu0 0
  %3365 = vmatpush1.bf16.msra.mxu0 0
  %3366 = vmatprep.subr.bf16.mxu0 0
  %3367 = vmatpush1.bf16.msra.mxu0 0
  %3368 = vmatprep.subr.bf16.mxu0 0
  %3369 = vmatpush1.bf16.msra.mxu0 0
  %3370 = vmatprep.subr.bf16.mxu0 0
  %3371 = vmatpush1.bf16.msra.mxu0 0
  %3372 = vmatprep.subr.bf16.mxu0 0
  %3373 = vmatpush1.bf16.msra.mxu0 0
  %3374 = vmatprep.subr.bf16.mxu0 0
  %3375 = vmatpush1.bf16.msra.mxu0 0
  %3376 = vmatprep.subr.bf16.mxu0 0
  %3377 = vmatpush1.bf16.msra.mxu0 0
  %3378 = vmatprep.subr.bf16.mxu0 0
  %3379 = vmatpush1.bf16.msra.mxu0 0
  %3380 = vmatprep.subr.bf16.mxu0 0
  %3381 = vmatpush1.bf16.msra.mxu0 0
  %3382 = vmatprep.subr.bf16.mxu0 0
  %3383 = vmatpush1.bf16.msra.mxu0 0
  %3384 = vmatprep.subr.bf16.mxu0 0
  %3385 = vmatpush1.bf16.msra.mxu0 0
  %3386 = vmatprep.subr.bf16.mxu0 0
  %3387 = vmatpush1.bf16.msra.mxu0 0
  %3388 = vmatprep.mubr.bf16.mxu0 0
  %3389 = vmatmul.mubr.bf16.gmra.mrb[0].mxu0 %v3351
  %v3390 = vpop.f32.mrb[0].mxu0
  %v3391 = vadd.f32 0.0, %v3390
  %v3392 = vpop.f32.mrb[0].mxu0
  %v3393 = vpop.f32.mrb[0].mxu0
  %v3394 = vadd.f32 0.0, %v3393
  %v3395 = vpop.f32.mrb[0].mxu0
  %3396 = vmatprep.mubr.bf16.mxu0 0
  %3397 = vmatmul.mubr.bf16.gmra.mrb[0].mxu0 %v3354
  %v3398 = vpop.f32.mrb[0].mxu0
  %v3399 = vadd.f32 0.0, %v3398
  %v3400 = vpop.f32.mrb[0].mxu0
  %v3401 = vpop.f32.mrb[0].mxu0
  %v3402 = vpop.f32.mrb[0].mxu0
  %3403 = vdwg.mxu0
  %3407 = vrot.lane.b32.xlu0 %v3391, 96
  %v3408 = vpop.permute.xlu0 %3407
  %3409 = vrot.lane.b32.xlu0 %v3394, 96
  %v3410 = vpop.permute.xlu0 %3409
  %3411 = vrot.lane.b32.xlu0 %v3399, 96
  %v3412 = vpop.permute.xlu0 %3411
  %vm3416 = vcmask 917248
  %3417 = vst.msk [vmem:[%s4] sm:$0xff] %vm3416, %v3408
  %3418 = vst.msk [vmem:[%s4 + $0x8] sm:$0xff] %vm3416, %v3410
  %3419 = vst.msk [vmem:[%s4 + $0x10] sm:$0xff] %vm3416, %v3412
  %v3420 = vrot.slane %v1670, 7
  %v3421 = vrot.slane %v1719, 6
  %v3422 = vsel %vm2427, %v3421, %v3420
  %v3423 = vrot.slane %v1768, 5
  %v3424 = vsel %vm2430, %v3423, %v3422
  %v3425 = vrot.slane %v1817, 4
  %v3426 = vsel %vm2433, %v3425, %v3424
  %v3427 = vrot.slane %v1866, 3
  %v3428 = vsel %vm2436, %v3427, %v3426
  %v3429 = vrot.slane %v1915, 2
  %v3430 = vsel %vm2439, %v3429, %v3428
  %v3431 = vrot.slane %v1964, 1
  %v3432 = vsel %vm2442, %v3431, %v3430
  %v3433 = vsel %vm2445, %v2013, %v3432
  %v3434 = vrot.slane %v2062, 7
  %v3435 = vrot.slane %v2111, 6
  %v3436 = vsel %vm2427, %v3435, %v3434
  %v3437 = vrot.slane %v2160, 5
  %v3438 = vsel %vm2430, %v3437, %v3436
  %v3439 = vrot.slane %v2209, 4
  %v3440 = vsel %vm2433, %v3439, %v3438
  %v3441 = vrot.slane %v2258, 3
  %v3442 = vsel %vm2436, %v3441, %v3440
  %v3443 = vrot.slane %v2307, 2
  %v3444 = vsel %vm2439, %v3443, %v3442
  %v3445 = vrot.slane %v2356, 1
  %v3446 = vsel %vm2442, %v3445, %v3444
  %v3447 = vsel %vm2445, %v2405, %v3446
  %3450 = vxpose.xlu0.b32.start [1/16] %v3433, 128
  %3451 = vxpose.xlu0.b32.cont [2/16] %v3447, 128
  %3452 = vxpose.xlu0.b32.cont [3/16] 0.0, 128
  %3453 = vxpose.xlu0.b32.cont [4/16] 0.0, 128
  %3454 = vxpose.xlu0.b32.cont [5/16] 0.0, 128
  %3455 = vxpose.xlu0.b32.cont [6/16] 0.0, 128
  %3456 = vxpose.xlu0.b32.cont [7/16] 0.0, 128
  %3457 = vxpose.xlu0.b32.cont [8/16] 0.0, 128
  %3458 = vxpose.xlu0.b32.cont [9/16] 0.0, 128
  %3459 = vxpose.xlu0.b32.cont [10/16] 0.0, 128
  %3460 = vxpose.xlu0.b32.cont [11/16] 0.0, 128
  %3461 = vxpose.xlu0.b32.cont [12/16] 0.0, 128
  %3462 = vxpose.xlu0.b32.cont [13/16] 0.0, 128
  %3463 = vxpose.xlu0.b32.cont [14/16] 0.0, 128
  %3464 = vxpose.xlu0.b32.cont [15/16] 0.0, 128
  %3465 = vxpose.xlu0.b32.end [16/16] 0.0, 128
  %v3466 = vpop.trf.xlu0
  %v3467 = vpop.trf.xlu0
  %v3468 = vpop.trf.xlu0
  %v3469 = vpop.trf.xlu0
  %v3470 = vpop.trf.xlu0
  %v3471 = vpop.trf.xlu0
  %v3472 = vpop.trf.xlu0
  %v3473 = vpop.trf.xlu0
  %v3474 = vpop.trf.xlu0
  %v3475 = vpop.trf.xlu0
  %v3476 = vpop.trf.xlu0
  %v3477 = vpop.trf.xlu0
  %v3478 = vpop.trf.xlu0
  %v3479 = vpop.trf.xlu0
  %v3480 = vpop.trf.xlu0
  %v3481 = vpop.trf.xlu0
  %v3482 = vpack.c.bf16 %v3467, %v3466
  %v3483 = vpack.c.bf16 %v3468, %v3468
  %s3484 = scalar_lea.vmem %s2, 56
  %v3485 = vld [vmem:[%s3484] sm:$0xf]
  %v3486 = vld [vmem:[%s3484 + $0x4] sm:$0xf]
  %v3489 = vunpack.c.l.b16 %v3485
  %v3490 = vunpack.c.l.b16 %v3486
  %v3491 = vpack.c.b16 %v3490, %v3489
  %v3494 = vsel %vm33, %v3482, 0
  %v3497 = vsel %vm33, %v3483, 0
  %3499 = vmatprep.subr.bf16.mxu0 0
  %3500 = vmatpush1.bf16.msra.mxu0 %v3491
  %3501 = vmatprep.subr.bf16.mxu0 0
  %3502 = vmatpush1.bf16.msra.mxu0 0
  %3503 = vmatprep.subr.bf16.mxu0 0
  %3504 = vmatpush1.bf16.msra.mxu0 0
  %3505 = vmatprep.subr.bf16.mxu0 0
  %3506 = vmatpush1.bf16.msra.mxu0 0
  %3507 = vmatprep.subr.bf16.mxu0 0
  %3508 = vmatpush1.bf16.msra.mxu0 0
  %3509 = vmatprep.subr.bf16.mxu0 0
  %3510 = vmatpush1.bf16.msra.mxu0 0
  %3511 = vmatprep.subr.bf16.mxu0 0
  %3512 = vmatpush1.bf16.msra.mxu0 0
  %3513 = vmatprep.subr.bf16.mxu0 0
  %3514 = vmatpush1.bf16.msra.mxu0 0
  %3515 = vmatprep.subr.bf16.mxu0 0
  %3516 = vmatpush1.bf16.msra.mxu0 0
  %3517 = vmatprep.subr.bf16.mxu0 0
  %3518 = vmatpush1.bf16.msra.mxu0 0
  %3519 = vmatprep.subr.bf16.mxu0 0
  %3520 = vmatpush1.bf16.msra.mxu0 0
  %3521 = vmatprep.subr.bf16.mxu0 0
  %3522 = vmatpush1.bf16.msra.mxu0 0
  %3523 = vmatprep.subr.bf16.mxu0 0
  %3524 = vmatpush1.bf16.msra.mxu0 0
  %3525 = vmatprep.subr.bf16.mxu0 0
  %3526 = vmatpush1.bf16.msra.mxu0 0
  %3527 = vmatprep.subr.bf16.mxu0 0
  %3528 = vmatpush1.bf16.msra.mxu0 0
  %3529 = vmatprep.subr.bf16.mxu0 0
  %3530 = vmatpush1.bf16.msra.mxu0 0
  %3531 = vmatprep.mubr.bf16.mxu0 0
  %3532 = vmatmul.mubr.bf16.gmra.mrb[0].mxu0 %v3494
  %v3533 = vpop.f32.mrb[0].mxu0
  %v3534 = vadd.f32 0.0, %v3533
  %v3535 = vpop.f32.mrb[0].mxu0
  %v3536 = vpop.f32.mrb[0].mxu0
  %v3537 = vadd.f32 0.0, %v3536
  %v3538 = vpop.f32.mrb[0].mxu0
  %3539 = vmatprep.mubr.bf16.mxu0 0
  %3540 = vmatmul.mubr.bf16.gmra.mrb[0].mxu0 %v3497
  %v3541 = vpop.f32.mrb[0].mxu0
  %v3542 = vadd.f32 0.0, %v3541
  %v3543 = vpop.f32.mrb[0].mxu0
  %v3544 = vpop.f32.mrb[0].mxu0
  %v3545 = vpop.f32.mrb[0].mxu0
  %3546 = vdwg.mxu0
  %3550 = vrot.lane.b32.xlu0 %v3534, 112
  %v3551 = vpop.permute.xlu0 %3550
  %3552 = vrot.lane.b32.xlu0 %v3537, 112
  %v3553 = vpop.permute.xlu0 %3552
  %3554 = vrot.lane.b32.xlu0 %v3542, 112
  %v3555 = vpop.permute.xlu0 %3554
  %vm3559 = vcmask 1048448
  %3560 = vst.msk [vmem:[%s4] sm:$0xff] %vm3559, %v3551
  %3561 = vst.msk [vmem:[%s4 + $0x8] sm:$0xff] %vm3559, %v3553
  %3562 = vst.msk [vmem:[%s4 + $0x10] sm:$0xff] %vm3559, %v3555
  // Predicated region
  $region18: #{spherical_conv_forward.1} parent=0 // pred_check
    _
  $region19: #{spherical_conv_forward.1} parent=0 // pred_check_branch
    %3564 = sbr.rel (0) target = $region21
  $region20: #{spherical_conv_forward.1} parent=0 // pred_region
    _
  $region21: #{spherical_conv_forward.1} parent=0 // pred_fallthru
    _
  // Predicated region
  $region22: #{spherical_conv_forward.1} parent=0 // pred_check
    _
  $region23: #{spherical_conv_forward.1} parent=0 // pred_check_branch
    %3566 = sbr.rel (0) target = $region25
  $region24: #{spherical_conv_forward.1} parent=0 // pred_region
    _
  $region25: #{spherical_conv_forward.1} parent=0 // pred_fallthru
    _

</llo_original>
